<compile_context>
chip_gen: v6e
topology: v6e:2x2x1
jax: 0.10.0
libtpu: 0.0.40
codegen_flags: <defaults>
</compile_context>

<pallas_src>
import functools

import jax
import jax.numpy as jnp
from jax import lax
from jax.experimental import pallas as pl
from jax.experimental.pallas import tpu as pltpu

# Column offset of the conv1 output inside the VMEM scratch.  8 = f32 sublane
# tile, so the scratch store is tile-aligned; column _W_OFF-1 and column
# _W_OFF+Wo1 provide the zero padding ring for the second conv.
_W_OFF = 8


def _win(start, size, stride):
    """Static window of `size` taps starting at `start`, step `stride`."""
    if stride == 1:
        return slice(start, start + size)
    return pl.ds(start, size, stride=stride)


def _block_kernel(x_ref, w1_ref, w2_ref, o_ref, h_ref, *,
                  stride, Ho1, Wo1, Ho2, Wo2):
    """One batch image per grid step: conv3x3+ReLU -> conv3x3+ReLU, all in VMEM."""
    cmid = h_ref.shape[-1]
    cout = o_ref.shape[-1]

    # ---- conv3_first: 3x3, stride, pad=1 (input already spatially padded) ----
    # Tap accumulation straight from the VMEM-resident input tile (no HBM im2col).
    acc1 = jnp.zeros((Ho1 * Wo1, cmid), jnp.float32)
    for kh in range(3):
        for kw in range(3):
            xs = x_ref[0, _win(kh, Ho1, stride), _win(kw, Wo1, stride), :]
            xs = xs.reshape(Ho1 * Wo1, xs.shape[-1]).astype(jnp.bfloat16)
            acc1 = acc1 + jnp.dot(xs, w1_ref[kh * 3 + kw],
                                  preferred_element_type=jnp.float32)
    h1 = jnp.maximum(acc1, 0.0).reshape(Ho1, Wo1, cmid)   # ReLU on f32 accumulator

    # Stash the intermediate in the zero-ring-padded VMEM scratch: rows
    # [1 : 1+Ho1], cols [_W_OFF : _W_OFF+Wo1].  The second conv reads it
    # directly from VMEM — the intermediate never goes back to HBM.
    h_ref[...] = jnp.zeros(h_ref.shape, h_ref.dtype)
    h_ref[1:1 + Ho1, _W_OFF:_W_OFF + Wo1, :] = h1

    # ---- conv3: 3x3, stride, pad=1 on the intermediate ----
    acc2 = jnp.zeros((Ho2 * Wo2, cout), jnp.float32)
    for kh in range(3):
        for kw in range(3):
            hs = h_ref[_win(kh, Ho2, stride), _win(_W_OFF - 1 + kw, Wo2, stride), :]
            hs = hs.reshape(Ho2 * Wo2, hs.shape[-1]).astype(jnp.bfloat16)
            acc2 = acc2 + jnp.dot(hs, w2_ref[kh * 3 + kw],
                                  preferred_element_type=jnp.float32)
    out = jnp.maximum(acc2, 0.0).reshape(Ho2, Wo2, cout)
    o_ref[0] = out.astype(o_ref.dtype)


def block_forward(x_nchw, w1_oihw, w2_oihw, *, stride=1):
    """PyTorch Block forward (bn=False). x: NCHW, weights in PyTorch OIHW layout."""
    N, Cin, H, W = x_nchw.shape
    Cmid = w1_oihw.shape[0]
    Cout = w2_oihw.shape[0]
    assert w1_oihw.shape == (Cmid, Cin, 3, 3)
    assert w2_oihw.shape == (Cout, Cmid, 3, 3)

    # NCHW -> NHWC (channels on the lane axis); pad spatially once (padding=1).
    x = jnp.transpose(x_nchw, (0, 2, 3, 1)).astype(jnp.float32)
    xp = jnp.pad(x, ((0, 0), (1, 1), (1, 1), (0, 0)))
    Hp, Wp = H + 2, W + 2

    Ho1 = (Hp - 3) // stride + 1
    Wo1 = (Wp - 3) // stride + 1
    Ho2 = (Ho1 + 2 - 3) // stride + 1
    Wo2 = (Wo1 + 2 - 3) // stride + 1

    # OIHW -> tap-major (9, Cin, Cout), bf16 operands for the MXU (f32 accumulate).
    w1 = jnp.transpose(w1_oihw, (2, 3, 1, 0)).reshape(9, Cin, Cmid).astype(jnp.bfloat16)
    w2 = jnp.transpose(w2_oihw, (2, 3, 1, 0)).reshape(9, Cmid, Cout).astype(jnp.bfloat16)

    kernel = functools.partial(_block_kernel, stride=stride,
                               Ho1=Ho1, Wo1=Wo1, Ho2=Ho2, Wo2=Wo2)
    out_nhwc = pl.pallas_call(
        kernel,
        out_shape=jax.ShapeDtypeStruct((N, Ho2, Wo2, Cout), jnp.float32),
        grid=(N,),  # one image per step; Pallas double-buffers across steps
        in_specs=[
            pl.BlockSpec((1, Hp, Wp, Cin), lambda n: (n, 0, 0, 0)),
            # weights: constant block index -> stay VMEM-resident across the grid
            pl.BlockSpec((9, Cin, Cmid), lambda n: (0, 0, 0)),
            pl.BlockSpec((9, Cmid, Cout), lambda n: (0, 0, 0)),
        ],
        out_specs=pl.BlockSpec((1, Ho2, Wo2, Cout), lambda n: (n, 0, 0, 0)),
        scratch_shapes=[
            # zero-ring-padded intermediate (f32, lives only in VMEM)
            pltpu.VMEM((Ho1 + 2, Wo1 + 2 * _W_OFF, Cmid), jnp.float32),
        ],
        compiler_params=pltpu.CompilerParams(
            dimension_semantics=("parallel",),   # megacore on v7x, no-op on v5e/v6e
            vmem_limit_bytes=32 * 1024 * 1024,   # safe budget on every TPU generation
        ),
    )(xp, w1, w2)

    return jnp.transpose(out_nhwc, (0, 3, 1, 2))  # back to NCHW (PyTorch convention)


def block_reference(x_nchw, w1_oihw, w2_oihw, *, stride=1):
    """Pure-JAX reference mirroring the kernel arithmetic (bf16 operands, f32 acc)."""
    x = jnp.transpose(x_nchw, (0, 2, 3, 1)).astype(jnp.bfloat16)
    w1 = jnp.transpose(w1_oihw, (2, 3, 1, 0)).astype(jnp.bfloat16)
    w2 = jnp.transpose(w2_oihw, (2, 3, 1, 0)).astype(jnp.bfloat16)
    dn = ("NHWC", "HWIO", "NHWC")
    y = lax.conv_general_dilated(x, w1, (stride, stride), ((1, 1), (1, 1)),
                                 dimension_numbers=dn,
                                 preferred_element_type=jnp.float32)
    y = jnp.maximum(y, 0.0).astype(jnp.bfloat16)
    y = lax.conv_general_dilated(y, w2, (stride, stride), ((1, 1), (1, 1)),
                                 dimension_numbers=dn,
                                 preferred_element_type=jnp.float32)
    y = jnp.maximum(y, 0.0)
    return jnp.transpose(y, (0, 3, 1, 2))


if __name__ == "__main__":
    key = jax.random.PRNGKey(0)
    k_x, k_w1, k_w2 = jax.random.split(key, 3)

    # Small shapes consistent with the module: Block(input_channels=4, output_channels=8)
    N, Cin, H, W = 2, 4, 16, 16
    Cout = 8
    stride = 1  # Block default (the module applies `stride` to BOTH convs)

    x = jax.random.normal(k_x, (N, Cin, H, W), jnp.float32)
    w1 = jax.random.normal(k_w1, (Cout, Cin, 3, 3), jnp.float32) * (2.0 / (9 * Cin)) ** 0.5
    w2 = jax.random.normal(k_w2, (Cout, Cout, 3, 3), jnp.float32) * (2.0 / (9 * Cout)) ** 0.5

    fwd = jax.jit(functools.partial(block_forward, stride=stride))
    out = jax.block_until_ready(fwd(x, w1, w2))

    ref = jax.block_until_ready(block_reference(x, w1, w2, stride=stride))
    assert out.shape == ref.shape == (N, Cout, H, W), (out.shape, ref.shape)
    assert bool(jnp.all(jnp.isfinite(out)))
    assert bool(jnp.allclose(out, ref, rtol=5e-2, atol=5e-2)), \
        float(jnp.max(jnp.abs(out - ref)))
    print("KERNEL_OK")
</pallas_src>

<mosaic_0001>
module attributes {stable_mosaic.version = 11 : i64} {
  func.func @_block_kernel(%arg0: i32, %arg1: memref<1x18x18x4xf32, #tpu.memory_space<vmem>>, %arg2: memref<9x4x8xbf16, #tpu.memory_space<vmem>>, %arg3: memref<9x8x8xbf16, #tpu.memory_space<vmem>>, %arg4: memref<1x16x16x8xf32, #tpu.memory_space<vmem>>, %arg5: memref<18x32x8xf32, #tpu.memory_space<vmem>>) attributes {dimension_semantics = [#tpu.dimension_semantics<parallel>], iteration_bounds = array<i64: 2>, scalar_prefetch = 0 : i64, scratch_operands = 1 : i64, tpu.core_type = #tpu.core_type<tc>, window_params = [{transform_indices = @transform_0, window_bounds = array<i64: 1, 18, 18, 4>}, {pipeline_mode = #tpu.pipeline_mode<synchronous>, transform_indices = @transform_1, window_bounds = array<i64: 9, 4, 8>}, {pipeline_mode = #tpu.pipeline_mode<synchronous>, transform_indices = @transform_2, window_bounds = array<i64: 9, 8, 8>}, {transform_indices = @transform_3, window_bounds = array<i64: 1, 16, 16, 8>}]} {
    %cst = arith.constant 0.000000e+00 : f32
    %0 = vector.broadcast %cst : f32 to vector<256x8xf32>
    %c0 = arith.constant 0 : index
    %c0_0 = arith.constant 0 : index
    %c0_1 = arith.constant 0 : index
    %c0_2 = arith.constant 0 : index
    %1 = vector.load %arg1[%c0, %c0_0, %c0_1, %c0_2] : memref<1x18x18x4xf32, #tpu.memory_space<vmem>>, vector<1x16x16x4xf32>
    %2 = vector.shape_cast %1 : vector<1x16x16x4xf32> to vector<16x16x4xf32>
    %3 = vector.shape_cast %2 : vector<16x16x4xf32> to vector<256x4xf32>
    %4 = arith.truncf %3 : vector<256x4xf32> to vector<256x4xbf16>
    %c0_3 = arith.constant 0 : index
    %c0_4 = arith.constant 0 : index
    %c0_5 = arith.constant 0 : index
    %5 = vector.load %arg2[%c0_3, %c0_4, %c0_5] : memref<9x4x8xbf16, #tpu.memory_space<vmem>>, vector<1x4x8xbf16>
    %6 = vector.shape_cast %5 : vector<1x4x8xbf16> to vector<4x8xbf16>
    %cst_6 = arith.constant dense<0.000000e+00> : vector<256x8xf32>
    %7 = tpu.matmul %4, %6, %cst_6 {dimension_numbers = #tpu.dot_dimension_numbers<[1], [0], [0], [1], [0, 0, 1, 1], [], []>} : vector<256x4xbf16>, vector<4x8xbf16>, vector<256x8xf32> -> vector<256x8xf32>
    %8 = arith.addf %0, %7 : vector<256x8xf32>
    %c0_7 = arith.constant 0 : index
    %c0_8 = arith.constant 0 : index
    %c1 = arith.constant 1 : index
    %c0_9 = arith.constant 0 : index
    %9 = vector.load %arg1[%c0_7, %c0_8, %c1, %c0_9] : memref<1x18x18x4xf32, #tpu.memory_space<vmem>>, vector<1x16x16x4xf32>
    %10 = vector.shape_cast %9 : vector<1x16x16x4xf32> to vector<16x16x4xf32>
    %11 = vector.shape_cast %10 : vector<16x16x4xf32> to vector<256x4xf32>
    %12 = arith.truncf %11 : vector<256x4xf32> to vector<256x4xbf16>
    %c1_10 = arith.constant 1 : index
    %c0_11 = arith.constant 0 : index
    %c0_12 = arith.constant 0 : index
    %13 = vector.load %arg2[%c1_10, %c0_11, %c0_12] : memref<9x4x8xbf16, #tpu.memory_space<vmem>>, vector<1x4x8xbf16>
    %14 = vector.shape_cast %13 : vector<1x4x8xbf16> to vector<4x8xbf16>
    %cst_13 = arith.constant dense<0.000000e+00> : vector<256x8xf32>
    %15 = tpu.matmul %12, %14, %cst_13 {dimension_numbers = #tpu.dot_dimension_numbers<[1], [0], [0], [1], [0, 0, 1, 1], [], []>} : vector<256x4xbf16>, vector<4x8xbf16>, vector<256x8xf32> -> vector<256x8xf32>
    %16 = arith.addf %8, %15 : vector<256x8xf32>
    %c0_14 = arith.constant 0 : index
    %c0_15 = arith.constant 0 : index
    %c2 = arith.constant 2 : index
    %c0_16 = arith.constant 0 : index
    %17 = vector.load %arg1[%c0_14, %c0_15, %c2, %c0_16] : memref<1x18x18x4xf32, #tpu.memory_space<vmem>>, vector<1x16x16x4xf32>
    %18 = vector.shape_cast %17 : vector<1x16x16x4xf32> to vector<16x16x4xf32>
    %19 = vector.shape_cast %18 : vector<16x16x4xf32> to vector<256x4xf32>
    %20 = arith.truncf %19 : vector<256x4xf32> to vector<256x4xbf16>
    %c2_17 = arith.constant 2 : index
    %c0_18 = arith.constant 0 : index
    %c0_19 = arith.constant 0 : index
    %21 = vector.load %arg2[%c2_17, %c0_18, %c0_19] : memref<9x4x8xbf16, #tpu.memory_space<vmem>>, vector<1x4x8xbf16>
    %22 = vector.shape_cast %21 : vector<1x4x8xbf16> to vector<4x8xbf16>
    %cst_20 = arith.constant dense<0.000000e+00> : vector<256x8xf32>
    %23 = tpu.matmul %20, %22, %cst_20 {dimension_numbers = #tpu.dot_dimension_numbers<[1], [0], [0], [1], [0, 0, 1, 1], [], []>} : vector<256x4xbf16>, vector<4x8xbf16>, vector<256x8xf32> -> vector<256x8xf32>
    %24 = arith.addf %16, %23 : vector<256x8xf32>
    %c0_21 = arith.constant 0 : index
    %c1_22 = arith.constant 1 : index
    %c0_23 = arith.constant 0 : index
    %c0_24 = arith.constant 0 : index
    %25 = vector.load %arg1[%c0_21, %c1_22, %c0_23, %c0_24] : memref<1x18x18x4xf32, #tpu.memory_space<vmem>>, vector<1x16x16x4xf32>
    %26 = vector.shape_cast %25 : vector<1x16x16x4xf32> to vector<16x16x4xf32>
    %27 = vector.shape_cast %26 : vector<16x16x4xf32> to vector<256x4xf32>
    %28 = arith.truncf %27 : vector<256x4xf32> to vector<256x4xbf16>
    %c3 = arith.constant 3 : index
    %c0_25 = arith.constant 0 : index
    %c0_26 = arith.constant 0 : index
    %29 = vector.load %arg2[%c3, %c0_25, %c0_26] : memref<9x4x8xbf16, #tpu.memory_space<vmem>>, vector<1x4x8xbf16>
    %30 = vector.shape_cast %29 : vector<1x4x8xbf16> to vector<4x8xbf16>
    %cst_27 = arith.constant dense<0.000000e+00> : vector<256x8xf32>
    %31 = tpu.matmul %28, %30, %cst_27 {dimension_numbers = #tpu.dot_dimension_numbers<[1], [0], [0], [1], [0, 0, 1, 1], [], []>} : vector<256x4xbf16>, vector<4x8xbf16>, vector<256x8xf32> -> vector<256x8xf32>
    %32 = arith.addf %24, %31 : vector<256x8xf32>
    %c0_28 = arith.constant 0 : index
    %c1_29 = arith.constant 1 : index
    %c1_30 = arith.constant 1 : index
    %c0_31 = arith.constant 0 : index
    %33 = vector.load %arg1[%c0_28, %c1_29, %c1_30, %c0_31] : memref<1x18x18x4xf32, #tpu.memory_space<vmem>>, vector<1x16x16x4xf32>
    %34 = vector.shape_cast %33 : vector<1x16x16x4xf32> to vector<16x16x4xf32>
    %35 = vector.shape_cast %34 : vector<16x16x4xf32> to vector<256x4xf32>
    %36 = arith.truncf %35 : vector<256x4xf32> to vector<256x4xbf16>
    %c4 = arith.constant 4 : index
    %c0_32 = arith.constant 0 : index
    %c0_33 = arith.constant 0 : index
    %37 = vector.load %arg2[%c4, %c0_32, %c0_33] : memref<9x4x8xbf16, #tpu.memory_space<vmem>>, vector<1x4x8xbf16>
    %38 = vector.shape_cast %37 : vector<1x4x8xbf16> to vector<4x8xbf16>
    %cst_34 = arith.constant dense<0.000000e+00> : vector<256x8xf32>
    %39 = tpu.matmul %36, %38, %cst_34 {dimension_numbers = #tpu.dot_dimension_numbers<[1], [0], [0], [1], [0, 0, 1, 1], [], []>} : vector<256x4xbf16>, vector<4x8xbf16>, vector<256x8xf32> -> vector<256x8xf32>
    %40 = arith.addf %32, %39 : vector<256x8xf32>
    %c0_35 = arith.constant 0 : index
    %c1_36 = arith.constant 1 : index
    %c2_37 = arith.constant 2 : index
    %c0_38 = arith.constant 0 : index
    %41 = vector.load %arg1[%c0_35, %c1_36, %c2_37, %c0_38] : memref<1x18x18x4xf32, #tpu.memory_space<vmem>>, vector<1x16x16x4xf32>
    %42 = vector.shape_cast %41 : vector<1x16x16x4xf32> to vector<16x16x4xf32>
    %43 = vector.shape_cast %42 : vector<16x16x4xf32> to vector<256x4xf32>
    %44 = arith.truncf %43 : vector<256x4xf32> to vector<256x4xbf16>
    %c5 = arith.constant 5 : index
    %c0_39 = arith.constant 0 : index
    %c0_40 = arith.constant 0 : index
    %45 = vector.load %arg2[%c5, %c0_39, %c0_40] : memref<9x4x8xbf16, #tpu.memory_space<vmem>>, vector<1x4x8xbf16>
    %46 = vector.shape_cast %45 : vector<1x4x8xbf16> to vector<4x8xbf16>
    %cst_41 = arith.constant dense<0.000000e+00> : vector<256x8xf32>
    %47 = tpu.matmul %44, %46, %cst_41 {dimension_numbers = #tpu.dot_dimension_numbers<[1], [0], [0], [1], [0, 0, 1, 1], [], []>} : vector<256x4xbf16>, vector<4x8xbf16>, vector<256x8xf32> -> vector<256x8xf32>
    %48 = arith.addf %40, %47 : vector<256x8xf32>
    %c0_42 = arith.constant 0 : index
    %c2_43 = arith.constant 2 : index
    %c0_44 = arith.constant 0 : index
    %c0_45 = arith.constant 0 : index
    %49 = vector.load %arg1[%c0_42, %c2_43, %c0_44, %c0_45] : memref<1x18x18x4xf32, #tpu.memory_space<vmem>>, vector<1x16x16x4xf32>
    %50 = vector.shape_cast %49 : vector<1x16x16x4xf32> to vector<16x16x4xf32>
    %51 = vector.shape_cast %50 : vector<16x16x4xf32> to vector<256x4xf32>
    %52 = arith.truncf %51 : vector<256x4xf32> to vector<256x4xbf16>
    %c6 = arith.constant 6 : index
    %c0_46 = arith.constant 0 : index
    %c0_47 = arith.constant 0 : index
    %53 = vector.load %arg2[%c6, %c0_46, %c0_47] : memref<9x4x8xbf16, #tpu.memory_space<vmem>>, vector<1x4x8xbf16>
    %54 = vector.shape_cast %53 : vector<1x4x8xbf16> to vector<4x8xbf16>
    %cst_48 = arith.constant dense<0.000000e+00> : vector<256x8xf32>
    %55 = tpu.matmul %52, %54, %cst_48 {dimension_numbers = #tpu.dot_dimension_numbers<[1], [0], [0], [1], [0, 0, 1, 1], [], []>} : vector<256x4xbf16>, vector<4x8xbf16>, vector<256x8xf32> -> vector<256x8xf32>
    %56 = arith.addf %48, %55 : vector<256x8xf32>
    %c0_49 = arith.constant 0 : index
    %c2_50 = arith.constant 2 : index
    %c1_51 = arith.constant 1 : index
    %c0_52 = arith.constant 0 : index
    %57 = vector.load %arg1[%c0_49, %c2_50, %c1_51, %c0_52] : memref<1x18x18x4xf32, #tpu.memory_space<vmem>>, vector<1x16x16x4xf32>
    %58 = vector.shape_cast %57 : vector<1x16x16x4xf32> to vector<16x16x4xf32>
    %59 = vector.shape_cast %58 : vector<16x16x4xf32> to vector<256x4xf32>
    %60 = arith.truncf %59 : vector<256x4xf32> to vector<256x4xbf16>
    %c7 = arith.constant 7 : index
    %c0_53 = arith.constant 0 : index
    %c0_54 = arith.constant 0 : index
    %61 = vector.load %arg2[%c7, %c0_53, %c0_54] : memref<9x4x8xbf16, #tpu.memory_space<vmem>>, vector<1x4x8xbf16>
    %62 = vector.shape_cast %61 : vector<1x4x8xbf16> to vector<4x8xbf16>
    %cst_55 = arith.constant dense<0.000000e+00> : vector<256x8xf32>
    %63 = tpu.matmul %60, %62, %cst_55 {dimension_numbers = #tpu.dot_dimension_numbers<[1], [0], [0], [1], [0, 0, 1, 1], [], []>} : vector<256x4xbf16>, vector<4x8xbf16>, vector<256x8xf32> -> vector<256x8xf32>
    %64 = arith.addf %56, %63 : vector<256x8xf32>
    %c0_56 = arith.constant 0 : index
    %c2_57 = arith.constant 2 : index
    %c2_58 = arith.constant 2 : index
    %c0_59 = arith.constant 0 : index
    %65 = vector.load %arg1[%c0_56, %c2_57, %c2_58, %c0_59] : memref<1x18x18x4xf32, #tpu.memory_space<vmem>>, vector<1x16x16x4xf32>
    %66 = vector.shape_cast %65 : vector<1x16x16x4xf32> to vector<16x16x4xf32>
    %67 = vector.shape_cast %66 : vector<16x16x4xf32> to vector<256x4xf32>
    %68 = arith.truncf %67 : vector<256x4xf32> to vector<256x4xbf16>
    %c8 = arith.constant 8 : index
    %c0_60 = arith.constant 0 : index
    %c0_61 = arith.constant 0 : index
    %69 = vector.load %arg2[%c8, %c0_60, %c0_61] : memref<9x4x8xbf16, #tpu.memory_space<vmem>>, vector<1x4x8xbf16>
    %70 = vector.shape_cast %69 : vector<1x4x8xbf16> to vector<4x8xbf16>
    %cst_62 = arith.constant dense<0.000000e+00> : vector<256x8xf32>
    %71 = tpu.matmul %68, %70, %cst_62 {dimension_numbers = #tpu.dot_dimension_numbers<[1], [0], [0], [1], [0, 0, 1, 1], [], []>} : vector<256x4xbf16>, vector<4x8xbf16>, vector<256x8xf32> -> vector<256x8xf32>
    %72 = arith.addf %64, %71 : vector<256x8xf32>
    %cst_63 = arith.constant 0.000000e+00 : f32
    %73 = vector.broadcast %cst_63 : f32 to vector<256x8xf32>
    %74 = arith.maximumf %72, %73 : vector<256x8xf32>
    %75 = vector.shape_cast %74 : vector<256x8xf32> to vector<16x16x8xf32>
    %cst_64 = arith.constant 0.000000e+00 : f32
    %76 = vector.broadcast %cst_64 : f32 to vector<18x32x8xf32>
    %c0_65 = arith.constant 0 : index
    %c0_66 = arith.constant 0 : index
    %c0_67 = arith.constant 0 : index
    %77 = vector.load %arg5[%c0_65, %c0_66, %c0_67] : memref<18x32x8xf32, #tpu.memory_space<vmem>>, vector<18x32x8xf32>
    tpu.vector_store %arg5[%c0_65, %c0_66, %c0_67], %76 {strides = array<i32>} : memref<18x32x8xf32, #tpu.memory_space<vmem>>, vector<18x32x8xf32>,
    %c1_68 = arith.constant 1 : index
    %c8_69 = arith.constant 8 : index
    %c0_70 = arith.constant 0 : index
    %78 = vector.load %arg5[%c1_68, %c8_69, %c0_70] : memref<18x32x8xf32, #tpu.memory_space<vmem>>, vector<16x16x8xf32>
    tpu.vector_store %arg5[%c1_68, %c8_69, %c0_70], %75 {strides = array<i32>} : memref<18x32x8xf32, #tpu.memory_space<vmem>>, vector<16x16x8xf32>,
    %cst_71 = arith.constant 0.000000e+00 : f32
    %79 = vector.broadcast %cst_71 : f32 to vector<256x8xf32>
    %c0_72 = arith.constant 0 : index
    %c7_73 = arith.constant 7 : index
    %c0_74 = arith.constant 0 : index
    %80 = vector.load %arg5[%c0_72, %c7_73, %c0_74] : memref<18x32x8xf32, #tpu.memory_space<vmem>>, vector<16x16x8xf32>
    %81 = vector.shape_cast %80 : vector<16x16x8xf32> to vector<256x8xf32>
    %82 = arith.truncf %81 : vector<256x8xf32> to vector<256x8xbf16>
    %c0_75 = arith.constant 0 : index
    %c0_76 = arith.constant 0 : index
    %c0_77 = arith.constant 0 : index
    %83 = vector.load %arg3[%c0_75, %c0_76, %c0_77] : memref<9x8x8xbf16, #tpu.memory_space<vmem>>, vector<1x8x8xbf16>
    %84 = vector.shape_cast %83 : vector<1x8x8xbf16> to vector<8x8xbf16>
    %cst_78 = arith.constant dense<0.000000e+00> : vector<256x8xf32>
    %85 = tpu.matmul %82, %84, %cst_78 {dimension_numbers = #tpu.dot_dimension_numbers<[1], [0], [0], [1], [0, 0, 1, 1], [], []>} : vector<256x8xbf16>, vector<8x8xbf16>, vector<256x8xf32> -> vector<256x8xf32>
    %86 = arith.addf %79, %85 : vector<256x8xf32>
    %c0_79 = arith.constant 0 : index
    %c8_80 = arith.constant 8 : index
    %c0_81 = arith.constant 0 : index
    %87 = vector.load %arg5[%c0_79, %c8_80, %c0_81] : memref<18x32x8xf32, #tpu.memory_space<vmem>>, vector<16x16x8xf32>
    %88 = vector.shape_cast %87 : vector<16x16x8xf32> to vector<256x8xf32>
    %89 = arith.truncf %88 : vector<256x8xf32> to vector<256x8xbf16>
    %c1_82 = arith.constant 1 : index
    %c0_83 = arith.constant 0 : index
    %c0_84 = arith.constant 0 : index
    %90 = vector.load %arg3[%c1_82, %c0_83, %c0_84] : memref<9x8x8xbf16, #tpu.memory_space<vmem>>, vector<1x8x8xbf16>
    %91 = vector.shape_cast %90 : vector<1x8x8xbf16> to vector<8x8xbf16>
    %cst_85 = arith.constant dense<0.000000e+00> : vector<256x8xf32>
    %92 = tpu.matmul %89, %91, %cst_85 {dimension_numbers = #tpu.dot_dimension_numbers<[1], [0], [0], [1], [0, 0, 1, 1], [], []>} : vector<256x8xbf16>, vector<8x8xbf16>, vector<256x8xf32> -> vector<256x8xf32>
    %93 = arith.addf %86, %92 : vector<256x8xf32>
    %c0_86 = arith.constant 0 : index
    %c9 = arith.constant 9 : index
    %c0_87 = arith.constant 0 : index
    %94 = vector.load %arg5[%c0_86, %c9, %c0_87] : memref<18x32x8xf32, #tpu.memory_space<vmem>>, vector<16x16x8xf32>
    %95 = vector.shape_cast %94 : vector<16x16x8xf32> to vector<256x8xf32>
    %96 = arith.truncf %95 : vector<256x8xf32> to vector<256x8xbf16>
    %c2_88 = arith.constant 2 : index
    %c0_89 = arith.constant 0 : index
    %c0_90 = arith.constant 0 : index
    %97 = vector.load %arg3[%c2_88, %c0_89, %c0_90] : memref<9x8x8xbf16, #tpu.memory_space<vmem>>, vector<1x8x8xbf16>
    %98 = vector.shape_cast %97 : vector<1x8x8xbf16> to vector<8x8xbf16>
    %cst_91 = arith.constant dense<0.000000e+00> : vector<256x8xf32>
    %99 = tpu.matmul %96, %98, %cst_91 {dimension_numbers = #tpu.dot_dimension_numbers<[1], [0], [0], [1], [0, 0, 1, 1], [], []>} : vector<256x8xbf16>, vector<8x8xbf16>, vector<256x8xf32> -> vector<256x8xf32>
    %100 = arith.addf %93, %99 : vector<256x8xf32>
    %c1_92 = arith.constant 1 : index
    %c7_93 = arith.constant 7 : index
    %c0_94 = arith.constant 0 : index
    %101 = vector.load %arg5[%c1_92, %c7_93, %c0_94] : memref<18x32x8xf32, #tpu.memory_space<vmem>>, vector<16x16x8xf32>
    %102 = vector.shape_cast %101 : vector<16x16x8xf32> to vector<256x8xf32>
    %103 = arith.truncf %102 : vector<256x8xf32> to vector<256x8xbf16>
    %c3_95 = arith.constant 3 : index
    %c0_96 = arith.constant 0 : index
    %c0_97 = arith.constant 0 : index
    %104 = vector.load %arg3[%c3_95, %c0_96, %c0_97] : memref<9x8x8xbf16, #tpu.memory_space<vmem>>, vector<1x8x8xbf16>
    %105 = vector.shape_cast %104 : vector<1x8x8xbf16> to vector<8x8xbf16>
    %cst_98 = arith.constant dense<0.000000e+00> : vector<256x8xf32>
    %106 = tpu.matmul %103, %105, %cst_98 {dimension_numbers = #tpu.dot_dimension_numbers<[1], [0], [0], [1], [0, 0, 1, 1], [], []>} : vector<256x8xbf16>, vector<8x8xbf16>, vector<256x8xf32> -> vector<256x8xf32>
    %107 = arith.addf %100, %106 : vector<256x8xf32>
    %c1_99 = arith.constant 1 : index
    %c8_100 = arith.constant 8 : index
    %c0_101 = arith.constant 0 : index
    %108 = vector.load %arg5[%c1_99, %c8_100, %c0_101] : memref<18x32x8xf32, #tpu.memory_space<vmem>>, vector<16x16x8xf32>
    %109 = vector.shape_cast %108 : vector<16x16x8xf32> to vector<256x8xf32>
    %110 = arith.truncf %109 : vector<256x8xf32> to vector<256x8xbf16>
    %c4_102 = arith.constant 4 : index
    %c0_103 = arith.constant 0 : index
    %c0_104 = arith.constant 0 : index
    %111 = vector.load %arg3[%c4_102, %c0_103, %c0_104] : memref<9x8x8xbf16, #tpu.memory_space<vmem>>, vector<1x8x8xbf16>
    %112 = vector.shape_cast %111 : vector<1x8x8xbf16> to vector<8x8xbf16>
    %cst_105 = arith.constant dense<0.000000e+00> : vector<256x8xf32>
    %113 = tpu.matmul %110, %112, %cst_105 {dimension_numbers = #tpu.dot_dimension_numbers<[1], [0], [0], [1], [0, 0, 1, 1], [], []>} : vector<256x8xbf16>, vector<8x8xbf16>, vector<256x8xf32> -> vector<256x8xf32>
    %114 = arith.addf %107, %113 : vector<256x8xf32>
    %c1_106 = arith.constant 1 : index
    %c9_107 = arith.constant 9 : index
    %c0_108 = arith.constant 0 : index
    %115 = vector.load %arg5[%c1_106, %c9_107, %c0_108] : memref<18x32x8xf32, #tpu.memory_space<vmem>>, vector<16x16x8xf32>
    %116 = vector.shape_cast %115 : vector<16x16x8xf32> to vector<256x8xf32>
    %117 = arith.truncf %116 : vector<256x8xf32> to vector<256x8xbf16>
    %c5_109 = arith.constant 5 : index
    %c0_110 = arith.constant 0 : index
    %c0_111 = arith.constant 0 : index
    %118 = vector.load %arg3[%c5_109, %c0_110, %c0_111] : memref<9x8x8xbf16, #tpu.memory_space<vmem>>, vector<1x8x8xbf16>
    %119 = vector.shape_cast %118 : vector<1x8x8xbf16> to vector<8x8xbf16>
    %cst_112 = arith.constant dense<0.000000e+00> : vector<256x8xf32>
    %120 = tpu.matmul %117, %119, %cst_112 {dimension_numbers = #tpu.dot_dimension_numbers<[1], [0], [0], [1], [0, 0, 1, 1], [], []>} : vector<256x8xbf16>, vector<8x8xbf16>, vector<256x8xf32> -> vector<256x8xf32>
    %121 = arith.addf %114, %120 : vector<256x8xf32>
    %c2_113 = arith.constant 2 : index
    %c7_114 = arith.constant 7 : index
    %c0_115 = arith.constant 0 : index
    %122 = vector.load %arg5[%c2_113, %c7_114, %c0_115] : memref<18x32x8xf32, #tpu.memory_space<vmem>>, vector<16x16x8xf32>
    %123 = vector.shape_cast %122 : vector<16x16x8xf32> to vector<256x8xf32>
    %124 = arith.truncf %123 : vector<256x8xf32> to vector<256x8xbf16>
    %c6_116 = arith.constant 6 : index
    %c0_117 = arith.constant 0 : index
    %c0_118 = arith.constant 0 : index
    %125 = vector.load %arg3[%c6_116, %c0_117, %c0_118] : memref<9x8x8xbf16, #tpu.memory_space<vmem>>, vector<1x8x8xbf16>
    %126 = vector.shape_cast %125 : vector<1x8x8xbf16> to vector<8x8xbf16>
    %cst_119 = arith.constant dense<0.000000e+00> : vector<256x8xf32>
    %127 = tpu.matmul %124, %126, %cst_119 {dimension_numbers = #tpu.dot_dimension_numbers<[1], [0], [0], [1], [0, 0, 1, 1], [], []>} : vector<256x8xbf16>, vector<8x8xbf16>, vector<256x8xf32> -> vector<256x8xf32>
    %128 = arith.addf %121, %127 : vector<256x8xf32>
    %c2_120 = arith.constant 2 : index
    %c8_121 = arith.constant 8 : index
    %c0_122 = arith.constant 0 : index
    %129 = vector.load %arg5[%c2_120, %c8_121, %c0_122] : memref<18x32x8xf32, #tpu.memory_space<vmem>>, vector<16x16x8xf32>
    %130 = vector.shape_cast %129 : vector<16x16x8xf32> to vector<256x8xf32>
    %131 = arith.truncf %130 : vector<256x8xf32> to vector<256x8xbf16>
    %c7_123 = arith.constant 7 : index
    %c0_124 = arith.constant 0 : index
    %c0_125 = arith.constant 0 : index
    %132 = vector.load %arg3[%c7_123, %c0_124, %c0_125] : memref<9x8x8xbf16, #tpu.memory_space<vmem>>, vector<1x8x8xbf16>
    %133 = vector.shape_cast %132 : vector<1x8x8xbf16> to vector<8x8xbf16>
    %cst_126 = arith.constant dense<0.000000e+00> : vector<256x8xf32>
    %134 = tpu.matmul %131, %133, %cst_126 {dimension_numbers = #tpu.dot_dimension_numbers<[1], [0], [0], [1], [0, 0, 1, 1], [], []>} : vector<256x8xbf16>, vector<8x8xbf16>, vector<256x8xf32> -> vector<256x8xf32>
    %135 = arith.addf %128, %134 : vector<256x8xf32>
    %c2_127 = arith.constant 2 : index
    %c9_128 = arith.constant 9 : index
    %c0_129 = arith.constant 0 : index
    %136 = vector.load %arg5[%c2_127, %c9_128, %c0_129] : memref<18x32x8xf32, #tpu.memory_space<vmem>>, vector<16x16x8xf32>
    %137 = vector.shape_cast %136 : vector<16x16x8xf32> to vector<256x8xf32>
    %138 = arith.truncf %137 : vector<256x8xf32> to vector<256x8xbf16>
    %c8_130 = arith.constant 8 : index
    %c0_131 = arith.constant 0 : index
    %c0_132 = arith.constant 0 : index
    %139 = vector.load %arg3[%c8_130, %c0_131, %c0_132] : memref<9x8x8xbf16, #tpu.memory_space<vmem>>, vector<1x8x8xbf16>
    %140 = vector.shape_cast %139 : vector<1x8x8xbf16> to vector<8x8xbf16>
    %cst_133 = arith.constant dense<0.000000e+00> : vector<256x8xf32>
    %141 = tpu.matmul %138, %140, %cst_133 {dimension_numbers = #tpu.dot_dimension_numbers<[1], [0], [0], [1], [0, 0, 1, 1], [], []>} : vector<256x8xbf16>, vector<8x8xbf16>, vector<256x8xf32> -> vector<256x8xf32>
    %142 = arith.addf %135, %141 : vector<256x8xf32>
    %cst_134 = arith.constant 0.000000e+00 : f32
    %143 = vector.broadcast %cst_134 : f32 to vector<256x8xf32>
    %144 = arith.maximumf %142, %143 : vector<256x8xf32>
    %145 = vector.shape_cast %144 : vector<256x8xf32> to vector<16x16x8xf32>
    %c0_135 = arith.constant 0 : index
    %c0_136 = arith.constant 0 : index
    %c0_137 = arith.constant 0 : index
    %c0_138 = arith.constant 0 : index
    %146 = vector.load %arg4[%c0_135, %c0_136, %c0_137, %c0_138] : memref<1x16x16x8xf32, #tpu.memory_space<vmem>>, vector<1x16x16x8xf32>
    %147 = vector.shape_cast %146 : vector<1x16x16x8xf32> to vector<16x16x8xf32>
    %148 = vector.shape_cast %145 : vector<16x16x8xf32> to vector<1x16x16x8xf32>
    tpu.vector_store %arg4[%c0_135, %c0_136, %c0_137, %c0_138], %148 {strides = array<i32>} : memref<1x16x16x8xf32, #tpu.memory_space<vmem>>, vector<1x16x16x8xf32>,
    return
  }
  func.func @transform_0(%arg0: i32) -> (i32, i32, i32, i32) {
    %c0_i32 = arith.constant 0 : i32
    %c0_i32_0 = arith.constant 0 : i32
    %c0_i32_1 = arith.constant 0 : i32
    %c0_i32_2 = arith.constant 0 : i32
    return %arg0, %c0_i32, %c0_i32_0, %c0_i32_1 : i32, i32, i32, i32
  }
  func.func @transform_1(%arg0: i32) -> (i32, i32, i32) {
    %c0_i32 = arith.constant 0 : i32
    %c0_i32_0 = arith.constant 0 : i32
    %c0_i32_1 = arith.constant 0 : i32
    %c0_i32_2 = arith.constant 0 : i32
    return %c0_i32, %c0_i32_0, %c0_i32_1 : i32, i32, i32
  }
  func.func @transform_2(%arg0: i32) -> (i32, i32, i32) {
    %c0_i32 = arith.constant 0 : i32
    %c0_i32_0 = arith.constant 0 : i32
    %c0_i32_1 = arith.constant 0 : i32
    %c0_i32_2 = arith.constant 0 : i32
    return %c0_i32, %c0_i32_0, %c0_i32_1 : i32, i32, i32
  }
  func.func @transform_3(%arg0: i32) -> (i32, i32, i32, i32) {
    %c0_i32 = arith.constant 0 : i32
    %c0_i32_0 = arith.constant 0 : i32
    %c0_i32_1 = arith.constant 0 : i32
    %c0_i32_2 = arith.constant 0 : i32
    return %arg0, %c0_i32, %c0_i32_0, %c0_i32_1 : i32, i32, i32, i32
  }
}

</mosaic_0001>

<llo_original>
// kernel: block_forward.1
$region0: #{block_forward.1}
  #allocation0 [shape = 'u32[]', space=smem, size = 0x4, offset = 0x4, fixed_abs, tag = 'smem constant byte address 0x4 - core index']
  #allocation1 [shape = 'u32[144,128]{1,0:T(1,128)}', space=vmem, size = 0x12000, scoped, tag = 'internal scratch']
  #allocation2 [shape = 'f32[18,32,8]{2,1,0:T(8,128)}', space=vmem, size = 0x48000, scoped, tag = 'scratch operand']
  %s0 = inlined_call_operand.vmem [shape: f32[2,18,18,4], index: 0, kind: input, shape index: {}]
  %s1 = inlined_call_operand.vmem [shape: bf16[9,4,8], index: 1, kind: input, shape index: {}]
  %s2 = inlined_call_operand.vmem [shape: bf16[9,8,8], index: 2, kind: input, shape index: {}]
  %s3 = inlined_call_operand.vmem [shape: f32[2,16,16,8], index: 3, kind: output, shape index: {}]
  %s4 = sld [smem:[#allocation0]]
  $region45: #{block_forward.1} parent=0
    _
  %s6 = ssub.s32 1, %s4
  %s7 = scalar_select 0, %s6, %s4
  loop: start=0, step=1, limit=4
  $region2: #{block_forward.1} parent=0 // loop_pre_header
    _
  $region3: #{block_forward.1} parent=0 // loop_header
    %s9 = sphi 0, %s13
    %p10 = scmp.ge.s32.totalorder %s9, 4
    %s19 = sphi 0, %s21
    %s22 = sphi 0, %s19
    %s23 = sphi 0, %s22
    %s39 = sphi 0, %s23
    %s43 = sphi 0, %s43
    %s45 = sphi 0, %s43
    %s46 = sphi 0, %s45
    %s60 = sphi 0, %s46
    %s64 = sphi 0, %s64
    %s66 = sphi 0, %s64
    %s67 = sphi 0, %s66
    %s81 = sphi 0, %s67
    %s87 = sphi 0, %s89
    %s90 = sphi 0, %s87
    %s91 = sphi 0, %s90
    %s107 = sphi 0, %s91
  $region4: #{block_forward.1} parent=0 // loop_header_branch
    %12 = sbr.rel (%p10) target = $region8
  $region5: #{block_forward.1} parent=0 // loop_body
    %s14 = ssub.s32 %s9, 1
    %s15 = ssub.s32 %s9, 2
    %s16 = sadd.s32 %s9, 1
    %s17 = ssub.s32 %s9, %s16
    %p18 = scmp.eq.s32.totalorder %s17, 0
    %s20 = sadd.s32 %s19, 1
    %s21 = scalar_select %p18, %s19, %s20
    %p24 = pneg %p18
    %p25 = scmp.eq.s32.totalorder %s9, 1
    %p26 = por %p24, %p25
    %p27 = scmp.ne.s32.totalorder %s19, %s22
    %p28 = scmp.eq.s32.totalorder %s9, 0
    %p29 = por %p27, %p28
    %p30 = scmp.ne.s32.totalorder %s19, %s22
    %p31 = scmp.eq.s32.totalorder %s14, 1
    %p32 = por %p30, %p31
    %p33 = scmp.ne.s32.totalorder %s22, %s23
    %p34 = scmp.eq.s32.totalorder %s14, 0
    %p35 = por %p33, %p34
    %p36 = scmp.ne.s32.totalorder %s22, %s23
    %p37 = scmp.eq.s32.totalorder %s15, 1
    %p38 = por %p36, %p37
    %p40 = scmp.ne.s32.totalorder %s23, %s39
    %p41 = scmp.eq.s32.totalorder %s15, 0
    %p42 = por %p40, %p41
    %s44 = sadd.s32 %s43, 1
    %p47 = scmp.eq.s32.totalorder %s9, 1
    %p48 = scmp.ne.s32.totalorder %s43, %s45
    %p49 = scmp.eq.s32.totalorder %s9, 0
    %p50 = por %p48, %p49
    %p51 = scmp.ne.s32.totalorder %s43, %s45
    %p52 = scmp.eq.s32.totalorder %s14, 1
    %p53 = por %p51, %p52
    %p54 = scmp.ne.s32.totalorder %s45, %s46
    %p55 = scmp.eq.s32.totalorder %s14, 0
    %p56 = por %p54, %p55
    %p57 = scmp.ne.s32.totalorder %s45, %s46
    %p58 = scmp.eq.s32.totalorder %s15, 1
    %p59 = por %p57, %p58
    %p61 = scmp.ne.s32.totalorder %s46, %s60
    %p62 = scmp.eq.s32.totalorder %s15, 0
    %p63 = por %p61, %p62
    %s65 = sadd.s32 %s64, 1
    %p68 = scmp.eq.s32.totalorder %s9, 1
    %p69 = scmp.ne.s32.totalorder %s64, %s66
    %p70 = scmp.eq.s32.totalorder %s9, 0
    %p71 = por %p69, %p70
    %p72 = scmp.ne.s32.totalorder %s64, %s66
    %p73 = scmp.eq.s32.totalorder %s14, 1
    %p74 = por %p72, %p73
    %p75 = scmp.ne.s32.totalorder %s66, %s67
    %p76 = scmp.eq.s32.totalorder %s14, 0
    %p77 = por %p75, %p76
    %p78 = scmp.ne.s32.totalorder %s66, %s67
    %p79 = scmp.eq.s32.totalorder %s15, 1
    %p80 = por %p78, %p79
    %p82 = scmp.ne.s32.totalorder %s67, %s81
    %p83 = scmp.eq.s32.totalorder %s15, 0
    %p84 = por %p82, %p83
    %s85 = ssub.s32 %s9, %s16
    %p86 = scmp.eq.s32.totalorder %s85, 0
    %s88 = sadd.s32 %s87, 1
    %s89 = scalar_select %p86, %s87, %s88
    %p92 = pneg %p86
    %p93 = scmp.eq.s32.totalorder %s9, 1
    %p94 = por %p92, %p93
    %p95 = scmp.ne.s32.totalorder %s87, %s90
    %p96 = scmp.eq.s32.totalorder %s9, 0
    %p97 = por %p95, %p96
    %p98 = scmp.ne.s32.totalorder %s87, %s90
    %p99 = scmp.eq.s32.totalorder %s14, 1
    %p100 = por %p98, %p99
    %p101 = scmp.ne.s32.totalorder %s90, %s91
    %p102 = scmp.eq.s32.totalorder %s14, 0
    %p103 = por %p101, %p102
    %p104 = scmp.ne.s32.totalorder %s90, %s91
    %p105 = scmp.eq.s32.totalorder %s15, 1
    %p106 = por %p104, %p105
    %p108 = scmp.ne.s32.totalorder %s91, %s107
    %p109 = scmp.eq.s32.totalorder %s15, 0
    %p110 = por %p108, %p109
    %p111 = scmp.le.s32.totalorder 1, %s9
    %p112 = scmp.lt.s32.totalorder %s9, 3
    %p113 = pnand %p111, %p112
    %p114 = pneg %p113
    // Predicated region
    $region9: #{block_forward.1} parent=5 // pred_check
      _
    $region10: #{block_forward.1} parent=5 // pred_check_branch
      %116 = sbr.rel (%p113) target = $region12
    $region11: #{block_forward.1} parent=5 // pred_region
      %s117 = ssub.s32 %s9, 1
      // Predicated region
      $region13: #{block_forward.1} parent=11 // pred_check
        %p118 = pneg %p56
      $region14: #{block_forward.1} parent=11 // pred_check_branch
        %120 = sbr.rel (%p118) target = $region16
      $region15: #{block_forward.1} parent=11 // pred_region
        _
      $region16: #{block_forward.1} parent=11 // pred_fallthru
        _
      // Predicated region
      $region17: #{block_forward.1} parent=11 // pred_check
        %p121 = pneg %p77
      $region18: #{block_forward.1} parent=11 // pred_check_branch
        %123 = sbr.rel (%p121) target = $region20
      $region19: #{block_forward.1} parent=11 // pred_region
        _
      $region20: #{block_forward.1} parent=11 // pred_fallthru
        _
    $region12: #{block_forward.1} parent=5 // pred_fallthru
      _
    %p124 = scmp.lt.s32.totalorder %s9, 2
    // Predicated region
    $region21: #{block_forward.1} parent=5 // pred_check
      %p125 = pneg %p124
    $region22: #{block_forward.1} parent=5 // pred_check_branch
      %127 = sbr.rel (%p125) target = $region24
    $region23: #{block_forward.1} parent=5 // pred_region
      // Predicated region
      $region25: #{block_forward.1} parent=23 // pred_check
        %p128 = pneg %p29
      $region26: #{block_forward.1} parent=23 // pred_check_branch
        %130 = sbr.rel (%p128) target = $region28
      $region27: #{block_forward.1} parent=23 // pred_region
        %p131 = scmp.lt.s32.totalorder %s9, 1
        %s132 = scalar_select %p131, %s9, 1
        %s133 = smul.addr %s132, 54
        %s134 = smul.addr %s133, 8
        %s135 = scalar_lea.vmem %s0, %s134
      $region28: #{block_forward.1} parent=23 // pred_fallthru
        _
    $region24: #{block_forward.1} parent=5 // pred_fallthru
      _
    %p136 = scmp.le.s32.totalorder 1, %s9
    %p137 = scmp.lt.s32.totalorder %s9, 3
    %p138 = pnand %p136, %p137
    %p139 = pneg %p138
    // Predicated region
    $region29: #{block_forward.1} parent=5 // pred_check
      _
    $region30: #{block_forward.1} parent=5 // pred_check_branch
      %141 = sbr.rel (%p138) target = $region32
    $region31: #{block_forward.1} parent=5 // pred_region
      %s142 = ssub.s32 %s9, 1
      %p143 = scmp.lt.s32.totalorder %s14, 1
      %s144 = scalar_select %p143, %s14, 1
      %s145 = smul.addr %s144, 54
      %s146 = smul.addr %s145, 8
      %s147 = scalar_lea.vmem %s0, %s146
      %p148 = pneg %p35
      %p149 = pneg %p32
      %p150 = pneg %p56
      %p151 = pneg %p53
      %p152 = pneg %p77
      %p153 = pneg %p74
      %p154 = pneg %p103
      %p155 = pneg %p100
      %p156 = scmp.lt.s32.totalorder %s14, 1
      %s157 = scalar_select %p156, %s14, 1
      %s158 = smul.addr %s157, 32
      %s159 = smul.addr %s158, 8
      %s160 = scalar_lea.vmem %s3, %s159
      %p161 = scmp.lt.s32.totalorder %s14, 1
      %s162 = scalar_select %p161, %s14, 1
      %s163 = smul.addr %s162, 54
      %s164 = smul.addr %s163, 8
      %s165 = scalar_lea.vmem %s0, %s164
      %p166 = scmp.lt.s32.totalorder %s14, 1
      %s167 = scalar_select %p166, %s14, 1
      %s168 = smul.addr %s167, 32
      %s169 = smul.addr %s168, 8
      %s170 = scalar_lea.vmem %s3, %s169
      %v172 = vld [vmem:[%s165] sm:$0xff]
      %v173 = vld [vmem:[%s165 + $0x8] sm:$0xff]
      %v174 = vld [vmem:[%s165 + $0x18] sm:$0xff]
      %v175 = vld [vmem:[%s165 + $0x20] sm:$0xff]
      %v176 = vld [vmem:[%s165 + $0x30] sm:$0xff]
      %v177 = vld [vmem:[%s165 + $0x38] sm:$0xff]
      %v178 = vld [vmem:[%s165 + $0x48] sm:$0xff]
      %v179 = vld [vmem:[%s165 + $0x50] sm:$0xff]
      %v180 = vld [vmem:[%s165 + $0x60] sm:$0xff]
      %v181 = vld [vmem:[%s165 + $0x68] sm:$0xff]
      %v182 = vld [vmem:[%s165 + $0x78] sm:$0xff]
      %v183 = vld [vmem:[%s165 + $0x80] sm:$0xff]
      %v184 = vld [vmem:[%s165 + $0x90] sm:$0xff]
      %v185 = vld [vmem:[%s165 + $0x98] sm:$0xff]
      %v186 = vld [vmem:[%s165 + $0xa8] sm:$0xff]
      %v187 = vld [vmem:[%s165 + $0xb0] sm:$0xff]
      %v188 = vld [vmem:[%s165 + $0xc0] sm:$0xff]
      %v189 = vld [vmem:[%s165 + $0xc8] sm:$0xff]
      %v190 = vld [vmem:[%s165 + $0xd8] sm:$0xff]
      %v191 = vld [vmem:[%s165 + $0xe0] sm:$0xff]
      %v192 = vld [vmem:[%s165 + $0xf0] sm:$0xff]
      %v193 = vld [vmem:[%s165 + $0xf8] sm:$0xff]
      %v194 = vld [vmem:[%s165 + $0x108] sm:$0xff]
      %v195 = vld [vmem:[%s165 + $0x110] sm:$0xff]
      %v196 = vld [vmem:[%s165 + $0x120] sm:$0xff]
      %v197 = vld [vmem:[%s165 + $0x128] sm:$0xff]
      %v198 = vld [vmem:[%s165 + $0x138] sm:$0xff]
      %v199 = vld [vmem:[%s165 + $0x140] sm:$0xff]
      %v200 = vld [vmem:[%s165 + $0x150] sm:$0xff]
      %v201 = vld [vmem:[%s165 + $0x158] sm:$0xff]
      %v202 = vld [vmem:[%s165 + $0x168] sm:$0xff]
      %v203 = vld [vmem:[%s165 + $0x170] sm:$0xff]
      %v204 = vpack.c.bf16 %v173, %v172
      %v205 = vpack.c.bf16 %v175, %v174
      %v206 = vpack.c.bf16 %v177, %v176
      %v207 = vpack.c.bf16 %v179, %v178
      %v208 = vpack.c.bf16 %v181, %v180
      %v209 = vpack.c.bf16 %v183, %v182
      %v210 = vpack.c.bf16 %v185, %v184
      %v211 = vpack.c.bf16 %v187, %v186
      %v212 = vpack.c.bf16 %v189, %v188
      %v213 = vpack.c.bf16 %v191, %v190
      %v214 = vpack.c.bf16 %v193, %v192
      %v215 = vpack.c.bf16 %v195, %v194
      %v216 = vpack.c.bf16 %v197, %v196
      %v217 = vpack.c.bf16 %v199, %v198
      %v218 = vpack.c.bf16 %v201, %v200
      %v219 = vpack.c.bf16 %v203, %v202
      %v220 = vld [vmem:[%s1] sm:$0x3]
      %v221 = vld [vmem:[%s165 + $0x1] sm:$0xff]
      %v222 = vld [vmem:[%s165 + $0x9] sm:$0xff]
      %v223 = vld [vmem:[%s165 + $0x19] sm:$0xff]
      %v224 = vld [vmem:[%s165 + $0x21] sm:$0xff]
      %v225 = vld [vmem:[%s165 + $0x31] sm:$0xff]
      %v226 = vld [vmem:[%s165 + $0x39] sm:$0xff]
      %v227 = vld [vmem:[%s165 + $0x49] sm:$0xff]
      %v228 = vld [vmem:[%s165 + $0x51] sm:$0xff]
      %v229 = vld [vmem:[%s165 + $0x61] sm:$0xff]
      %v230 = vld [vmem:[%s165 + $0x69] sm:$0xff]
      %v231 = vld [vmem:[%s165 + $0x79] sm:$0xff]
      %v232 = vld [vmem:[%s165 + $0x81] sm:$0xff]
      %v233 = vld [vmem:[%s165 + $0x91] sm:$0xff]
      %v234 = vld [vmem:[%s165 + $0x99] sm:$0xff]
      %v235 = vld [vmem:[%s165 + $0xa9] sm:$0xff]
      %v236 = vld [vmem:[%s165 + $0xb1] sm:$0xff]
      %v237 = vld [vmem:[%s165 + $0xc1] sm:$0xff]
      %v238 = vld [vmem:[%s165 + $0xc9] sm:$0xff]
      %v239 = vld [vmem:[%s165 + $0xd9] sm:$0xff]
      %v240 = vld [vmem:[%s165 + $0xe1] sm:$0xff]
      %v241 = vld [vmem:[%s165 + $0xf1] sm:$0xff]
      %v242 = vld [vmem:[%s165 + $0xf9] sm:$0xff]
      %v243 = vld [vmem:[%s165 + $0x109] sm:$0xff]
      %v244 = vld [vmem:[%s165 + $0x111] sm:$0xff]
      %v245 = vld [vmem:[%s165 + $0x121] sm:$0xff]
      %v246 = vld [vmem:[%s165 + $0x129] sm:$0xff]
      %v247 = vld [vmem:[%s165 + $0x139] sm:$0xff]
      %v248 = vld [vmem:[%s165 + $0x141] sm:$0xff]
      %v249 = vld [vmem:[%s165 + $0x151] sm:$0xff]
      %v250 = vld [vmem:[%s165 + $0x159] sm:$0xff]
      %v251 = vld [vmem:[%s165 + $0x169] sm:$0xff]
      %v252 = vld [vmem:[%s165 + $0x171] sm:$0xff]
      %v253 = vpack.c.bf16 %v222, %v221
      %v254 = vpack.c.bf16 %v224, %v223
      %v255 = vpack.c.bf16 %v226, %v225
      %v256 = vpack.c.bf16 %v228, %v227
      %v257 = vpack.c.bf16 %v230, %v229
      %v258 = vpack.c.bf16 %v232, %v231
      %v259 = vpack.c.bf16 %v234, %v233
      %v260 = vpack.c.bf16 %v236, %v235
      %v261 = vpack.c.bf16 %v238, %v237
      %v262 = vpack.c.bf16 %v240, %v239
      %v263 = vpack.c.bf16 %v242, %v241
      %v264 = vpack.c.bf16 %v244, %v243
      %v265 = vpack.c.bf16 %v246, %v245
      %v266 = vpack.c.bf16 %v248, %v247
      %v267 = vpack.c.bf16 %v250, %v249
      %v268 = vpack.c.bf16 %v252, %v251
      %s269 = scalar_lea.vmem %s1, 2
      %v270 = vld [vmem:[%s269] sm:$0x3]
      %vm271 = vcmask 31744
      %v273 = vsel %vm271, %v253, 0
      %v276 = vsel %vm271, %v254, 0
      %v279 = vsel %vm271, %v255, 0
      %v282 = vsel %vm271, %v256, 0
      %v285 = vsel %vm271, %v257, 0
      %v288 = vsel %vm271, %v258, 0
      %v291 = vsel %vm271, %v259, 0
      %v294 = vsel %vm271, %v260, 0
      %v297 = vsel %vm271, %v261, 0
      %v300 = vsel %vm271, %v262, 0
      %v303 = vsel %vm271, %v263, 0
      %v306 = vsel %vm271, %v264, 0
      %v309 = vsel %vm271, %v265, 0
      %v312 = vsel %vm271, %v266, 0
      %v315 = vsel %vm271, %v267, 0
      %v318 = vsel %vm271, %v268, 0
      %vm320 = vcmask 1041408
      %v322 = vsel %vm320, %v270, 0
      %324 = vmatprep.subr.bf16.mxu0 0
      %325 = vmatpush1.bf16.msra.mxu0 0
      %326 = vmatprep.subr.bf16.mxu0 0
      %327 = vmatpush1.bf16.msra.mxu0 0
      %328 = vmatprep.subr.bf16.mxu0 0
      %329 = vmatpush1.bf16.msra.mxu0 0
      %330 = vmatprep.subr.bf16.mxu0 0
      %331 = vmatpush1.bf16.msra.mxu0 0
      %332 = vmatprep.subr.bf16.mxu0 0
      %333 = vmatpush1.bf16.msra.mxu0 0
      %334 = vmatprep.subr.bf16.mxu0 0
      %335 = vmatpush1.bf16.msra.mxu0 0
      %336 = vmatprep.subr.bf16.mxu0 0
      %337 = vmatpush1.bf16.msra.mxu0 0
      %338 = vmatprep.subr.bf16.mxu0 0
      %339 = vmatpush1.bf16.msra.mxu0 %v322
      %340 = vmatprep.subr.bf16.mxu0 0
      %341 = vmatpush2.bf16.msra.mxu0 0
      %342 = vmatprep.subr.bf16.mxu0 0
      %343 = vmatpush2.bf16.msra.mxu0 0
      %344 = vmatprep.subr.bf16.mxu0 0
      %345 = vmatpush2.bf16.msra.mxu0 0
      %346 = vmatprep.subr.bf16.mxu0 0
      %347 = vmatpush2.bf16.msra.mxu0 0
      %348 = vmatprep.subr.bf16.mxu0 0
      %349 = vmatpush2.bf16.msra.mxu0 0
      %350 = vmatprep.subr.bf16.mxu0 0
      %351 = vmatpush2.bf16.msra.mxu0 0
      %352 = vmatprep.subr.bf16.mxu0 0
      %353 = vmatpush2.bf16.msra.mxu0 0
      %354 = vmatprep.subr.bf16.mxu0 0
      %355 = vmatpush2.bf16.msra.mxu0 0
      %356 = vmatprep.mubr.bf16.mxu0 0
      %357 = vmatmul.mubr.bf16.gmra.mxu0 %v273
      %v358 = vpop.f32.mrf.mxu0
      %v359 = vadd.f32 0.0, %v358
      %v360 = vpop.f32.mrf.mxu0
      %v361 = vpop.f32.mrf.mxu0
      %v362 = vadd.f32 0.0, %v361
      %v363 = vpop.f32.mrf.mxu0
      %364 = vmatprep.mubr.bf16.mxu0 0
      %365 = vmatmul.mubr.bf16.gmra.mxu0 %v276
      %v366 = vpop.f32.mrf.mxu0
      %v367 = vadd.f32 0.0, %v366
      %v368 = vpop.f32.mrf.mxu0
      %v369 = vpop.f32.mrf.mxu0
      %v370 = vadd.f32 0.0, %v369
      %v371 = vpop.f32.mrf.mxu0
      %372 = vmatprep.mubr.bf16.mxu0 0
      %373 = vmatmul.mubr.bf16.gmra.mxu0 %v279
      %v374 = vpop.f32.mrf.mxu0
      %v375 = vadd.f32 0.0, %v374
      %v376 = vpop.f32.mrf.mxu0
      %v377 = vpop.f32.mrf.mxu0
      %v378 = vadd.f32 0.0, %v377
      %v379 = vpop.f32.mrf.mxu0
      %380 = vmatprep.mubr.bf16.mxu0 0
      %381 = vmatmul.mubr.bf16.gmra.mxu0 %v282
      %v382 = vpop.f32.mrf.mxu0
      %v383 = vadd.f32 0.0, %v382
      %v384 = vpop.f32.mrf.mxu0
      %v385 = vpop.f32.mrf.mxu0
      %v386 = vadd.f32 0.0, %v385
      %v387 = vpop.f32.mrf.mxu0
      %388 = vmatprep.mubr.bf16.mxu0 0
      %389 = vmatmul.mubr.bf16.gmra.mxu0 %v285
      %v390 = vpop.f32.mrf.mxu0
      %v391 = vadd.f32 0.0, %v390
      %v392 = vpop.f32.mrf.mxu0
      %v393 = vpop.f32.mrf.mxu0
      %v394 = vadd.f32 0.0, %v393
      %v395 = vpop.f32.mrf.mxu0
      %396 = vmatprep.mubr.bf16.mxu0 0
      %397 = vmatmul.mubr.bf16.gmra.mxu0 %v288
      %v398 = vpop.f32.mrf.mxu0
      %v399 = vadd.f32 0.0, %v398
      %v400 = vpop.f32.mrf.mxu0
      %v401 = vpop.f32.mrf.mxu0
      %v402 = vadd.f32 0.0, %v401
      %v403 = vpop.f32.mrf.mxu0
      %404 = vmatprep.mubr.bf16.mxu0 0
      %405 = vmatmul.mubr.bf16.gmra.mxu0 %v291
      %v406 = vpop.f32.mrf.mxu0
      %v407 = vadd.f32 0.0, %v406
      %v408 = vpop.f32.mrf.mxu0
      %v409 = vpop.f32.mrf.mxu0
      %v410 = vadd.f32 0.0, %v409
      %v411 = vpop.f32.mrf.mxu0
      %412 = vmatprep.mubr.bf16.mxu0 0
      %413 = vmatmul.mubr.bf16.gmra.mxu0 %v294
      %v414 = vpop.f32.mrf.mxu0
      %v415 = vadd.f32 0.0, %v414
      %v416 = vpop.f32.mrf.mxu0
      %v417 = vpop.f32.mrf.mxu0
      %v418 = vadd.f32 0.0, %v417
      %v419 = vpop.f32.mrf.mxu0
      %420 = vmatprep.mubr.bf16.mxu0 0
      %421 = vmatmul.mubr.bf16.gmra.mxu0 %v297
      %v422 = vpop.f32.mrf.mxu0
      %v423 = vadd.f32 0.0, %v422
      %v424 = vpop.f32.mrf.mxu0
      %v425 = vpop.f32.mrf.mxu0
      %v426 = vadd.f32 0.0, %v425
      %v427 = vpop.f32.mrf.mxu0
      %428 = vmatprep.mubr.bf16.mxu0 0
      %429 = vmatmul.mubr.bf16.gmra.mxu0 %v300
      %v430 = vpop.f32.mrf.mxu0
      %v431 = vadd.f32 0.0, %v430
      %v432 = vpop.f32.mrf.mxu0
      %v433 = vpop.f32.mrf.mxu0
      %v434 = vadd.f32 0.0, %v433
      %v435 = vpop.f32.mrf.mxu0
      %436 = vmatprep.mubr.bf16.mxu0 0
      %437 = vmatmul.mubr.bf16.gmra.mxu0 %v303
      %v438 = vpop.f32.mrf.mxu0
      %v439 = vadd.f32 0.0, %v438
      %v440 = vpop.f32.mrf.mxu0
      %v441 = vpop.f32.mrf.mxu0
      %v442 = vadd.f32 0.0, %v441
      %v443 = vpop.f32.mrf.mxu0
      %444 = vmatprep.mubr.bf16.mxu0 0
      %445 = vmatmul.mubr.bf16.gmra.mxu0 %v306
      %v446 = vpop.f32.mrf.mxu0
      %v447 = vadd.f32 0.0, %v446
      %v448 = vpop.f32.mrf.mxu0
      %v449 = vpop.f32.mrf.mxu0
      %v450 = vadd.f32 0.0, %v449
      %v451 = vpop.f32.mrf.mxu0
      %452 = vmatprep.mubr.bf16.mxu0 0
      %453 = vmatmul.mubr.bf16.gmra.mxu0 %v309
      %v454 = vpop.f32.mrf.mxu0
      %v455 = vadd.f32 0.0, %v454
      %v456 = vpop.f32.mrf.mxu0
      %v457 = vpop.f32.mrf.mxu0
      %v458 = vadd.f32 0.0, %v457
      %v459 = vpop.f32.mrf.mxu0
      %460 = vmatprep.mubr.bf16.mxu0 0
      %461 = vmatmul.mubr.bf16.gmra.mxu0 %v312
      %v462 = vpop.f32.mrf.mxu0
      %v463 = vadd.f32 0.0, %v462
      %v464 = vpop.f32.mrf.mxu0
      %v465 = vpop.f32.mrf.mxu0
      %v466 = vadd.f32 0.0, %v465
      %v467 = vpop.f32.mrf.mxu0
      %468 = vmatprep.mubr.bf16.mxu0 0
      %469 = vmatmul.mubr.bf16.gmra.mxu0 %v315
      %v470 = vpop.f32.mrf.mxu0
      %v471 = vadd.f32 0.0, %v470
      %v472 = vpop.f32.mrf.mxu0
      %v473 = vpop.f32.mrf.mxu0
      %v474 = vadd.f32 0.0, %v473
      %v475 = vpop.f32.mrf.mxu0
      %476 = vmatprep.mubr.bf16.mxu0 0
      %477 = vmatmul.mubr.bf16.gmra.mxu0 %v318
      %v478 = vpop.f32.mrf.mxu0
      %v479 = vadd.f32 0.0, %v478
      %v480 = vpop.f32.mrf.mxu0
      %v481 = vpop.f32.mrf.mxu0
      %v482 = vadd.f32 0.0, %v481
      %v483 = vpop.f32.mrf.mxu0
      %484 = vdwg.mxu0
      %v486 = vsel %vm271, %v204, 0
      %v489 = vsel %vm271, %v205, 0
      %v492 = vsel %vm271, %v206, 0
      %v495 = vsel %vm271, %v207, 0
      %v498 = vsel %vm271, %v208, 0
      %v501 = vsel %vm271, %v209, 0
      %v504 = vsel %vm271, %v210, 0
      %v507 = vsel %vm271, %v211, 0
      %v510 = vsel %vm271, %v212, 0
      %v513 = vsel %vm271, %v213, 0
      %v516 = vsel %vm271, %v214, 0
      %v519 = vsel %vm271, %v215, 0
      %v522 = vsel %vm271, %v216, 0
      %v525 = vsel %vm271, %v217, 0
      %v528 = vsel %vm271, %v218, 0
      %v531 = vsel %vm271, %v219, 0
      %v534 = vsel %vm320, %v220, 0
      %536 = vmatprep.subr.bf16.mxu0 0
      %537 = vmatpush1.bf16.msra.mxu0 0
      %538 = vmatprep.subr.bf16.mxu0 0
      %539 = vmatpush1.bf16.msra.mxu0 0
      %540 = vmatprep.subr.bf16.mxu0 0
      %541 = vmatpush1.bf16.msra.mxu0 0
      %542 = vmatprep.subr.bf16.mxu0 0
      %543 = vmatpush1.bf16.msra.mxu0 0
      %544 = vmatprep.subr.bf16.mxu0 0
      %545 = vmatpush1.bf16.msra.mxu0 0
      %546 = vmatprep.subr.bf16.mxu0 0
      %547 = vmatpush1.bf16.msra.mxu0 0
      %548 = vmatprep.subr.bf16.mxu0 0
      %549 = vmatpush1.bf16.msra.mxu0 0
      %550 = vmatprep.subr.bf16.mxu0 0
      %551 = vmatpush1.bf16.msra.mxu0 %v534
      %552 = vmatprep.subr.bf16.mxu0 0
      %553 = vmatpush2.bf16.msra.mxu0 0
      %554 = vmatprep.subr.bf16.mxu0 0
      %555 = vmatpush2.bf16.msra.mxu0 0
      %556 = vmatprep.subr.bf16.mxu0 0
      %557 = vmatpush2.bf16.msra.mxu0 0
      %558 = vmatprep.subr.bf16.mxu0 0
      %559 = vmatpush2.bf16.msra.mxu0 0
      %560 = vmatprep.subr.bf16.mxu0 0
      %561 = vmatpush2.bf16.msra.mxu0 0
      %562 = vmatprep.subr.bf16.mxu0 0
      %563 = vmatpush2.bf16.msra.mxu0 0
      %564 = vmatprep.subr.bf16.mxu0 0
      %565 = vmatpush2.bf16.msra.mxu0 0
      %566 = vmatprep.subr.bf16.mxu0 0
      %567 = vmatpush2.bf16.msra.mxu0 0
      %568 = vmatprep.mubr.bf16.mxu0 0
      %569 = vmatmul.mubr.bf16.gmra.mxu0 %v486
      %v570 = vpop.f32.mrf.mxu0
      %v571 = vadd.f32 %v359, %v570
      %v572 = vpop.f32.mrf.mxu0
      %v573 = vpop.f32.mrf.mxu0
      %v574 = vadd.f32 %v362, %v573
      %v575 = vpop.f32.mrf.mxu0
      %576 = vmatprep.mubr.bf16.mxu0 0
      %577 = vmatmul.mubr.bf16.gmra.mxu0 %v489
      %v578 = vpop.f32.mrf.mxu0
      %v579 = vadd.f32 %v367, %v578
      %v580 = vpop.f32.mrf.mxu0
      %v581 = vpop.f32.mrf.mxu0
      %v582 = vadd.f32 %v370, %v581
      %v583 = vpop.f32.mrf.mxu0
      %584 = vmatprep.mubr.bf16.mxu0 0
      %585 = vmatmul.mubr.bf16.gmra.mxu0 %v492
      %v586 = vpop.f32.mrf.mxu0
      %v587 = vadd.f32 %v375, %v586
      %v588 = vpop.f32.mrf.mxu0
      %v589 = vpop.f32.mrf.mxu0
      %v590 = vadd.f32 %v378, %v589
      %v591 = vpop.f32.mrf.mxu0
      %592 = vmatprep.mubr.bf16.mxu0 0
      %593 = vmatmul.mubr.bf16.gmra.mxu0 %v495
      %v594 = vpop.f32.mrf.mxu0
      %v595 = vadd.f32 %v383, %v594
      %v596 = vpop.f32.mrf.mxu0
      %v597 = vpop.f32.mrf.mxu0
      %v598 = vadd.f32 %v386, %v597
      %v599 = vpop.f32.mrf.mxu0
      %600 = vmatprep.mubr.bf16.mxu0 0
      %601 = vmatmul.mubr.bf16.gmra.mxu0 %v498
      %v602 = vpop.f32.mrf.mxu0
      %v603 = vadd.f32 %v391, %v602
      %v604 = vpop.f32.mrf.mxu0
      %v605 = vpop.f32.mrf.mxu0
      %v606 = vadd.f32 %v394, %v605
      %v607 = vpop.f32.mrf.mxu0
      %608 = vmatprep.mubr.bf16.mxu0 0
      %609 = vmatmul.mubr.bf16.gmra.mxu0 %v501
      %v610 = vpop.f32.mrf.mxu0
      %v611 = vadd.f32 %v399, %v610
      %v612 = vpop.f32.mrf.mxu0
      %v613 = vpop.f32.mrf.mxu0
      %v614 = vadd.f32 %v402, %v613
      %v615 = vpop.f32.mrf.mxu0
      %616 = vmatprep.mubr.bf16.mxu0 0
      %617 = vmatmul.mubr.bf16.gmra.mxu0 %v504
      %v618 = vpop.f32.mrf.mxu0
      %v619 = vadd.f32 %v407, %v618
      %v620 = vpop.f32.mrf.mxu0
      %v621 = vpop.f32.mrf.mxu0
      %v622 = vadd.f32 %v410, %v621
      %v623 = vpop.f32.mrf.mxu0
      %624 = vmatprep.mubr.bf16.mxu0 0
      %625 = vmatmul.mubr.bf16.gmra.mxu0 %v507
      %v626 = vpop.f32.mrf.mxu0
      %v627 = vadd.f32 %v415, %v626
      %v628 = vpop.f32.mrf.mxu0
      %v629 = vpop.f32.mrf.mxu0
      %v630 = vadd.f32 %v418, %v629
      %v631 = vpop.f32.mrf.mxu0
      %632 = vmatprep.mubr.bf16.mxu0 0
      %633 = vmatmul.mubr.bf16.gmra.mxu0 %v510
      %v634 = vpop.f32.mrf.mxu0
      %v635 = vadd.f32 %v423, %v634
      %v636 = vpop.f32.mrf.mxu0
      %v637 = vpop.f32.mrf.mxu0
      %v638 = vadd.f32 %v426, %v637
      %v639 = vpop.f32.mrf.mxu0
      %640 = vmatprep.mubr.bf16.mxu0 0
      %641 = vmatmul.mubr.bf16.gmra.mxu0 %v513
      %v642 = vpop.f32.mrf.mxu0
      %v643 = vadd.f32 %v431, %v642
      %v644 = vpop.f32.mrf.mxu0
      %v645 = vpop.f32.mrf.mxu0
      %v646 = vadd.f32 %v434, %v645
      %v647 = vpop.f32.mrf.mxu0
      %648 = vmatprep.mubr.bf16.mxu0 0
      %649 = vmatmul.mubr.bf16.gmra.mxu0 %v516
      %v650 = vpop.f32.mrf.mxu0
      %v651 = vadd.f32 %v439, %v650
      %v652 = vpop.f32.mrf.mxu0
      %v653 = vpop.f32.mrf.mxu0
      %v654 = vadd.f32 %v442, %v653
      %v655 = vpop.f32.mrf.mxu0
      %656 = vmatprep.mubr.bf16.mxu0 0
      %657 = vmatmul.mubr.bf16.gmra.mxu0 %v519
      %v658 = vpop.f32.mrf.mxu0
      %v659 = vadd.f32 %v447, %v658
      %v660 = vpop.f32.mrf.mxu0
      %v661 = vpop.f32.mrf.mxu0
      %v662 = vadd.f32 %v450, %v661
      %v663 = vpop.f32.mrf.mxu0
      %664 = vmatprep.mubr.bf16.mxu0 0
      %665 = vmatmul.mubr.bf16.gmra.mxu0 %v522
      %v666 = vpop.f32.mrf.mxu0
      %v667 = vadd.f32 %v455, %v666
      %v668 = vpop.f32.mrf.mxu0
      %v669 = vpop.f32.mrf.mxu0
      %v670 = vadd.f32 %v458, %v669
      %v671 = vpop.f32.mrf.mxu0
      %672 = vmatprep.mubr.bf16.mxu0 0
      %673 = vmatmul.mubr.bf16.gmra.mxu0 %v525
      %v674 = vpop.f32.mrf.mxu0
      %v675 = vadd.f32 %v463, %v674
      %v676 = vpop.f32.mrf.mxu0
      %v677 = vpop.f32.mrf.mxu0
      %v678 = vadd.f32 %v466, %v677
      %v679 = vpop.f32.mrf.mxu0
      %680 = vmatprep.mubr.bf16.mxu0 0
      %681 = vmatmul.mubr.bf16.gmra.mxu0 %v528
      %v682 = vpop.f32.mrf.mxu0
      %v683 = vadd.f32 %v471, %v682
      %v684 = vpop.f32.mrf.mxu0
      %v685 = vpop.f32.mrf.mxu0
      %v686 = vadd.f32 %v474, %v685
      %v687 = vpop.f32.mrf.mxu0
      %688 = vmatprep.mubr.bf16.mxu0 0
      %689 = vmatmul.mubr.bf16.gmra.mxu0 %v531
      %v690 = vpop.f32.mrf.mxu0
      %v691 = vadd.f32 %v479, %v690
      %v692 = vpop.f32.mrf.mxu0
      %v693 = vpop.f32.mrf.mxu0
      %v694 = vadd.f32 %v482, %v693
      %v695 = vpop.f32.mrf.mxu0
      %696 = vdwg.mxu0
      %v697 = vld [vmem:[%s165 + $0x2] sm:$0xff]
      %v698 = vld [vmem:[%s165 + $0xa] sm:$0xff]
      %v699 = vld [vmem:[%s165 + $0x1a] sm:$0xff]
      %v700 = vld [vmem:[%s165 + $0x22] sm:$0xff]
      %v701 = vld [vmem:[%s165 + $0x32] sm:$0xff]
      %v702 = vld [vmem:[%s165 + $0x3a] sm:$0xff]
      %v703 = vld [vmem:[%s165 + $0x4a] sm:$0xff]
      %v704 = vld [vmem:[%s165 + $0x52] sm:$0xff]
      %v705 = vld [vmem:[%s165 + $0x62] sm:$0xff]
      %v706 = vld [vmem:[%s165 + $0x6a] sm:$0xff]
      %v707 = vld [vmem:[%s165 + $0x7a] sm:$0xff]
      %v708 = vld [vmem:[%s165 + $0x82] sm:$0xff]
      %v709 = vld [vmem:[%s165 + $0x92] sm:$0xff]
      %v710 = vld [vmem:[%s165 + $0x9a] sm:$0xff]
      %v711 = vld [vmem:[%s165 + $0xaa] sm:$0xff]
      %v712 = vld [vmem:[%s165 + $0xb2] sm:$0xff]
      %v713 = vld [vmem:[%s165 + $0xc2] sm:$0xff]
      %v714 = vld [vmem:[%s165 + $0xca] sm:$0xff]
      %v715 = vld [vmem:[%s165 + $0xda] sm:$0xff]
      %v716 = vld [vmem:[%s165 + $0xe2] sm:$0xff]
      %v717 = vld [vmem:[%s165 + $0xf2] sm:$0xff]
      %v718 = vld [vmem:[%s165 + $0xfa] sm:$0xff]
      %v719 = vld [vmem:[%s165 + $0x10a] sm:$0xff]
      %v720 = vld [vmem:[%s165 + $0x112] sm:$0xff]
      %v721 = vld [vmem:[%s165 + $0x122] sm:$0xff]
      %v722 = vld [vmem:[%s165 + $0x12a] sm:$0xff]
      %v723 = vld [vmem:[%s165 + $0x13a] sm:$0xff]
      %v724 = vld [vmem:[%s165 + $0x142] sm:$0xff]
      %v725 = vld [vmem:[%s165 + $0x152] sm:$0xff]
      %v726 = vld [vmem:[%s165 + $0x15a] sm:$0xff]
      %v727 = vld [vmem:[%s165 + $0x16a] sm:$0xff]
      %v728 = vld [vmem:[%s165 + $0x172] sm:$0xff]
      %v729 = vpack.c.bf16 %v698, %v697
      %v730 = vpack.c.bf16 %v700, %v699
      %v731 = vpack.c.bf16 %v702, %v701
      %v732 = vpack.c.bf16 %v704, %v703
      %v733 = vpack.c.bf16 %v706, %v705
      %v734 = vpack.c.bf16 %v708, %v707
      %v735 = vpack.c.bf16 %v710, %v709
      %v736 = vpack.c.bf16 %v712, %v711
      %v737 = vpack.c.bf16 %v714, %v713
      %v738 = vpack.c.bf16 %v716, %v715
      %v739 = vpack.c.bf16 %v718, %v717
      %v740 = vpack.c.bf16 %v720, %v719
      %v741 = vpack.c.bf16 %v722, %v721
      %v742 = vpack.c.bf16 %v724, %v723
      %v743 = vpack.c.bf16 %v726, %v725
      %v744 = vpack.c.bf16 %v728, %v727
      %s745 = scalar_lea.vmem %s1, 4
      %v746 = vld [vmem:[%s745] sm:$0x3]
      %v748 = vsel %vm271, %v729, 0
      %v751 = vsel %vm271, %v730, 0
      %v754 = vsel %vm271, %v731, 0
      %v757 = vsel %vm271, %v732, 0
      %v760 = vsel %vm271, %v733, 0
      %v763 = vsel %vm271, %v734, 0
      %v766 = vsel %vm271, %v735, 0
      %v769 = vsel %vm271, %v736, 0
      %v772 = vsel %vm271, %v737, 0
      %v775 = vsel %vm271, %v738, 0
      %v778 = vsel %vm271, %v739, 0
      %v781 = vsel %vm271, %v740, 0
      %v784 = vsel %vm271, %v741, 0
      %v787 = vsel %vm271, %v742, 0
      %v790 = vsel %vm271, %v743, 0
      %v793 = vsel %vm271, %v744, 0
      %v796 = vsel %vm320, %v746, 0
      %798 = vmatprep.subr.bf16.mxu0 0
      %799 = vmatpush1.bf16.msra.mxu0 0
      %800 = vmatprep.subr.bf16.mxu0 0
      %801 = vmatpush1.bf16.msra.mxu0 0
      %802 = vmatprep.subr.bf16.mxu0 0
      %803 = vmatpush1.bf16.msra.mxu0 0
      %804 = vmatprep.subr.bf16.mxu0 0
      %805 = vmatpush1.bf16.msra.mxu0 0
      %806 = vmatprep.subr.bf16.mxu0 0
      %807 = vmatpush1.bf16.msra.mxu0 0
      %808 = vmatprep.subr.bf16.mxu0 0
      %809 = vmatpush1.bf16.msra.mxu0 0
      %810 = vmatprep.subr.bf16.mxu0 0
      %811 = vmatpush1.bf16.msra.mxu0 0
      %812 = vmatprep.subr.bf16.mxu0 0
      %813 = vmatpush1.bf16.msra.mxu0 %v796
      %814 = vmatprep.subr.bf16.mxu0 0
      %815 = vmatpush2.bf16.msra.mxu0 0
      %816 = vmatprep.subr.bf16.mxu0 0
      %817 = vmatpush2.bf16.msra.mxu0 0
      %818 = vmatprep.subr.bf16.mxu0 0
      %819 = vmatpush2.bf16.msra.mxu0 0
      %820 = vmatprep.subr.bf16.mxu0 0
      %821 = vmatpush2.bf16.msra.mxu0 0
      %822 = vmatprep.subr.bf16.mxu0 0
      %823 = vmatpush2.bf16.msra.mxu0 0
      %824 = vmatprep.subr.bf16.mxu0 0
      %825 = vmatpush2.bf16.msra.mxu0 0
      %826 = vmatprep.subr.bf16.mxu0 0
      %827 = vmatpush2.bf16.msra.mxu0 0
      %828 = vmatprep.subr.bf16.mxu0 0
      %829 = vmatpush2.bf16.msra.mxu0 0
      %830 = vmatprep.mubr.bf16.mxu0 0
      %831 = vmatmul.mubr.bf16.gmra.mxu0 %v748
      %v832 = vpop.f32.mrf.mxu0
      %v833 = vadd.f32 0.0, %v832
      %v834 = vpop.f32.mrf.mxu0
      %v835 = vpop.f32.mrf.mxu0
      %v836 = vadd.f32 0.0, %v835
      %v837 = vpop.f32.mrf.mxu0
      %838 = vmatprep.mubr.bf16.mxu0 0
      %839 = vmatmul.mubr.bf16.gmra.mxu0 %v751
      %v840 = vpop.f32.mrf.mxu0
      %v841 = vadd.f32 0.0, %v840
      %v842 = vpop.f32.mrf.mxu0
      %v843 = vpop.f32.mrf.mxu0
      %v844 = vadd.f32 0.0, %v843
      %v845 = vpop.f32.mrf.mxu0
      %846 = vmatprep.mubr.bf16.mxu0 0
      %847 = vmatmul.mubr.bf16.gmra.mxu0 %v754
      %v848 = vpop.f32.mrf.mxu0
      %v849 = vadd.f32 0.0, %v848
      %v850 = vpop.f32.mrf.mxu0
      %v851 = vpop.f32.mrf.mxu0
      %v852 = vadd.f32 0.0, %v851
      %v853 = vpop.f32.mrf.mxu0
      %854 = vmatprep.mubr.bf16.mxu0 0
      %855 = vmatmul.mubr.bf16.gmra.mxu0 %v757
      %v856 = vpop.f32.mrf.mxu0
      %v857 = vadd.f32 0.0, %v856
      %v858 = vpop.f32.mrf.mxu0
      %v859 = vpop.f32.mrf.mxu0
      %v860 = vadd.f32 0.0, %v859
      %v861 = vpop.f32.mrf.mxu0
      %862 = vmatprep.mubr.bf16.mxu0 0
      %863 = vmatmul.mubr.bf16.gmra.mxu0 %v760
      %v864 = vpop.f32.mrf.mxu0
      %v865 = vadd.f32 0.0, %v864
      %v866 = vpop.f32.mrf.mxu0
      %v867 = vpop.f32.mrf.mxu0
      %v868 = vadd.f32 0.0, %v867
      %v869 = vpop.f32.mrf.mxu0
      %870 = vmatprep.mubr.bf16.mxu0 0
      %871 = vmatmul.mubr.bf16.gmra.mxu0 %v763
      %v872 = vpop.f32.mrf.mxu0
      %v873 = vadd.f32 0.0, %v872
      %v874 = vpop.f32.mrf.mxu0
      %v875 = vpop.f32.mrf.mxu0
      %v876 = vadd.f32 0.0, %v875
      %v877 = vpop.f32.mrf.mxu0
      %878 = vmatprep.mubr.bf16.mxu0 0
      %879 = vmatmul.mubr.bf16.gmra.mxu0 %v766
      %v880 = vpop.f32.mrf.mxu0
      %v881 = vadd.f32 0.0, %v880
      %v882 = vpop.f32.mrf.mxu0
      %v883 = vpop.f32.mrf.mxu0
      %v884 = vadd.f32 0.0, %v883
      %v885 = vpop.f32.mrf.mxu0
      %886 = vmatprep.mubr.bf16.mxu0 0
      %887 = vmatmul.mubr.bf16.gmra.mxu0 %v769
      %v888 = vpop.f32.mrf.mxu0
      %v889 = vadd.f32 0.0, %v888
      %v890 = vpop.f32.mrf.mxu0
      %v891 = vpop.f32.mrf.mxu0
      %v892 = vadd.f32 0.0, %v891
      %v893 = vpop.f32.mrf.mxu0
      %894 = vmatprep.mubr.bf16.mxu0 0
      %895 = vmatmul.mubr.bf16.gmra.mxu0 %v772
      %v896 = vpop.f32.mrf.mxu0
      %v897 = vadd.f32 0.0, %v896
      %v898 = vpop.f32.mrf.mxu0
      %v899 = vpop.f32.mrf.mxu0
      %v900 = vadd.f32 0.0, %v899
      %v901 = vpop.f32.mrf.mxu0
      %902 = vmatprep.mubr.bf16.mxu0 0
      %903 = vmatmul.mubr.bf16.gmra.mxu0 %v775
      %v904 = vpop.f32.mrf.mxu0
      %v905 = vadd.f32 0.0, %v904
      %v906 = vpop.f32.mrf.mxu0
      %v907 = vpop.f32.mrf.mxu0
      %v908 = vadd.f32 0.0, %v907
      %v909 = vpop.f32.mrf.mxu0
      %910 = vmatprep.mubr.bf16.mxu0 0
      %911 = vmatmul.mubr.bf16.gmra.mxu0 %v778
      %v912 = vpop.f32.mrf.mxu0
      %v913 = vadd.f32 0.0, %v912
      %v914 = vpop.f32.mrf.mxu0
      %v915 = vpop.f32.mrf.mxu0
      %v916 = vadd.f32 0.0, %v915
      %v917 = vpop.f32.mrf.mxu0
      %918 = vmatprep.mubr.bf16.mxu0 0
      %919 = vmatmul.mubr.bf16.gmra.mxu0 %v781
      %v920 = vpop.f32.mrf.mxu0
      %v921 = vadd.f32 0.0, %v920
      %v922 = vpop.f32.mrf.mxu0
      %v923 = vpop.f32.mrf.mxu0
      %v924 = vadd.f32 0.0, %v923
      %v925 = vpop.f32.mrf.mxu0
      %926 = vmatprep.mubr.bf16.mxu0 0
      %927 = vmatmul.mubr.bf16.gmra.mxu0 %v784
      %v928 = vpop.f32.mrf.mxu0
      %v929 = vadd.f32 0.0, %v928
      %v930 = vpop.f32.mrf.mxu0
      %v931 = vpop.f32.mrf.mxu0
      %v932 = vadd.f32 0.0, %v931
      %v933 = vpop.f32.mrf.mxu0
      %934 = vmatprep.mubr.bf16.mxu0 0
      %935 = vmatmul.mubr.bf16.gmra.mxu0 %v787
      %v936 = vpop.f32.mrf.mxu0
      %v937 = vadd.f32 0.0, %v936
      %v938 = vpop.f32.mrf.mxu0
      %v939 = vpop.f32.mrf.mxu0
      %v940 = vadd.f32 0.0, %v939
      %v941 = vpop.f32.mrf.mxu0
      %942 = vmatprep.mubr.bf16.mxu0 0
      %943 = vmatmul.mubr.bf16.gmra.mxu0 %v790
      %v944 = vpop.f32.mrf.mxu0
      %v945 = vadd.f32 0.0, %v944
      %v946 = vpop.f32.mrf.mxu0
      %v947 = vpop.f32.mrf.mxu0
      %v948 = vadd.f32 0.0, %v947
      %v949 = vpop.f32.mrf.mxu0
      %950 = vmatprep.mubr.bf16.mxu0 0
      %951 = vmatmul.mubr.bf16.gmra.mxu0 %v793
      %v952 = vpop.f32.mrf.mxu0
      %v953 = vadd.f32 0.0, %v952
      %v954 = vpop.f32.mrf.mxu0
      %v955 = vpop.f32.mrf.mxu0
      %v956 = vadd.f32 0.0, %v955
      %v957 = vpop.f32.mrf.mxu0
      %958 = vdwg.mxu0
      %v959 = vadd.f32 %v571, %v833
      %v960 = vadd.f32 %v574, %v836
      %v961 = vadd.f32 %v579, %v841
      %v962 = vadd.f32 %v582, %v844
      %v963 = vadd.f32 %v587, %v849
      %v964 = vadd.f32 %v590, %v852
      %v965 = vadd.f32 %v595, %v857
      %v966 = vadd.f32 %v598, %v860
      %v967 = vadd.f32 %v603, %v865
      %v968 = vadd.f32 %v606, %v868
      %v969 = vadd.f32 %v611, %v873
      %v970 = vadd.f32 %v614, %v876
      %v971 = vadd.f32 %v619, %v881
      %v972 = vadd.f32 %v622, %v884
      %v973 = vadd.f32 %v627, %v889
      %v974 = vadd.f32 %v630, %v892
      %v975 = vadd.f32 %v635, %v897
      %v976 = vadd.f32 %v638, %v900
      %v977 = vadd.f32 %v643, %v905
      %v978 = vadd.f32 %v646, %v908
      %v979 = vadd.f32 %v651, %v913
      %v980 = vadd.f32 %v654, %v916
      %v981 = vadd.f32 %v659, %v921
      %v982 = vadd.f32 %v662, %v924
      %v983 = vadd.f32 %v667, %v929
      %v984 = vadd.f32 %v670, %v932
      %v985 = vadd.f32 %v675, %v937
      %v986 = vadd.f32 %v678, %v940
      %v987 = vadd.f32 %v683, %v945
      %v988 = vadd.f32 %v686, %v948
      %v989 = vadd.f32 %v691, %v953
      %v990 = vadd.f32 %v694, %v956
      %s991 = scalar_lea.vmem %s165, 24
      %v992 = vld [vmem:[%s991] sm:$0xff]
      %v993 = vld [vmem:[%s991 + $0x8] sm:$0xff]
      %v994 = vld [vmem:[%s991 + $0x18] sm:$0xff]
      %v995 = vld [vmem:[%s991 + $0x20] sm:$0xff]
      %v996 = vld [vmem:[%s991 + $0x30] sm:$0xff]
      %v997 = vld [vmem:[%s991 + $0x38] sm:$0xff]
      %v998 = vld [vmem:[%s991 + $0x48] sm:$0xff]
      %v999 = vld [vmem:[%s991 + $0x50] sm:$0xff]
      %v1000 = vld [vmem:[%s991 + $0x60] sm:$0xff]
      %v1001 = vld [vmem:[%s991 + $0x68] sm:$0xff]
      %v1002 = vld [vmem:[%s991 + $0x78] sm:$0xff]
      %v1003 = vld [vmem:[%s991 + $0x80] sm:$0xff]
      %v1004 = vld [vmem:[%s991 + $0x90] sm:$0xff]
      %v1005 = vld [vmem:[%s991 + $0x98] sm:$0xff]
      %v1006 = vld [vmem:[%s991 + $0xa8] sm:$0xff]
      %v1007 = vld [vmem:[%s991 + $0xb0] sm:$0xff]
      %v1008 = vld [vmem:[%s991 + $0xc0] sm:$0xff]
      %v1009 = vld [vmem:[%s991 + $0xc8] sm:$0xff]
      %v1010 = vld [vmem:[%s991 + $0xd8] sm:$0xff]
      %v1011 = vld [vmem:[%s991 + $0xe0] sm:$0xff]
      %v1012 = vld [vmem:[%s991 + $0xf0] sm:$0xff]
      %v1013 = vld [vmem:[%s991 + $0xf8] sm:$0xff]
      %v1014 = vld [vmem:[%s991 + $0x108] sm:$0xff]
      %v1015 = vld [vmem:[%s991 + $0x110] sm:$0xff]
      %v1016 = vld [vmem:[%s991 + $0x120] sm:$0xff]
      %v1017 = vld [vmem:[%s991 + $0x128] sm:$0xff]
      %v1018 = vld [vmem:[%s991 + $0x138] sm:$0xff]
      %v1019 = vld [vmem:[%s991 + $0x140] sm:$0xff]
      %v1020 = vld [vmem:[%s991 + $0x150] sm:$0xff]
      %v1021 = vld [vmem:[%s991 + $0x158] sm:$0xff]
      %v1022 = vld [vmem:[%s991 + $0x168] sm:$0xff]
      %v1023 = vld [vmem:[%s991 + $0x170] sm:$0xff]
      %v1024 = vpack.c.bf16 %v993, %v992
      %v1025 = vpack.c.bf16 %v995, %v994
      %v1026 = vpack.c.bf16 %v997, %v996
      %v1027 = vpack.c.bf16 %v999, %v998
      %v1028 = vpack.c.bf16 %v1001, %v1000
      %v1029 = vpack.c.bf16 %v1003, %v1002
      %v1030 = vpack.c.bf16 %v1005, %v1004
      %v1031 = vpack.c.bf16 %v1007, %v1006
      %v1032 = vpack.c.bf16 %v1009, %v1008
      %v1033 = vpack.c.bf16 %v1011, %v1010
      %v1034 = vpack.c.bf16 %v1013, %v1012
      %v1035 = vpack.c.bf16 %v1015, %v1014
      %v1036 = vpack.c.bf16 %v1017, %v1016
      %v1037 = vpack.c.bf16 %v1019, %v1018
      %v1038 = vpack.c.bf16 %v1021, %v1020
      %v1039 = vpack.c.bf16 %v1023, %v1022
      %s1040 = scalar_lea.vmem %s1, 6
      %v1041 = vld [vmem:[%s1040] sm:$0x3]
      %v1043 = vsel %vm271, %v1024, 0
      %v1046 = vsel %vm271, %v1025, 0
      %v1049 = vsel %vm271, %v1026, 0
      %v1052 = vsel %vm271, %v1027, 0
      %v1055 = vsel %vm271, %v1028, 0
      %v1058 = vsel %vm271, %v1029, 0
      %v1061 = vsel %vm271, %v1030, 0
      %v1064 = vsel %vm271, %v1031, 0
      %v1067 = vsel %vm271, %v1032, 0
      %v1070 = vsel %vm271, %v1033, 0
      %v1073 = vsel %vm271, %v1034, 0
      %v1076 = vsel %vm271, %v1035, 0
      %v1079 = vsel %vm271, %v1036, 0
      %v1082 = vsel %vm271, %v1037, 0
      %v1085 = vsel %vm271, %v1038, 0
      %v1088 = vsel %vm271, %v1039, 0
      %v1091 = vsel %vm320, %v1041, 0
      %1093 = vmatprep.subr.bf16.mxu0 0
      %1094 = vmatpush1.bf16.msra.mxu0 0
      %1095 = vmatprep.subr.bf16.mxu0 0
      %1096 = vmatpush1.bf16.msra.mxu0 0
      %1097 = vmatprep.subr.bf16.mxu0 0
      %1098 = vmatpush1.bf16.msra.mxu0 0
      %1099 = vmatprep.subr.bf16.mxu0 0
      %1100 = vmatpush1.bf16.msra.mxu0 0
      %1101 = vmatprep.subr.bf16.mxu0 0
      %1102 = vmatpush1.bf16.msra.mxu0 0
      %1103 = vmatprep.subr.bf16.mxu0 0
      %1104 = vmatpush1.bf16.msra.mxu0 0
      %1105 = vmatprep.subr.bf16.mxu0 0
      %1106 = vmatpush1.bf16.msra.mxu0 0
      %1107 = vmatprep.subr.bf16.mxu0 0
      %1108 = vmatpush1.bf16.msra.mxu0 %v1091
      %1109 = vmatprep.subr.bf16.mxu0 0
      %1110 = vmatpush2.bf16.msra.mxu0 0
      %1111 = vmatprep.subr.bf16.mxu0 0
      %1112 = vmatpush2.bf16.msra.mxu0 0
      %1113 = vmatprep.subr.bf16.mxu0 0
      %1114 = vmatpush2.bf16.msra.mxu0 0
      %1115 = vmatprep.subr.bf16.mxu0 0
      %1116 = vmatpush2.bf16.msra.mxu0 0
      %1117 = vmatprep.subr.bf16.mxu0 0
      %1118 = vmatpush2.bf16.msra.mxu0 0
      %1119 = vmatprep.subr.bf16.mxu0 0
      %1120 = vmatpush2.bf16.msra.mxu0 0
      %1121 = vmatprep.subr.bf16.mxu0 0
      %1122 = vmatpush2.bf16.msra.mxu0 0
      %1123 = vmatprep.subr.bf16.mxu0 0
      %1124 = vmatpush2.bf16.msra.mxu0 0
      %1125 = vmatprep.mubr.bf16.mxu0 0
      %1126 = vmatmul.mubr.bf16.gmra.mxu0 %v1043
      %v1127 = vpop.f32.mrf.mxu0
      %v1128 = vadd.f32 0.0, %v1127
      %v1129 = vpop.f32.mrf.mxu0
      %v1130 = vpop.f32.mrf.mxu0
      %v1131 = vadd.f32 0.0, %v1130
      %v1132 = vpop.f32.mrf.mxu0
      %1133 = vmatprep.mubr.bf16.mxu0 0
      %1134 = vmatmul.mubr.bf16.gmra.mxu0 %v1046
      %v1135 = vpop.f32.mrf.mxu0
      %v1136 = vadd.f32 0.0, %v1135
      %v1137 = vpop.f32.mrf.mxu0
      %v1138 = vpop.f32.mrf.mxu0
      %v1139 = vadd.f32 0.0, %v1138
      %v1140 = vpop.f32.mrf.mxu0
      %1141 = vmatprep.mubr.bf16.mxu0 0
      %1142 = vmatmul.mubr.bf16.gmra.mxu0 %v1049
      %v1143 = vpop.f32.mrf.mxu0
      %v1144 = vadd.f32 0.0, %v1143
      %v1145 = vpop.f32.mrf.mxu0
      %v1146 = vpop.f32.mrf.mxu0
      %v1147 = vadd.f32 0.0, %v1146
      %v1148 = vpop.f32.mrf.mxu0
      %1149 = vmatprep.mubr.bf16.mxu0 0
      %1150 = vmatmul.mubr.bf16.gmra.mxu0 %v1052
      %v1151 = vpop.f32.mrf.mxu0
      %v1152 = vadd.f32 0.0, %v1151
      %v1153 = vpop.f32.mrf.mxu0
      %v1154 = vpop.f32.mrf.mxu0
      %v1155 = vadd.f32 0.0, %v1154
      %v1156 = vpop.f32.mrf.mxu0
      %1157 = vmatprep.mubr.bf16.mxu0 0
      %1158 = vmatmul.mubr.bf16.gmra.mxu0 %v1055
      %v1159 = vpop.f32.mrf.mxu0
      %v1160 = vadd.f32 0.0, %v1159
      %v1161 = vpop.f32.mrf.mxu0
      %v1162 = vpop.f32.mrf.mxu0
      %v1163 = vadd.f32 0.0, %v1162
      %v1164 = vpop.f32.mrf.mxu0
      %1165 = vmatprep.mubr.bf16.mxu0 0
      %1166 = vmatmul.mubr.bf16.gmra.mxu0 %v1058
      %v1167 = vpop.f32.mrf.mxu0
      %v1168 = vadd.f32 0.0, %v1167
      %v1169 = vpop.f32.mrf.mxu0
      %v1170 = vpop.f32.mrf.mxu0
      %v1171 = vadd.f32 0.0, %v1170
      %v1172 = vpop.f32.mrf.mxu0
      %1173 = vmatprep.mubr.bf16.mxu0 0
      %1174 = vmatmul.mubr.bf16.gmra.mxu0 %v1061
      %v1175 = vpop.f32.mrf.mxu0
      %v1176 = vadd.f32 0.0, %v1175
      %v1177 = vpop.f32.mrf.mxu0
      %v1178 = vpop.f32.mrf.mxu0
      %v1179 = vadd.f32 0.0, %v1178
      %v1180 = vpop.f32.mrf.mxu0
      %1181 = vmatprep.mubr.bf16.mxu0 0
      %1182 = vmatmul.mubr.bf16.gmra.mxu0 %v1064
      %v1183 = vpop.f32.mrf.mxu0
      %v1184 = vadd.f32 0.0, %v1183
      %v1185 = vpop.f32.mrf.mxu0
      %v1186 = vpop.f32.mrf.mxu0
      %v1187 = vadd.f32 0.0, %v1186
      %v1188 = vpop.f32.mrf.mxu0
      %1189 = vmatprep.mubr.bf16.mxu0 0
      %1190 = vmatmul.mubr.bf16.gmra.mxu0 %v1067
      %v1191 = vpop.f32.mrf.mxu0
      %v1192 = vadd.f32 0.0, %v1191
      %v1193 = vpop.f32.mrf.mxu0
      %v1194 = vpop.f32.mrf.mxu0
      %v1195 = vadd.f32 0.0, %v1194
      %v1196 = vpop.f32.mrf.mxu0
      %1197 = vmatprep.mubr.bf16.mxu0 0
      %1198 = vmatmul.mubr.bf16.gmra.mxu0 %v1070
      %v1199 = vpop.f32.mrf.mxu0
      %v1200 = vadd.f32 0.0, %v1199
      %v1201 = vpop.f32.mrf.mxu0
      %v1202 = vpop.f32.mrf.mxu0
      %v1203 = vadd.f32 0.0, %v1202
      %v1204 = vpop.f32.mrf.mxu0
      %1205 = vmatprep.mubr.bf16.mxu0 0
      %1206 = vmatmul.mubr.bf16.gmra.mxu0 %v1073
      %v1207 = vpop.f32.mrf.mxu0
      %v1208 = vadd.f32 0.0, %v1207
      %v1209 = vpop.f32.mrf.mxu0
      %v1210 = vpop.f32.mrf.mxu0
      %v1211 = vadd.f32 0.0, %v1210
      %v1212 = vpop.f32.mrf.mxu0
      %1213 = vmatprep.mubr.bf16.mxu0 0
      %1214 = vmatmul.mubr.bf16.gmra.mxu0 %v1076
      %v1215 = vpop.f32.mrf.mxu0
      %v1216 = vadd.f32 0.0, %v1215
      %v1217 = vpop.f32.mrf.mxu0
      %v1218 = vpop.f32.mrf.mxu0
      %v1219 = vadd.f32 0.0, %v1218
      %v1220 = vpop.f32.mrf.mxu0
      %1221 = vmatprep.mubr.bf16.mxu0 0
      %1222 = vmatmul.mubr.bf16.gmra.mxu0 %v1079
      %v1223 = vpop.f32.mrf.mxu0
      %v1224 = vadd.f32 0.0, %v1223
      %v1225 = vpop.f32.mrf.mxu0
      %v1226 = vpop.f32.mrf.mxu0
      %v1227 = vadd.f32 0.0, %v1226
      %v1228 = vpop.f32.mrf.mxu0
      %1229 = vmatprep.mubr.bf16.mxu0 0
      %1230 = vmatmul.mubr.bf16.gmra.mxu0 %v1082
      %v1231 = vpop.f32.mrf.mxu0
      %v1232 = vadd.f32 0.0, %v1231
      %v1233 = vpop.f32.mrf.mxu0
      %v1234 = vpop.f32.mrf.mxu0
      %v1235 = vadd.f32 0.0, %v1234
      %v1236 = vpop.f32.mrf.mxu0
      %1237 = vmatprep.mubr.bf16.mxu0 0
      %1238 = vmatmul.mubr.bf16.gmra.mxu0 %v1085
      %v1239 = vpop.f32.mrf.mxu0
      %v1240 = vadd.f32 0.0, %v1239
      %v1241 = vpop.f32.mrf.mxu0
      %v1242 = vpop.f32.mrf.mxu0
      %v1243 = vadd.f32 0.0, %v1242
      %v1244 = vpop.f32.mrf.mxu0
      %1245 = vmatprep.mubr.bf16.mxu0 0
      %1246 = vmatmul.mubr.bf16.gmra.mxu0 %v1088
      %v1247 = vpop.f32.mrf.mxu0
      %v1248 = vadd.f32 0.0, %v1247
      %v1249 = vpop.f32.mrf.mxu0
      %v1250 = vpop.f32.mrf.mxu0
      %v1251 = vadd.f32 0.0, %v1250
      %v1252 = vpop.f32.mrf.mxu0
      %1253 = vdwg.mxu0
      %v1254 = vadd.f32 %v959, %v1128
      %v1255 = vadd.f32 %v960, %v1131
      %v1256 = vadd.f32 %v961, %v1136
      %v1257 = vadd.f32 %v962, %v1139
      %v1258 = vadd.f32 %v963, %v1144
      %v1259 = vadd.f32 %v964, %v1147
      %v1260 = vadd.f32 %v965, %v1152
      %v1261 = vadd.f32 %v966, %v1155
      %v1262 = vadd.f32 %v967, %v1160
      %v1263 = vadd.f32 %v968, %v1163
      %v1264 = vadd.f32 %v969, %v1168
      %v1265 = vadd.f32 %v970, %v1171
      %v1266 = vadd.f32 %v971, %v1176
      %v1267 = vadd.f32 %v972, %v1179
      %v1268 = vadd.f32 %v973, %v1184
      %v1269 = vadd.f32 %v974, %v1187
      %v1270 = vadd.f32 %v975, %v1192
      %v1271 = vadd.f32 %v976, %v1195
      %v1272 = vadd.f32 %v977, %v1200
      %v1273 = vadd.f32 %v978, %v1203
      %v1274 = vadd.f32 %v979, %v1208
      %v1275 = vadd.f32 %v980, %v1211
      %v1276 = vadd.f32 %v981, %v1216
      %v1277 = vadd.f32 %v982, %v1219
      %v1278 = vadd.f32 %v983, %v1224
      %v1279 = vadd.f32 %v984, %v1227
      %v1280 = vadd.f32 %v985, %v1232
      %v1281 = vadd.f32 %v986, %v1235
      %v1282 = vadd.f32 %v987, %v1240
      %v1283 = vadd.f32 %v988, %v1243
      %v1284 = vadd.f32 %v989, %v1248
      %v1285 = vadd.f32 %v990, %v1251
      %v1286 = vld [vmem:[%s991 + $0x1] sm:$0xff]
      %v1287 = vld [vmem:[%s991 + $0x9] sm:$0xff]
      %v1288 = vld [vmem:[%s991 + $0x19] sm:$0xff]
      %v1289 = vld [vmem:[%s991 + $0x21] sm:$0xff]
      %v1290 = vld [vmem:[%s991 + $0x31] sm:$0xff]
      %v1291 = vld [vmem:[%s991 + $0x39] sm:$0xff]
      %v1292 = vld [vmem:[%s991 + $0x49] sm:$0xff]
      %v1293 = vld [vmem:[%s991 + $0x51] sm:$0xff]
      %v1294 = vld [vmem:[%s991 + $0x61] sm:$0xff]
      %v1295 = vld [vmem:[%s991 + $0x69] sm:$0xff]
      %v1296 = vld [vmem:[%s991 + $0x79] sm:$0xff]
      %v1297 = vld [vmem:[%s991 + $0x81] sm:$0xff]
      %v1298 = vld [vmem:[%s991 + $0x91] sm:$0xff]
      %v1299 = vld [vmem:[%s991 + $0x99] sm:$0xff]
      %v1300 = vld [vmem:[%s991 + $0xa9] sm:$0xff]
      %v1301 = vld [vmem:[%s991 + $0xb1] sm:$0xff]
      %v1302 = vld [vmem:[%s991 + $0xc1] sm:$0xff]
      %v1303 = vld [vmem:[%s991 + $0xc9] sm:$0xff]
      %v1304 = vld [vmem:[%s991 + $0xd9] sm:$0xff]
      %v1305 = vld [vmem:[%s991 + $0xe1] sm:$0xff]
      %v1306 = vld [vmem:[%s991 + $0xf1] sm:$0xff]
      %v1307 = vld [vmem:[%s991 + $0xf9] sm:$0xff]
      %v1308 = vld [vmem:[%s991 + $0x109] sm:$0xff]
      %v1309 = vld [vmem:[%s991 + $0x111] sm:$0xff]
      %v1310 = vld [vmem:[%s991 + $0x121] sm:$0xff]
      %v1311 = vld [vmem:[%s991 + $0x129] sm:$0xff]
      %v1312 = vld [vmem:[%s991 + $0x139] sm:$0xff]
      %v1313 = vld [vmem:[%s991 + $0x141] sm:$0xff]
      %v1314 = vld [vmem:[%s991 + $0x151] sm:$0xff]
      %v1315 = vld [vmem:[%s991 + $0x159] sm:$0xff]
      %v1316 = vld [vmem:[%s991 + $0x169] sm:$0xff]
      %v1317 = vld [vmem:[%s991 + $0x171] sm:$0xff]
      %v1318 = vpack.c.bf16 %v1287, %v1286
      %v1319 = vpack.c.bf16 %v1289, %v1288
      %v1320 = vpack.c.bf16 %v1291, %v1290
      %v1321 = vpack.c.bf16 %v1293, %v1292
      %v1322 = vpack.c.bf16 %v1295, %v1294
      %v1323 = vpack.c.bf16 %v1297, %v1296
      %v1324 = vpack.c.bf16 %v1299, %v1298
      %v1325 = vpack.c.bf16 %v1301, %v1300
      %v1326 = vpack.c.bf16 %v1303, %v1302
      %v1327 = vpack.c.bf16 %v1305, %v1304
      %v1328 = vpack.c.bf16 %v1307, %v1306
      %v1329 = vpack.c.bf16 %v1309, %v1308
      %v1330 = vpack.c.bf16 %v1311, %v1310
      %v1331 = vpack.c.bf16 %v1313, %v1312
      %v1332 = vpack.c.bf16 %v1315, %v1314
      %v1333 = vpack.c.bf16 %v1317, %v1316
      %s1334 = scalar_lea.vmem %s1, 8
      %v1335 = vld [vmem:[%s1334] sm:$0x3]
      %v1337 = vsel %vm271, %v1318, 0
      %v1340 = vsel %vm271, %v1319, 0
      %v1343 = vsel %vm271, %v1320, 0
      %v1346 = vsel %vm271, %v1321, 0
      %v1349 = vsel %vm271, %v1322, 0
      %v1352 = vsel %vm271, %v1323, 0
      %v1355 = vsel %vm271, %v1324, 0
      %v1358 = vsel %vm271, %v1325, 0
      %v1361 = vsel %vm271, %v1326, 0
      %v1364 = vsel %vm271, %v1327, 0
      %v1367 = vsel %vm271, %v1328, 0
      %v1370 = vsel %vm271, %v1329, 0
      %v1373 = vsel %vm271, %v1330, 0
      %v1376 = vsel %vm271, %v1331, 0
      %v1379 = vsel %vm271, %v1332, 0
      %v1382 = vsel %vm271, %v1333, 0
      %v1385 = vsel %vm320, %v1335, 0
      %1387 = vmatprep.subr.bf16.mxu0 0
      %1388 = vmatpush1.bf16.msra.mxu0 0
      %1389 = vmatprep.subr.bf16.mxu0 0
      %1390 = vmatpush1.bf16.msra.mxu0 0
      %1391 = vmatprep.subr.bf16.mxu0 0
      %1392 = vmatpush1.bf16.msra.mxu0 0
      %1393 = vmatprep.subr.bf16.mxu0 0
      %1394 = vmatpush1.bf16.msra.mxu0 0
      %1395 = vmatprep.subr.bf16.mxu0 0
      %1396 = vmatpush1.bf16.msra.mxu0 0
      %1397 = vmatprep.subr.bf16.mxu0 0
      %1398 = vmatpush1.bf16.msra.mxu0 0
      %1399 = vmatprep.subr.bf16.mxu0 0
      %1400 = vmatpush1.bf16.msra.mxu0 0
      %1401 = vmatprep.subr.bf16.mxu0 0
      %1402 = vmatpush1.bf16.msra.mxu0 %v1385
      %1403 = vmatprep.subr.bf16.mxu0 0
      %1404 = vmatpush2.bf16.msra.mxu0 0
      %1405 = vmatprep.subr.bf16.mxu0 0
      %1406 = vmatpush2.bf16.msra.mxu0 0
      %1407 = vmatprep.subr.bf16.mxu0 0
      %1408 = vmatpush2.bf16.msra.mxu0 0
      %1409 = vmatprep.subr.bf16.mxu0 0
      %1410 = vmatpush2.bf16.msra.mxu0 0
      %1411 = vmatprep.subr.bf16.mxu0 0
      %1412 = vmatpush2.bf16.msra.mxu0 0
      %1413 = vmatprep.subr.bf16.mxu0 0
      %1414 = vmatpush2.bf16.msra.mxu0 0
      %1415 = vmatprep.subr.bf16.mxu0 0
      %1416 = vmatpush2.bf16.msra.mxu0 0
      %1417 = vmatprep.subr.bf16.mxu0 0
      %1418 = vmatpush2.bf16.msra.mxu0 0
      %1419 = vmatprep.mubr.bf16.mxu0 0
      %1420 = vmatmul.mubr.bf16.gmra.mxu0 %v1337
      %v1421 = vpop.f32.mrf.mxu0
      %v1422 = vadd.f32 0.0, %v1421
      %v1423 = vpop.f32.mrf.mxu0
      %v1424 = vpop.f32.mrf.mxu0
      %v1425 = vadd.f32 0.0, %v1424
      %v1426 = vpop.f32.mrf.mxu0
      %1427 = vmatprep.mubr.bf16.mxu0 0
      %1428 = vmatmul.mubr.bf16.gmra.mxu0 %v1340
      %v1429 = vpop.f32.mrf.mxu0
      %v1430 = vadd.f32 0.0, %v1429
      %v1431 = vpop.f32.mrf.mxu0
      %v1432 = vpop.f32.mrf.mxu0
      %v1433 = vadd.f32 0.0, %v1432
      %v1434 = vpop.f32.mrf.mxu0
      %1435 = vmatprep.mubr.bf16.mxu0 0
      %1436 = vmatmul.mubr.bf16.gmra.mxu0 %v1343
      %v1437 = vpop.f32.mrf.mxu0
      %v1438 = vadd.f32 0.0, %v1437
      %v1439 = vpop.f32.mrf.mxu0
      %v1440 = vpop.f32.mrf.mxu0
      %v1441 = vadd.f32 0.0, %v1440
      %v1442 = vpop.f32.mrf.mxu0
      %1443 = vmatprep.mubr.bf16.mxu0 0
      %1444 = vmatmul.mubr.bf16.gmra.mxu0 %v1346
      %v1445 = vpop.f32.mrf.mxu0
      %v1446 = vadd.f32 0.0, %v1445
      %v1447 = vpop.f32.mrf.mxu0
      %v1448 = vpop.f32.mrf.mxu0
      %v1449 = vadd.f32 0.0, %v1448
      %v1450 = vpop.f32.mrf.mxu0
      %1451 = vmatprep.mubr.bf16.mxu0 0
      %1452 = vmatmul.mubr.bf16.gmra.mxu0 %v1349
      %v1453 = vpop.f32.mrf.mxu0
      %v1454 = vadd.f32 0.0, %v1453
      %v1455 = vpop.f32.mrf.mxu0
      %v1456 = vpop.f32.mrf.mxu0
      %v1457 = vadd.f32 0.0, %v1456
      %v1458 = vpop.f32.mrf.mxu0
      %1459 = vmatprep.mubr.bf16.mxu0 0
      %1460 = vmatmul.mubr.bf16.gmra.mxu0 %v1352
      %v1461 = vpop.f32.mrf.mxu0
      %v1462 = vadd.f32 0.0, %v1461
      %v1463 = vpop.f32.mrf.mxu0
      %v1464 = vpop.f32.mrf.mxu0
      %v1465 = vadd.f32 0.0, %v1464
      %v1466 = vpop.f32.mrf.mxu0
      %1467 = vmatprep.mubr.bf16.mxu0 0
      %1468 = vmatmul.mubr.bf16.gmra.mxu0 %v1355
      %v1469 = vpop.f32.mrf.mxu0
      %v1470 = vadd.f32 0.0, %v1469
      %v1471 = vpop.f32.mrf.mxu0
      %v1472 = vpop.f32.mrf.mxu0
      %v1473 = vadd.f32 0.0, %v1472
      %v1474 = vpop.f32.mrf.mxu0
      %1475 = vmatprep.mubr.bf16.mxu0 0
      %1476 = vmatmul.mubr.bf16.gmra.mxu0 %v1358
      %v1477 = vpop.f32.mrf.mxu0
      %v1478 = vadd.f32 0.0, %v1477
      %v1479 = vpop.f32.mrf.mxu0
      %v1480 = vpop.f32.mrf.mxu0
      %v1481 = vadd.f32 0.0, %v1480
      %v1482 = vpop.f32.mrf.mxu0
      %1483 = vmatprep.mubr.bf16.mxu0 0
      %1484 = vmatmul.mubr.bf16.gmra.mxu0 %v1361
      %v1485 = vpop.f32.mrf.mxu0
      %v1486 = vadd.f32 0.0, %v1485
      %v1487 = vpop.f32.mrf.mxu0
      %v1488 = vpop.f32.mrf.mxu0
      %v1489 = vadd.f32 0.0, %v1488
      %v1490 = vpop.f32.mrf.mxu0
      %1491 = vmatprep.mubr.bf16.mxu0 0
      %1492 = vmatmul.mubr.bf16.gmra.mxu0 %v1364
      %v1493 = vpop.f32.mrf.mxu0
      %v1494 = vadd.f32 0.0, %v1493
      %v1495 = vpop.f32.mrf.mxu0
      %v1496 = vpop.f32.mrf.mxu0
      %v1497 = vadd.f32 0.0, %v1496
      %v1498 = vpop.f32.mrf.mxu0
      %1499 = vmatprep.mubr.bf16.mxu0 0
      %1500 = vmatmul.mubr.bf16.gmra.mxu0 %v1367
      %v1501 = vpop.f32.mrf.mxu0
      %v1502 = vadd.f32 0.0, %v1501
      %v1503 = vpop.f32.mrf.mxu0
      %v1504 = vpop.f32.mrf.mxu0
      %v1505 = vadd.f32 0.0, %v1504
      %v1506 = vpop.f32.mrf.mxu0
      %1507 = vmatprep.mubr.bf16.mxu0 0
      %1508 = vmatmul.mubr.bf16.gmra.mxu0 %v1370
      %v1509 = vpop.f32.mrf.mxu0
      %v1510 = vadd.f32 0.0, %v1509
      %v1511 = vpop.f32.mrf.mxu0
      %v1512 = vpop.f32.mrf.mxu0
      %v1513 = vadd.f32 0.0, %v1512
      %v1514 = vpop.f32.mrf.mxu0
      %1515 = vmatprep.mubr.bf16.mxu0 0
      %1516 = vmatmul.mubr.bf16.gmra.mxu0 %v1373
      %v1517 = vpop.f32.mrf.mxu0
      %v1518 = vadd.f32 0.0, %v1517
      %v1519 = vpop.f32.mrf.mxu0
      %v1520 = vpop.f32.mrf.mxu0
      %v1521 = vadd.f32 0.0, %v1520
      %v1522 = vpop.f32.mrf.mxu0
      %1523 = vmatprep.mubr.bf16.mxu0 0
      %1524 = vmatmul.mubr.bf16.gmra.mxu0 %v1376
      %v1525 = vpop.f32.mrf.mxu0
      %v1526 = vadd.f32 0.0, %v1525
      %v1527 = vpop.f32.mrf.mxu0
      %v1528 = vpop.f32.mrf.mxu0
      %v1529 = vadd.f32 0.0, %v1528
      %v1530 = vpop.f32.mrf.mxu0
      %1531 = vmatprep.mubr.bf16.mxu0 0
      %1532 = vmatmul.mubr.bf16.gmra.mxu0 %v1379
      %v1533 = vpop.f32.mrf.mxu0
      %v1534 = vadd.f32 0.0, %v1533
      %v1535 = vpop.f32.mrf.mxu0
      %v1536 = vpop.f32.mrf.mxu0
      %v1537 = vadd.f32 0.0, %v1536
      %v1538 = vpop.f32.mrf.mxu0
      %1539 = vmatprep.mubr.bf16.mxu0 0
      %1540 = vmatmul.mubr.bf16.gmra.mxu0 %v1382
      %v1541 = vpop.f32.mrf.mxu0
      %v1542 = vadd.f32 0.0, %v1541
      %v1543 = vpop.f32.mrf.mxu0
      %v1544 = vpop.f32.mrf.mxu0
      %v1545 = vadd.f32 0.0, %v1544
      %v1546 = vpop.f32.mrf.mxu0
      %1547 = vdwg.mxu0
      %v1548 = vadd.f32 %v1254, %v1422
      %v1549 = vadd.f32 %v1255, %v1425
      %v1550 = vadd.f32 %v1256, %v1430
      %v1551 = vadd.f32 %v1257, %v1433
      %v1552 = vadd.f32 %v1258, %v1438
      %v1553 = vadd.f32 %v1259, %v1441
      %v1554 = vadd.f32 %v1260, %v1446
      %v1555 = vadd.f32 %v1261, %v1449
      %v1556 = vadd.f32 %v1262, %v1454
      %v1557 = vadd.f32 %v1263, %v1457
      %v1558 = vadd.f32 %v1264, %v1462
      %v1559 = vadd.f32 %v1265, %v1465
      %v1560 = vadd.f32 %v1266, %v1470
      %v1561 = vadd.f32 %v1267, %v1473
      %v1562 = vadd.f32 %v1268, %v1478
      %v1563 = vadd.f32 %v1269, %v1481
      %v1564 = vadd.f32 %v1270, %v1486
      %v1565 = vadd.f32 %v1271, %v1489
      %v1566 = vadd.f32 %v1272, %v1494
      %v1567 = vadd.f32 %v1273, %v1497
      %v1568 = vadd.f32 %v1274, %v1502
      %v1569 = vadd.f32 %v1275, %v1505
      %v1570 = vadd.f32 %v1276, %v1510
      %v1571 = vadd.f32 %v1277, %v1513
      %v1572 = vadd.f32 %v1278, %v1518
      %v1573 = vadd.f32 %v1279, %v1521
      %v1574 = vadd.f32 %v1280, %v1526
      %v1575 = vadd.f32 %v1281, %v1529
      %v1576 = vadd.f32 %v1282, %v1534
      %v1577 = vadd.f32 %v1283, %v1537
      %v1578 = vadd.f32 %v1284, %v1542
      %v1579 = vadd.f32 %v1285, %v1545
      %v1580 = vld [vmem:[%s991 + $0x2] sm:$0xff]
      %v1581 = vld [vmem:[%s991 + $0xa] sm:$0xff]
      %v1582 = vld [vmem:[%s991 + $0x1a] sm:$0xff]
      %v1583 = vld [vmem:[%s991 + $0x22] sm:$0xff]
      %v1584 = vld [vmem:[%s991 + $0x32] sm:$0xff]
      %v1585 = vld [vmem:[%s991 + $0x3a] sm:$0xff]
      %v1586 = vld [vmem:[%s991 + $0x4a] sm:$0xff]
      %v1587 = vld [vmem:[%s991 + $0x52] sm:$0xff]
      %v1588 = vld [vmem:[%s991 + $0x62] sm:$0xff]
      %v1589 = vld [vmem:[%s991 + $0x6a] sm:$0xff]
      %v1590 = vld [vmem:[%s991 + $0x7a] sm:$0xff]
      %v1591 = vld [vmem:[%s991 + $0x82] sm:$0xff]
      %v1592 = vld [vmem:[%s991 + $0x92] sm:$0xff]
      %v1593 = vld [vmem:[%s991 + $0x9a] sm:$0xff]
      %v1594 = vld [vmem:[%s991 + $0xaa] sm:$0xff]
      %v1595 = vld [vmem:[%s991 + $0xb2] sm:$0xff]
      %v1596 = vld [vmem:[%s991 + $0xc2] sm:$0xff]
      %v1597 = vld [vmem:[%s991 + $0xca] sm:$0xff]
      %v1598 = vld [vmem:[%s991 + $0xda] sm:$0xff]
      %v1599 = vld [vmem:[%s991 + $0xe2] sm:$0xff]
      %v1600 = vld [vmem:[%s991 + $0xf2] sm:$0xff]
      %v1601 = vld [vmem:[%s991 + $0xfa] sm:$0xff]
      %v1602 = vld [vmem:[%s991 + $0x10a] sm:$0xff]
      %v1603 = vld [vmem:[%s991 + $0x112] sm:$0xff]
      %v1604 = vld [vmem:[%s991 + $0x122] sm:$0xff]
      %v1605 = vld [vmem:[%s991 + $0x12a] sm:$0xff]
      %v1606 = vld [vmem:[%s991 + $0x13a] sm:$0xff]
      %v1607 = vld [vmem:[%s991 + $0x142] sm:$0xff]
      %v1608 = vld [vmem:[%s991 + $0x152] sm:$0xff]
      %v1609 = vld [vmem:[%s991 + $0x15a] sm:$0xff]
      %v1610 = vld [vmem:[%s991 + $0x16a] sm:$0xff]
      %v1611 = vld [vmem:[%s991 + $0x172] sm:$0xff]
      %v1612 = vpack.c.bf16 %v1581, %v1580
      %v1613 = vpack.c.bf16 %v1583, %v1582
      %v1614 = vpack.c.bf16 %v1585, %v1584
      %v1615 = vpack.c.bf16 %v1587, %v1586
      %v1616 = vpack.c.bf16 %v1589, %v1588
      %v1617 = vpack.c.bf16 %v1591, %v1590
      %v1618 = vpack.c.bf16 %v1593, %v1592
      %v1619 = vpack.c.bf16 %v1595, %v1594
      %v1620 = vpack.c.bf16 %v1597, %v1596
      %v1621 = vpack.c.bf16 %v1599, %v1598
      %v1622 = vpack.c.bf16 %v1601, %v1600
      %v1623 = vpack.c.bf16 %v1603, %v1602
      %v1624 = vpack.c.bf16 %v1605, %v1604
      %v1625 = vpack.c.bf16 %v1607, %v1606
      %v1626 = vpack.c.bf16 %v1609, %v1608
      %v1627 = vpack.c.bf16 %v1611, %v1610
      %s1628 = scalar_lea.vmem %s1, 10
      %v1629 = vld [vmem:[%s1628] sm:$0x3]
      %v1631 = vsel %vm271, %v1612, 0
      %v1634 = vsel %vm271, %v1613, 0
      %v1637 = vsel %vm271, %v1614, 0
      %v1640 = vsel %vm271, %v1615, 0
      %v1643 = vsel %vm271, %v1616, 0
      %v1646 = vsel %vm271, %v1617, 0
      %v1649 = vsel %vm271, %v1618, 0
      %v1652 = vsel %vm271, %v1619, 0
      %v1655 = vsel %vm271, %v1620, 0
      %v1658 = vsel %vm271, %v1621, 0
      %v1661 = vsel %vm271, %v1622, 0
      %v1664 = vsel %vm271, %v1623, 0
      %v1667 = vsel %vm271, %v1624, 0
      %v1670 = vsel %vm271, %v1625, 0
      %v1673 = vsel %vm271, %v1626, 0
      %v1676 = vsel %vm271, %v1627, 0
      %v1679 = vsel %vm320, %v1629, 0
      %1681 = vmatprep.subr.bf16.mxu0 0
      %1682 = vmatpush1.bf16.msra.mxu0 0
      %1683 = vmatprep.subr.bf16.mxu0 0
      %1684 = vmatpush1.bf16.msra.mxu0 0
      %1685 = vmatprep.subr.bf16.mxu0 0
      %1686 = vmatpush1.bf16.msra.mxu0 0
      %1687 = vmatprep.subr.bf16.mxu0 0
      %1688 = vmatpush1.bf16.msra.mxu0 0
      %1689 = vmatprep.subr.bf16.mxu0 0
      %1690 = vmatpush1.bf16.msra.mxu0 0
      %1691 = vmatprep.subr.bf16.mxu0 0
      %1692 = vmatpush1.bf16.msra.mxu0 0
      %1693 = vmatprep.subr.bf16.mxu0 0
      %1694 = vmatpush1.bf16.msra.mxu0 0
      %1695 = vmatprep.subr.bf16.mxu0 0
      %1696 = vmatpush1.bf16.msra.mxu0 %v1679
      %1697 = vmatprep.subr.bf16.mxu0 0
      %1698 = vmatpush2.bf16.msra.mxu0 0
      %1699 = vmatprep.subr.bf16.mxu0 0
      %1700 = vmatpush2.bf16.msra.mxu0 0
      %1701 = vmatprep.subr.bf16.mxu0 0
      %1702 = vmatpush2.bf16.msra.mxu0 0
      %1703 = vmatprep.subr.bf16.mxu0 0
      %1704 = vmatpush2.bf16.msra.mxu0 0
      %1705 = vmatprep.subr.bf16.mxu0 0
      %1706 = vmatpush2.bf16.msra.mxu0 0
      %1707 = vmatprep.subr.bf16.mxu0 0
      %1708 = vmatpush2.bf16.msra.mxu0 0
      %1709 = vmatprep.subr.bf16.mxu0 0
      %1710 = vmatpush2.bf16.msra.mxu0 0
      %1711 = vmatprep.subr.bf16.mxu0 0
      %1712 = vmatpush2.bf16.msra.mxu0 0
      %1713 = vmatprep.mubr.bf16.mxu0 0
      %1714 = vmatmul.mubr.bf16.gmra.mxu0 %v1631
      %v1715 = vpop.f32.mrf.mxu0
      %v1716 = vadd.f32 0.0, %v1715
      %v1717 = vpop.f32.mrf.mxu0
      %v1718 = vpop.f32.mrf.mxu0
      %v1719 = vadd.f32 0.0, %v1718
      %v1720 = vpop.f32.mrf.mxu0
      %1721 = vmatprep.mubr.bf16.mxu0 0
      %1722 = vmatmul.mubr.bf16.gmra.mxu0 %v1634
      %v1723 = vpop.f32.mrf.mxu0
      %v1724 = vadd.f32 0.0, %v1723
      %v1725 = vpop.f32.mrf.mxu0
      %v1726 = vpop.f32.mrf.mxu0
      %v1727 = vadd.f32 0.0, %v1726
      %v1728 = vpop.f32.mrf.mxu0
      %1729 = vmatprep.mubr.bf16.mxu0 0
      %1730 = vmatmul.mubr.bf16.gmra.mxu0 %v1637
      %v1731 = vpop.f32.mrf.mxu0
      %v1732 = vadd.f32 0.0, %v1731
      %v1733 = vpop.f32.mrf.mxu0
      %v1734 = vpop.f32.mrf.mxu0
      %v1735 = vadd.f32 0.0, %v1734
      %v1736 = vpop.f32.mrf.mxu0
      %1737 = vmatprep.mubr.bf16.mxu0 0
      %1738 = vmatmul.mubr.bf16.gmra.mxu0 %v1640
      %v1739 = vpop.f32.mrf.mxu0
      %v1740 = vadd.f32 0.0, %v1739
      %v1741 = vpop.f32.mrf.mxu0
      %v1742 = vpop.f32.mrf.mxu0
      %v1743 = vadd.f32 0.0, %v1742
      %v1744 = vpop.f32.mrf.mxu0
      %1745 = vmatprep.mubr.bf16.mxu0 0
      %1746 = vmatmul.mubr.bf16.gmra.mxu0 %v1643
      %v1747 = vpop.f32.mrf.mxu0
      %v1748 = vadd.f32 0.0, %v1747
      %v1749 = vpop.f32.mrf.mxu0
      %v1750 = vpop.f32.mrf.mxu0
      %v1751 = vadd.f32 0.0, %v1750
      %v1752 = vpop.f32.mrf.mxu0
      %1753 = vmatprep.mubr.bf16.mxu0 0
      %1754 = vmatmul.mubr.bf16.gmra.mxu0 %v1646
      %v1755 = vpop.f32.mrf.mxu0
      %v1756 = vadd.f32 0.0, %v1755
      %v1757 = vpop.f32.mrf.mxu0
      %v1758 = vpop.f32.mrf.mxu0
      %v1759 = vadd.f32 0.0, %v1758
      %v1760 = vpop.f32.mrf.mxu0
      %1761 = vmatprep.mubr.bf16.mxu0 0
      %1762 = vmatmul.mubr.bf16.gmra.mxu0 %v1649
      %v1763 = vpop.f32.mrf.mxu0
      %v1764 = vadd.f32 0.0, %v1763
      %v1765 = vpop.f32.mrf.mxu0
      %v1766 = vpop.f32.mrf.mxu0
      %v1767 = vadd.f32 0.0, %v1766
      %v1768 = vpop.f32.mrf.mxu0
      %1769 = vmatprep.mubr.bf16.mxu0 0
      %1770 = vmatmul.mubr.bf16.gmra.mxu0 %v1652
      %v1771 = vpop.f32.mrf.mxu0
      %v1772 = vadd.f32 0.0, %v1771
      %v1773 = vpop.f32.mrf.mxu0
      %v1774 = vpop.f32.mrf.mxu0
      %v1775 = vadd.f32 0.0, %v1774
      %v1776 = vpop.f32.mrf.mxu0
      %1777 = vmatprep.mubr.bf16.mxu0 0
      %1778 = vmatmul.mubr.bf16.gmra.mxu0 %v1655
      %v1779 = vpop.f32.mrf.mxu0
      %v1780 = vadd.f32 0.0, %v1779
      %v1781 = vpop.f32.mrf.mxu0
      %v1782 = vpop.f32.mrf.mxu0
      %v1783 = vadd.f32 0.0, %v1782
      %v1784 = vpop.f32.mrf.mxu0
      %1785 = vmatprep.mubr.bf16.mxu0 0
      %1786 = vmatmul.mubr.bf16.gmra.mxu0 %v1658
      %v1787 = vpop.f32.mrf.mxu0
      %v1788 = vadd.f32 0.0, %v1787
      %v1789 = vpop.f32.mrf.mxu0
      %v1790 = vpop.f32.mrf.mxu0
      %v1791 = vadd.f32 0.0, %v1790
      %v1792 = vpop.f32.mrf.mxu0
      %1793 = vmatprep.mubr.bf16.mxu0 0
      %1794 = vmatmul.mubr.bf16.gmra.mxu0 %v1661
      %v1795 = vpop.f32.mrf.mxu0
      %v1796 = vadd.f32 0.0, %v1795
      %v1797 = vpop.f32.mrf.mxu0
      %v1798 = vpop.f32.mrf.mxu0
      %v1799 = vadd.f32 0.0, %v1798
      %v1800 = vpop.f32.mrf.mxu0
      %1801 = vmatprep.mubr.bf16.mxu0 0
      %1802 = vmatmul.mubr.bf16.gmra.mxu0 %v1664
      %v1803 = vpop.f32.mrf.mxu0
      %v1804 = vadd.f32 0.0, %v1803
      %v1805 = vpop.f32.mrf.mxu0
      %v1806 = vpop.f32.mrf.mxu0
      %v1807 = vadd.f32 0.0, %v1806
      %v1808 = vpop.f32.mrf.mxu0
      %1809 = vmatprep.mubr.bf16.mxu0 0
      %1810 = vmatmul.mubr.bf16.gmra.mxu0 %v1667
      %v1811 = vpop.f32.mrf.mxu0
      %v1812 = vadd.f32 0.0, %v1811
      %v1813 = vpop.f32.mrf.mxu0
      %v1814 = vpop.f32.mrf.mxu0
      %v1815 = vadd.f32 0.0, %v1814
      %v1816 = vpop.f32.mrf.mxu0
      %1817 = vmatprep.mubr.bf16.mxu0 0
      %1818 = vmatmul.mubr.bf16.gmra.mxu0 %v1670
      %v1819 = vpop.f32.mrf.mxu0
      %v1820 = vadd.f32 0.0, %v1819
      %v1821 = vpop.f32.mrf.mxu0
      %v1822 = vpop.f32.mrf.mxu0
      %v1823 = vadd.f32 0.0, %v1822
      %v1824 = vpop.f32.mrf.mxu0
      %1825 = vmatprep.mubr.bf16.mxu0 0
      %1826 = vmatmul.mubr.bf16.gmra.mxu0 %v1673
      %v1827 = vpop.f32.mrf.mxu0
      %v1828 = vadd.f32 0.0, %v1827
      %v1829 = vpop.f32.mrf.mxu0
      %v1830 = vpop.f32.mrf.mxu0
      %v1831 = vadd.f32 0.0, %v1830
      %v1832 = vpop.f32.mrf.mxu0
      %1833 = vmatprep.mubr.bf16.mxu0 0
      %1834 = vmatmul.mubr.bf16.gmra.mxu0 %v1676
      %v1835 = vpop.f32.mrf.mxu0
      %v1836 = vadd.f32 0.0, %v1835
      %v1837 = vpop.f32.mrf.mxu0
      %v1838 = vpop.f32.mrf.mxu0
      %v1839 = vadd.f32 0.0, %v1838
      %v1840 = vpop.f32.mrf.mxu0
      %1841 = vdwg.mxu0
      %v1842 = vadd.f32 %v1548, %v1716
      %v1843 = vadd.f32 %v1549, %v1719
      %v1844 = vadd.f32 %v1550, %v1724
      %v1845 = vadd.f32 %v1551, %v1727
      %v1846 = vadd.f32 %v1552, %v1732
      %v1847 = vadd.f32 %v1553, %v1735
      %v1848 = vadd.f32 %v1554, %v1740
      %v1849 = vadd.f32 %v1555, %v1743
      %v1850 = vadd.f32 %v1556, %v1748
      %v1851 = vadd.f32 %v1557, %v1751
      %v1852 = vadd.f32 %v1558, %v1756
      %v1853 = vadd.f32 %v1559, %v1759
      %v1854 = vadd.f32 %v1560, %v1764
      %v1855 = vadd.f32 %v1561, %v1767
      %v1856 = vadd.f32 %v1562, %v1772
      %v1857 = vadd.f32 %v1563, %v1775
      %v1858 = vadd.f32 %v1564, %v1780
      %v1859 = vadd.f32 %v1565, %v1783
      %v1860 = vadd.f32 %v1566, %v1788
      %v1861 = vadd.f32 %v1567, %v1791
      %v1862 = vadd.f32 %v1568, %v1796
      %v1863 = vadd.f32 %v1569, %v1799
      %v1864 = vadd.f32 %v1570, %v1804
      %v1865 = vadd.f32 %v1571, %v1807
      %v1866 = vadd.f32 %v1572, %v1812
      %v1867 = vadd.f32 %v1573, %v1815
      %v1868 = vadd.f32 %v1574, %v1820
      %v1869 = vadd.f32 %v1575, %v1823
      %v1870 = vadd.f32 %v1576, %v1828
      %v1871 = vadd.f32 %v1577, %v1831
      %v1872 = vadd.f32 %v1578, %v1836
      %v1873 = vadd.f32 %v1579, %v1839
      %s1874 = scalar_lea.vmem %s165, 48
      %v1875 = vld [vmem:[%s1874] sm:$0xff]
      %v1876 = vld [vmem:[%s1874 + $0x8] sm:$0xff]
      %v1877 = vld [vmem:[%s1874 + $0x18] sm:$0xff]
      %v1878 = vld [vmem:[%s1874 + $0x20] sm:$0xff]
      %v1879 = vld [vmem:[%s1874 + $0x30] sm:$0xff]
      %v1880 = vld [vmem:[%s1874 + $0x38] sm:$0xff]
      %v1881 = vld [vmem:[%s1874 + $0x48] sm:$0xff]
      %v1882 = vld [vmem:[%s1874 + $0x50] sm:$0xff]
      %v1883 = vld [vmem:[%s1874 + $0x60] sm:$0xff]
      %v1884 = vld [vmem:[%s1874 + $0x68] sm:$0xff]
      %v1885 = vld [vmem:[%s1874 + $0x78] sm:$0xff]
      %v1886 = vld [vmem:[%s1874 + $0x80] sm:$0xff]
      %v1887 = vld [vmem:[%s1874 + $0x90] sm:$0xff]
      %v1888 = vld [vmem:[%s1874 + $0x98] sm:$0xff]
      %v1889 = vld [vmem:[%s1874 + $0xa8] sm:$0xff]
      %v1890 = vld [vmem:[%s1874 + $0xb0] sm:$0xff]
      %v1891 = vld [vmem:[%s1874 + $0xc0] sm:$0xff]
      %v1892 = vld [vmem:[%s1874 + $0xc8] sm:$0xff]
      %v1893 = vld [vmem:[%s1874 + $0xd8] sm:$0xff]
      %v1894 = vld [vmem:[%s1874 + $0xe0] sm:$0xff]
      %v1895 = vld [vmem:[%s1874 + $0xf0] sm:$0xff]
      %v1896 = vld [vmem:[%s1874 + $0xf8] sm:$0xff]
      %v1897 = vld [vmem:[%s1874 + $0x108] sm:$0xff]
      %v1898 = vld [vmem:[%s1874 + $0x110] sm:$0xff]
      %v1899 = vld [vmem:[%s1874 + $0x120] sm:$0xff]
      %v1900 = vld [vmem:[%s1874 + $0x128] sm:$0xff]
      %v1901 = vld [vmem:[%s1874 + $0x138] sm:$0xff]
      %v1902 = vld [vmem:[%s1874 + $0x140] sm:$0xff]
      %v1903 = vld [vmem:[%s1874 + $0x150] sm:$0xff]
      %v1904 = vld [vmem:[%s1874 + $0x158] sm:$0xff]
      %v1905 = vld [vmem:[%s1874 + $0x168] sm:$0xff]
      %v1906 = vld [vmem:[%s1874 + $0x170] sm:$0xff]
      %v1907 = vpack.c.bf16 %v1876, %v1875
      %v1908 = vpack.c.bf16 %v1878, %v1877
      %v1909 = vpack.c.bf16 %v1880, %v1879
      %v1910 = vpack.c.bf16 %v1882, %v1881
      %v1911 = vpack.c.bf16 %v1884, %v1883
      %v1912 = vpack.c.bf16 %v1886, %v1885
      %v1913 = vpack.c.bf16 %v1888, %v1887
      %v1914 = vpack.c.bf16 %v1890, %v1889
      %v1915 = vpack.c.bf16 %v1892, %v1891
      %v1916 = vpack.c.bf16 %v1894, %v1893
      %v1917 = vpack.c.bf16 %v1896, %v1895
      %v1918 = vpack.c.bf16 %v1898, %v1897
      %v1919 = vpack.c.bf16 %v1900, %v1899
      %v1920 = vpack.c.bf16 %v1902, %v1901
      %v1921 = vpack.c.bf16 %v1904, %v1903
      %v1922 = vpack.c.bf16 %v1906, %v1905
      %s1923 = scalar_lea.vmem %s1, 12
      %v1924 = vld [vmem:[%s1923] sm:$0x3]
      %v1926 = vsel %vm271, %v1907, 0
      %v1929 = vsel %vm271, %v1908, 0
      %v1932 = vsel %vm271, %v1909, 0
      %v1935 = vsel %vm271, %v1910, 0
      %v1938 = vsel %vm271, %v1911, 0
      %v1941 = vsel %vm271, %v1912, 0
      %v1944 = vsel %vm271, %v1913, 0
      %v1947 = vsel %vm271, %v1914, 0
      %v1950 = vsel %vm271, %v1915, 0
      %v1953 = vsel %vm271, %v1916, 0
      %v1956 = vsel %vm271, %v1917, 0
      %v1959 = vsel %vm271, %v1918, 0
      %v1962 = vsel %vm271, %v1919, 0
      %v1965 = vsel %vm271, %v1920, 0
      %v1968 = vsel %vm271, %v1921, 0
      %v1971 = vsel %vm271, %v1922, 0
      %v1974 = vsel %vm320, %v1924, 0
      %1976 = vmatprep.subr.bf16.mxu0 0
      %1977 = vmatpush1.bf16.msra.mxu0 0
      %1978 = vmatprep.subr.bf16.mxu0 0
      %1979 = vmatpush1.bf16.msra.mxu0 0
      %1980 = vmatprep.subr.bf16.mxu0 0
      %1981 = vmatpush1.bf16.msra.mxu0 0
      %1982 = vmatprep.subr.bf16.mxu0 0
      %1983 = vmatpush1.bf16.msra.mxu0 0
      %1984 = vmatprep.subr.bf16.mxu0 0
      %1985 = vmatpush1.bf16.msra.mxu0 0
      %1986 = vmatprep.subr.bf16.mxu0 0
      %1987 = vmatpush1.bf16.msra.mxu0 0
      %1988 = vmatprep.subr.bf16.mxu0 0
      %1989 = vmatpush1.bf16.msra.mxu0 0
      %1990 = vmatprep.subr.bf16.mxu0 0
      %1991 = vmatpush1.bf16.msra.mxu0 %v1974
      %1992 = vmatprep.subr.bf16.mxu0 0
      %1993 = vmatpush2.bf16.msra.mxu0 0
      %1994 = vmatprep.subr.bf16.mxu0 0
      %1995 = vmatpush2.bf16.msra.mxu0 0
      %1996 = vmatprep.subr.bf16.mxu0 0
      %1997 = vmatpush2.bf16.msra.mxu0 0
      %1998 = vmatprep.subr.bf16.mxu0 0
      %1999 = vmatpush2.bf16.msra.mxu0 0
      %2000 = vmatprep.subr.bf16.mxu0 0
      %2001 = vmatpush2.bf16.msra.mxu0 0
      %2002 = vmatprep.subr.bf16.mxu0 0
      %2003 = vmatpush2.bf16.msra.mxu0 0
      %2004 = vmatprep.subr.bf16.mxu0 0
      %2005 = vmatpush2.bf16.msra.mxu0 0
      %2006 = vmatprep.subr.bf16.mxu0 0
      %2007 = vmatpush2.bf16.msra.mxu0 0
      %2008 = vmatprep.mubr.bf16.mxu0 0
      %2009 = vmatmul.mubr.bf16.gmra.mxu0 %v1926
      %v2010 = vpop.f32.mrf.mxu0
      %v2011 = vadd.f32 0.0, %v2010
      %v2012 = vpop.f32.mrf.mxu0
      %v2013 = vpop.f32.mrf.mxu0
      %v2014 = vadd.f32 0.0, %v2013
      %v2015 = vpop.f32.mrf.mxu0
      %2016 = vmatprep.mubr.bf16.mxu0 0
      %2017 = vmatmul.mubr.bf16.gmra.mxu0 %v1929
      %v2018 = vpop.f32.mrf.mxu0
      %v2019 = vadd.f32 0.0, %v2018
      %v2020 = vpop.f32.mrf.mxu0
      %v2021 = vpop.f32.mrf.mxu0
      %v2022 = vadd.f32 0.0, %v2021
      %v2023 = vpop.f32.mrf.mxu0
      %2024 = vmatprep.mubr.bf16.mxu0 0
      %2025 = vmatmul.mubr.bf16.gmra.mxu0 %v1932
      %v2026 = vpop.f32.mrf.mxu0
      %v2027 = vadd.f32 0.0, %v2026
      %v2028 = vpop.f32.mrf.mxu0
      %v2029 = vpop.f32.mrf.mxu0
      %v2030 = vadd.f32 0.0, %v2029
      %v2031 = vpop.f32.mrf.mxu0
      %2032 = vmatprep.mubr.bf16.mxu0 0
      %2033 = vmatmul.mubr.bf16.gmra.mxu0 %v1935
      %v2034 = vpop.f32.mrf.mxu0
      %v2035 = vadd.f32 0.0, %v2034
      %v2036 = vpop.f32.mrf.mxu0
      %v2037 = vpop.f32.mrf.mxu0
      %v2038 = vadd.f32 0.0, %v2037
      %v2039 = vpop.f32.mrf.mxu0
      %2040 = vmatprep.mubr.bf16.mxu0 0
      %2041 = vmatmul.mubr.bf16.gmra.mxu0 %v1938
      %v2042 = vpop.f32.mrf.mxu0
      %v2043 = vadd.f32 0.0, %v2042
      %v2044 = vpop.f32.mrf.mxu0
      %v2045 = vpop.f32.mrf.mxu0
      %v2046 = vadd.f32 0.0, %v2045
      %v2047 = vpop.f32.mrf.mxu0
      %2048 = vmatprep.mubr.bf16.mxu0 0
      %2049 = vmatmul.mubr.bf16.gmra.mxu0 %v1941
      %v2050 = vpop.f32.mrf.mxu0
      %v2051 = vadd.f32 0.0, %v2050
      %v2052 = vpop.f32.mrf.mxu0
      %v2053 = vpop.f32.mrf.mxu0
      %v2054 = vadd.f32 0.0, %v2053
      %v2055 = vpop.f32.mrf.mxu0
      %2056 = vmatprep.mubr.bf16.mxu0 0
      %2057 = vmatmul.mubr.bf16.gmra.mxu0 %v1944
      %v2058 = vpop.f32.mrf.mxu0
      %v2059 = vadd.f32 0.0, %v2058
      %v2060 = vpop.f32.mrf.mxu0
      %v2061 = vpop.f32.mrf.mxu0
      %v2062 = vadd.f32 0.0, %v2061
      %v2063 = vpop.f32.mrf.mxu0
      %2064 = vmatprep.mubr.bf16.mxu0 0
      %2065 = vmatmul.mubr.bf16.gmra.mxu0 %v1947
      %v2066 = vpop.f32.mrf.mxu0
      %v2067 = vadd.f32 0.0, %v2066
      %v2068 = vpop.f32.mrf.mxu0
      %v2069 = vpop.f32.mrf.mxu0
      %v2070 = vadd.f32 0.0, %v2069
      %v2071 = vpop.f32.mrf.mxu0
      %2072 = vmatprep.mubr.bf16.mxu0 0
      %2073 = vmatmul.mubr.bf16.gmra.mxu0 %v1950
      %v2074 = vpop.f32.mrf.mxu0
      %v2075 = vadd.f32 0.0, %v2074
      %v2076 = vpop.f32.mrf.mxu0
      %v2077 = vpop.f32.mrf.mxu0
      %v2078 = vadd.f32 0.0, %v2077
      %v2079 = vpop.f32.mrf.mxu0
      %2080 = vmatprep.mubr.bf16.mxu0 0
      %2081 = vmatmul.mubr.bf16.gmra.mxu0 %v1953
      %v2082 = vpop.f32.mrf.mxu0
      %v2083 = vadd.f32 0.0, %v2082
      %v2084 = vpop.f32.mrf.mxu0
      %v2085 = vpop.f32.mrf.mxu0
      %v2086 = vadd.f32 0.0, %v2085
      %v2087 = vpop.f32.mrf.mxu0
      %2088 = vmatprep.mubr.bf16.mxu0 0
      %2089 = vmatmul.mubr.bf16.gmra.mxu0 %v1956
      %v2090 = vpop.f32.mrf.mxu0
      %v2091 = vadd.f32 0.0, %v2090
      %v2092 = vpop.f32.mrf.mxu0
      %v2093 = vpop.f32.mrf.mxu0
      %v2094 = vadd.f32 0.0, %v2093
      %v2095 = vpop.f32.mrf.mxu0
      %2096 = vmatprep.mubr.bf16.mxu0 0
      %2097 = vmatmul.mubr.bf16.gmra.mxu0 %v1959
      %v2098 = vpop.f32.mrf.mxu0
      %v2099 = vadd.f32 0.0, %v2098
      %v2100 = vpop.f32.mrf.mxu0
      %v2101 = vpop.f32.mrf.mxu0
      %v2102 = vadd.f32 0.0, %v2101
      %v2103 = vpop.f32.mrf.mxu0
      %2104 = vmatprep.mubr.bf16.mxu0 0
      %2105 = vmatmul.mubr.bf16.gmra.mxu0 %v1962
      %v2106 = vpop.f32.mrf.mxu0
      %v2107 = vadd.f32 0.0, %v2106
      %v2108 = vpop.f32.mrf.mxu0
      %v2109 = vpop.f32.mrf.mxu0
      %v2110 = vadd.f32 0.0, %v2109
      %v2111 = vpop.f32.mrf.mxu0
      %2112 = vmatprep.mubr.bf16.mxu0 0
      %2113 = vmatmul.mubr.bf16.gmra.mxu0 %v1965
      %v2114 = vpop.f32.mrf.mxu0
      %v2115 = vadd.f32 0.0, %v2114
      %v2116 = vpop.f32.mrf.mxu0
      %v2117 = vpop.f32.mrf.mxu0
      %v2118 = vadd.f32 0.0, %v2117
      %v2119 = vpop.f32.mrf.mxu0
      %2120 = vmatprep.mubr.bf16.mxu0 0
      %2121 = vmatmul.mubr.bf16.gmra.mxu0 %v1968
      %v2122 = vpop.f32.mrf.mxu0
      %v2123 = vadd.f32 0.0, %v2122
      %v2124 = vpop.f32.mrf.mxu0
      %v2125 = vpop.f32.mrf.mxu0
      %v2126 = vadd.f32 0.0, %v2125
      %v2127 = vpop.f32.mrf.mxu0
      %2128 = vmatprep.mubr.bf16.mxu0 0
      %2129 = vmatmul.mubr.bf16.gmra.mxu0 %v1971
      %v2130 = vpop.f32.mrf.mxu0
      %v2131 = vadd.f32 0.0, %v2130
      %v2132 = vpop.f32.mrf.mxu0
      %v2133 = vpop.f32.mrf.mxu0
      %v2134 = vadd.f32 0.0, %v2133
      %v2135 = vpop.f32.mrf.mxu0
      %2136 = vdwg.mxu0
      %v2137 = vadd.f32 %v1842, %v2011
      %v2138 = vadd.f32 %v1843, %v2014
      %v2139 = vadd.f32 %v1844, %v2019
      %v2140 = vadd.f32 %v1845, %v2022
      %v2141 = vadd.f32 %v1846, %v2027
      %v2142 = vadd.f32 %v1847, %v2030
      %v2143 = vadd.f32 %v1848, %v2035
      %v2144 = vadd.f32 %v1849, %v2038
      %v2145 = vadd.f32 %v1850, %v2043
      %v2146 = vadd.f32 %v1851, %v2046
      %v2147 = vadd.f32 %v1852, %v2051
      %v2148 = vadd.f32 %v1853, %v2054
      %v2149 = vadd.f32 %v1854, %v2059
      %v2150 = vadd.f32 %v1855, %v2062
      %v2151 = vadd.f32 %v1856, %v2067
      %v2152 = vadd.f32 %v1857, %v2070
      %v2153 = vadd.f32 %v1858, %v2075
      %v2154 = vadd.f32 %v1859, %v2078
      %v2155 = vadd.f32 %v1860, %v2083
      %v2156 = vadd.f32 %v1861, %v2086
      %v2157 = vadd.f32 %v1862, %v2091
      %v2158 = vadd.f32 %v1863, %v2094
      %v2159 = vadd.f32 %v1864, %v2099
      %v2160 = vadd.f32 %v1865, %v2102
      %v2161 = vadd.f32 %v1866, %v2107
      %v2162 = vadd.f32 %v1867, %v2110
      %v2163 = vadd.f32 %v1868, %v2115
      %v2164 = vadd.f32 %v1869, %v2118
      %v2165 = vadd.f32 %v1870, %v2123
      %v2166 = vadd.f32 %v1871, %v2126
      %v2167 = vadd.f32 %v1872, %v2131
      %v2168 = vadd.f32 %v1873, %v2134
      %v2169 = vld [vmem:[%s1874 + $0x1] sm:$0xff]
      %v2170 = vld [vmem:[%s1874 + $0x9] sm:$0xff]
      %v2171 = vld [vmem:[%s1874 + $0x19] sm:$0xff]
      %v2172 = vld [vmem:[%s1874 + $0x21] sm:$0xff]
      %v2173 = vld [vmem:[%s1874 + $0x31] sm:$0xff]
      %v2174 = vld [vmem:[%s1874 + $0x39] sm:$0xff]
      %v2175 = vld [vmem:[%s1874 + $0x49] sm:$0xff]
      %v2176 = vld [vmem:[%s1874 + $0x51] sm:$0xff]
      %v2177 = vld [vmem:[%s1874 + $0x61] sm:$0xff]
      %v2178 = vld [vmem:[%s1874 + $0x69] sm:$0xff]
      %v2179 = vld [vmem:[%s1874 + $0x79] sm:$0xff]
      %v2180 = vld [vmem:[%s1874 + $0x81] sm:$0xff]
      %v2181 = vld [vmem:[%s1874 + $0x91] sm:$0xff]
      %v2182 = vld [vmem:[%s1874 + $0x99] sm:$0xff]
      %v2183 = vld [vmem:[%s1874 + $0xa9] sm:$0xff]
      %v2184 = vld [vmem:[%s1874 + $0xb1] sm:$0xff]
      %v2185 = vld [vmem:[%s1874 + $0xc1] sm:$0xff]
      %v2186 = vld [vmem:[%s1874 + $0xc9] sm:$0xff]
      %v2187 = vld [vmem:[%s1874 + $0xd9] sm:$0xff]
      %v2188 = vld [vmem:[%s1874 + $0xe1] sm:$0xff]
      %v2189 = vld [vmem:[%s1874 + $0xf1] sm:$0xff]
      %v2190 = vld [vmem:[%s1874 + $0xf9] sm:$0xff]
      %v2191 = vld [vmem:[%s1874 + $0x109] sm:$0xff]
      %v2192 = vld [vmem:[%s1874 + $0x111] sm:$0xff]
      %v2193 = vld [vmem:[%s1874 + $0x121] sm:$0xff]
      %v2194 = vld [vmem:[%s1874 + $0x129] sm:$0xff]
      %v2195 = vld [vmem:[%s1874 + $0x139] sm:$0xff]
      %v2196 = vld [vmem:[%s1874 + $0x141] sm:$0xff]
      %v2197 = vld [vmem:[%s1874 + $0x151] sm:$0xff]
      %v2198 = vld [vmem:[%s1874 + $0x159] sm:$0xff]
      %v2199 = vld [vmem:[%s1874 + $0x169] sm:$0xff]
      %v2200 = vld [vmem:[%s1874 + $0x171] sm:$0xff]
      %v2201 = vpack.c.bf16 %v2170, %v2169
      %v2202 = vpack.c.bf16 %v2172, %v2171
      %v2203 = vpack.c.bf16 %v2174, %v2173
      %v2204 = vpack.c.bf16 %v2176, %v2175
      %v2205 = vpack.c.bf16 %v2178, %v2177
      %v2206 = vpack.c.bf16 %v2180, %v2179
      %v2207 = vpack.c.bf16 %v2182, %v2181
      %v2208 = vpack.c.bf16 %v2184, %v2183
      %v2209 = vpack.c.bf16 %v2186, %v2185
      %v2210 = vpack.c.bf16 %v2188, %v2187
      %v2211 = vpack.c.bf16 %v2190, %v2189
      %v2212 = vpack.c.bf16 %v2192, %v2191
      %v2213 = vpack.c.bf16 %v2194, %v2193
      %v2214 = vpack.c.bf16 %v2196, %v2195
      %v2215 = vpack.c.bf16 %v2198, %v2197
      %v2216 = vpack.c.bf16 %v2200, %v2199
      %s2217 = scalar_lea.vmem %s1, 14
      %v2218 = vld [vmem:[%s2217] sm:$0x3]
      %v2220 = vsel %vm271, %v2201, 0
      %v2223 = vsel %vm271, %v2202, 0
      %v2226 = vsel %vm271, %v2203, 0
      %v2229 = vsel %vm271, %v2204, 0
      %v2232 = vsel %vm271, %v2205, 0
      %v2235 = vsel %vm271, %v2206, 0
      %v2238 = vsel %vm271, %v2207, 0
      %v2241 = vsel %vm271, %v2208, 0
      %v2244 = vsel %vm271, %v2209, 0
      %v2247 = vsel %vm271, %v2210, 0
      %v2250 = vsel %vm271, %v2211, 0
      %v2253 = vsel %vm271, %v2212, 0
      %v2256 = vsel %vm271, %v2213, 0
      %v2259 = vsel %vm271, %v2214, 0
      %v2262 = vsel %vm271, %v2215, 0
      %v2265 = vsel %vm271, %v2216, 0
      %v2268 = vsel %vm320, %v2218, 0
      %2270 = vmatprep.subr.bf16.mxu0 0
      %2271 = vmatpush1.bf16.msra.mxu0 0
      %2272 = vmatprep.subr.bf16.mxu0 0
      %2273 = vmatpush1.bf16.msra.mxu0 0
      %2274 = vmatprep.subr.bf16.mxu0 0
      %2275 = vmatpush1.bf16.msra.mxu0 0
      %2276 = vmatprep.subr.bf16.mxu0 0
      %2277 = vmatpush1.bf16.msra.mxu0 0
      %2278 = vmatprep.subr.bf16.mxu0 0
      %2279 = vmatpush1.bf16.msra.mxu0 0
      %2280 = vmatprep.subr.bf16.mxu0 0
      %2281 = vmatpush1.bf16.msra.mxu0 0
      %2282 = vmatprep.subr.bf16.mxu0 0
      %2283 = vmatpush1.bf16.msra.mxu0 0
      %2284 = vmatprep.subr.bf16.mxu0 0
      %2285 = vmatpush1.bf16.msra.mxu0 %v2268
      %2286 = vmatprep.subr.bf16.mxu0 0
      %2287 = vmatpush2.bf16.msra.mxu0 0
      %2288 = vmatprep.subr.bf16.mxu0 0
      %2289 = vmatpush2.bf16.msra.mxu0 0
      %2290 = vmatprep.subr.bf16.mxu0 0
      %2291 = vmatpush2.bf16.msra.mxu0 0
      %2292 = vmatprep.subr.bf16.mxu0 0
      %2293 = vmatpush2.bf16.msra.mxu0 0
      %2294 = vmatprep.subr.bf16.mxu0 0
      %2295 = vmatpush2.bf16.msra.mxu0 0
      %2296 = vmatprep.subr.bf16.mxu0 0
      %2297 = vmatpush2.bf16.msra.mxu0 0
      %2298 = vmatprep.subr.bf16.mxu0 0
      %2299 = vmatpush2.bf16.msra.mxu0 0
      %2300 = vmatprep.subr.bf16.mxu0 0
      %2301 = vmatpush2.bf16.msra.mxu0 0
      %2302 = vmatprep.mubr.bf16.mxu0 0
      %2303 = vmatmul.mubr.bf16.gmra.mxu0 %v2220
      %v2304 = vpop.f32.mrf.mxu0
      %v2305 = vadd.f32 0.0, %v2304
      %v2306 = vpop.f32.mrf.mxu0
      %v2307 = vpop.f32.mrf.mxu0
      %v2308 = vadd.f32 0.0, %v2307
      %v2309 = vpop.f32.mrf.mxu0
      %2310 = vmatprep.mubr.bf16.mxu0 0
      %2311 = vmatmul.mubr.bf16.gmra.mxu0 %v2223
      %v2312 = vpop.f32.mrf.mxu0
      %v2313 = vadd.f32 0.0, %v2312
      %v2314 = vpop.f32.mrf.mxu0
      %v2315 = vpop.f32.mrf.mxu0
      %v2316 = vadd.f32 0.0, %v2315
      %v2317 = vpop.f32.mrf.mxu0
      %2318 = vmatprep.mubr.bf16.mxu0 0
      %2319 = vmatmul.mubr.bf16.gmra.mxu0 %v2226
      %v2320 = vpop.f32.mrf.mxu0
      %v2321 = vadd.f32 0.0, %v2320
      %v2322 = vpop.f32.mrf.mxu0
      %v2323 = vpop.f32.mrf.mxu0
      %v2324 = vadd.f32 0.0, %v2323
      %v2325 = vpop.f32.mrf.mxu0
      %2326 = vmatprep.mubr.bf16.mxu0 0
      %2327 = vmatmul.mubr.bf16.gmra.mxu0 %v2229
      %v2328 = vpop.f32.mrf.mxu0
      %v2329 = vadd.f32 0.0, %v2328
      %v2330 = vpop.f32.mrf.mxu0
      %v2331 = vpop.f32.mrf.mxu0
      %v2332 = vadd.f32 0.0, %v2331
      %v2333 = vpop.f32.mrf.mxu0
      %2334 = vmatprep.mubr.bf16.mxu0 0
      %2335 = vmatmul.mubr.bf16.gmra.mxu0 %v2232
      %v2336 = vpop.f32.mrf.mxu0
      %v2337 = vadd.f32 0.0, %v2336
      %v2338 = vpop.f32.mrf.mxu0
      %v2339 = vpop.f32.mrf.mxu0
      %v2340 = vadd.f32 0.0, %v2339
      %v2341 = vpop.f32.mrf.mxu0
      %2342 = vmatprep.mubr.bf16.mxu0 0
      %2343 = vmatmul.mubr.bf16.gmra.mxu0 %v2235
      %v2344 = vpop.f32.mrf.mxu0
      %v2345 = vadd.f32 0.0, %v2344
      %v2346 = vpop.f32.mrf.mxu0
      %v2347 = vpop.f32.mrf.mxu0
      %v2348 = vadd.f32 0.0, %v2347
      %v2349 = vpop.f32.mrf.mxu0
      %2350 = vmatprep.mubr.bf16.mxu0 0
      %2351 = vmatmul.mubr.bf16.gmra.mxu0 %v2238
      %v2352 = vpop.f32.mrf.mxu0
      %v2353 = vadd.f32 0.0, %v2352
      %v2354 = vpop.f32.mrf.mxu0
      %v2355 = vpop.f32.mrf.mxu0
      %v2356 = vadd.f32 0.0, %v2355
      %v2357 = vpop.f32.mrf.mxu0
      %2358 = vmatprep.mubr.bf16.mxu0 0
      %2359 = vmatmul.mubr.bf16.gmra.mxu0 %v2241
      %v2360 = vpop.f32.mrf.mxu0
      %v2361 = vadd.f32 0.0, %v2360
      %v2362 = vpop.f32.mrf.mxu0
      %v2363 = vpop.f32.mrf.mxu0
      %v2364 = vadd.f32 0.0, %v2363
      %v2365 = vpop.f32.mrf.mxu0
      %2366 = vmatprep.mubr.bf16.mxu0 0
      %2367 = vmatmul.mubr.bf16.gmra.mxu0 %v2244
      %v2368 = vpop.f32.mrf.mxu0
      %v2369 = vadd.f32 0.0, %v2368
      %v2370 = vpop.f32.mrf.mxu0
      %v2371 = vpop.f32.mrf.mxu0
      %v2372 = vadd.f32 0.0, %v2371
      %v2373 = vpop.f32.mrf.mxu0
      %2374 = vmatprep.mubr.bf16.mxu0 0
      %2375 = vmatmul.mubr.bf16.gmra.mxu0 %v2247
      %v2376 = vpop.f32.mrf.mxu0
      %v2377 = vadd.f32 0.0, %v2376
      %v2378 = vpop.f32.mrf.mxu0
      %v2379 = vpop.f32.mrf.mxu0
      %v2380 = vadd.f32 0.0, %v2379
      %v2381 = vpop.f32.mrf.mxu0
      %2382 = vmatprep.mubr.bf16.mxu0 0
      %2383 = vmatmul.mubr.bf16.gmra.mxu0 %v2250
      %v2384 = vpop.f32.mrf.mxu0
      %v2385 = vadd.f32 0.0, %v2384
      %v2386 = vpop.f32.mrf.mxu0
      %v2387 = vpop.f32.mrf.mxu0
      %v2388 = vadd.f32 0.0, %v2387
      %v2389 = vpop.f32.mrf.mxu0
      %2390 = vmatprep.mubr.bf16.mxu0 0
      %2391 = vmatmul.mubr.bf16.gmra.mxu0 %v2253
      %v2392 = vpop.f32.mrf.mxu0
      %v2393 = vadd.f32 0.0, %v2392
      %v2394 = vpop.f32.mrf.mxu0
      %v2395 = vpop.f32.mrf.mxu0
      %v2396 = vadd.f32 0.0, %v2395
      %v2397 = vpop.f32.mrf.mxu0
      %2398 = vmatprep.mubr.bf16.mxu0 0
      %2399 = vmatmul.mubr.bf16.gmra.mxu0 %v2256
      %v2400 = vpop.f32.mrf.mxu0
      %v2401 = vadd.f32 0.0, %v2400
      %v2402 = vpop.f32.mrf.mxu0
      %v2403 = vpop.f32.mrf.mxu0
      %v2404 = vadd.f32 0.0, %v2403
      %v2405 = vpop.f32.mrf.mxu0
      %2406 = vmatprep.mubr.bf16.mxu0 0
      %2407 = vmatmul.mubr.bf16.gmra.mxu0 %v2259
      %v2408 = vpop.f32.mrf.mxu0
      %v2409 = vadd.f32 0.0, %v2408
      %v2410 = vpop.f32.mrf.mxu0
      %v2411 = vpop.f32.mrf.mxu0
      %v2412 = vadd.f32 0.0, %v2411
      %v2413 = vpop.f32.mrf.mxu0
      %2414 = vmatprep.mubr.bf16.mxu0 0
      %2415 = vmatmul.mubr.bf16.gmra.mxu0 %v2262
      %v2416 = vpop.f32.mrf.mxu0
      %v2417 = vadd.f32 0.0, %v2416
      %v2418 = vpop.f32.mrf.mxu0
      %v2419 = vpop.f32.mrf.mxu0
      %v2420 = vadd.f32 0.0, %v2419
      %v2421 = vpop.f32.mrf.mxu0
      %2422 = vmatprep.mubr.bf16.mxu0 0
      %2423 = vmatmul.mubr.bf16.gmra.mxu0 %v2265
      %v2424 = vpop.f32.mrf.mxu0
      %v2425 = vadd.f32 0.0, %v2424
      %v2426 = vpop.f32.mrf.mxu0
      %v2427 = vpop.f32.mrf.mxu0
      %v2428 = vadd.f32 0.0, %v2427
      %v2429 = vpop.f32.mrf.mxu0
      %2430 = vdwg.mxu0
      %v2431 = vadd.f32 %v2137, %v2305
      %v2432 = vadd.f32 %v2138, %v2308
      %v2433 = vadd.f32 %v2139, %v2313
      %v2434 = vadd.f32 %v2140, %v2316
      %v2435 = vadd.f32 %v2141, %v2321
      %v2436 = vadd.f32 %v2142, %v2324
      %v2437 = vadd.f32 %v2143, %v2329
      %v2438 = vadd.f32 %v2144, %v2332
      %v2439 = vadd.f32 %v2145, %v2337
      %v2440 = vadd.f32 %v2146, %v2340
      %v2441 = vadd.f32 %v2147, %v2345
      %v2442 = vadd.f32 %v2148, %v2348
      %v2443 = vadd.f32 %v2149, %v2353
      %v2444 = vadd.f32 %v2150, %v2356
      %v2445 = vadd.f32 %v2151, %v2361
      %v2446 = vadd.f32 %v2152, %v2364
      %v2447 = vadd.f32 %v2153, %v2369
      %v2448 = vadd.f32 %v2154, %v2372
      %v2449 = vadd.f32 %v2155, %v2377
      %v2450 = vadd.f32 %v2156, %v2380
      %v2451 = vadd.f32 %v2157, %v2385
      %v2452 = vadd.f32 %v2158, %v2388
      %v2453 = vadd.f32 %v2159, %v2393
      %v2454 = vadd.f32 %v2160, %v2396
      %v2455 = vadd.f32 %v2161, %v2401
      %v2456 = vadd.f32 %v2162, %v2404
      %v2457 = vadd.f32 %v2163, %v2409
      %v2458 = vadd.f32 %v2164, %v2412
      %v2459 = vadd.f32 %v2165, %v2417
      %v2460 = vadd.f32 %v2166, %v2420
      %v2461 = vadd.f32 %v2167, %v2425
      %v2462 = vadd.f32 %v2168, %v2428
      %v2463 = vld [vmem:[%s1874 + $0x2] sm:$0xff]
      %v2464 = vld [vmem:[%s1874 + $0xa] sm:$0xff]
      %v2465 = vld [vmem:[%s1874 + $0x1a] sm:$0xff]
      %v2466 = vld [vmem:[%s1874 + $0x22] sm:$0xff]
      %v2467 = vld [vmem:[%s1874 + $0x32] sm:$0xff]
      %v2468 = vld [vmem:[%s1874 + $0x3a] sm:$0xff]
      %v2469 = vld [vmem:[%s1874 + $0x4a] sm:$0xff]
      %v2470 = vld [vmem:[%s1874 + $0x52] sm:$0xff]
      %v2471 = vld [vmem:[%s1874 + $0x62] sm:$0xff]
      %v2472 = vld [vmem:[%s1874 + $0x6a] sm:$0xff]
      %v2473 = vld [vmem:[%s1874 + $0x7a] sm:$0xff]
      %v2474 = vld [vmem:[%s1874 + $0x82] sm:$0xff]
      %v2475 = vld [vmem:[%s1874 + $0x92] sm:$0xff]
      %v2476 = vld [vmem:[%s1874 + $0x9a] sm:$0xff]
      %v2477 = vld [vmem:[%s1874 + $0xaa] sm:$0xff]
      %v2478 = vld [vmem:[%s1874 + $0xb2] sm:$0xff]
      %v2479 = vld [vmem:[%s1874 + $0xc2] sm:$0xff]
      %v2480 = vld [vmem:[%s1874 + $0xca] sm:$0xff]
      %v2481 = vld [vmem:[%s1874 + $0xda] sm:$0xff]
      %v2482 = vld [vmem:[%s1874 + $0xe2] sm:$0xff]
      %v2483 = vld [vmem:[%s1874 + $0xf2] sm:$0xff]
      %v2484 = vld [vmem:[%s1874 + $0xfa] sm:$0xff]
      %v2485 = vld [vmem:[%s1874 + $0x10a] sm:$0xff]
      %v2486 = vld [vmem:[%s1874 + $0x112] sm:$0xff]
      %v2487 = vld [vmem:[%s1874 + $0x122] sm:$0xff]
      %v2488 = vld [vmem:[%s1874 + $0x12a] sm:$0xff]
      %v2489 = vld [vmem:[%s1874 + $0x13a] sm:$0xff]
      %v2490 = vld [vmem:[%s1874 + $0x142] sm:$0xff]
      %v2491 = vld [vmem:[%s1874 + $0x152] sm:$0xff]
      %v2492 = vld [vmem:[%s1874 + $0x15a] sm:$0xff]
      %v2493 = vld [vmem:[%s1874 + $0x16a] sm:$0xff]
      %v2494 = vld [vmem:[%s1874 + $0x172] sm:$0xff]
      %v2495 = vpack.c.bf16 %v2464, %v2463
      %v2496 = vpack.c.bf16 %v2466, %v2465
      %v2497 = vpack.c.bf16 %v2468, %v2467
      %v2498 = vpack.c.bf16 %v2470, %v2469
      %v2499 = vpack.c.bf16 %v2472, %v2471
      %v2500 = vpack.c.bf16 %v2474, %v2473
      %v2501 = vpack.c.bf16 %v2476, %v2475
      %v2502 = vpack.c.bf16 %v2478, %v2477
      %v2503 = vpack.c.bf16 %v2480, %v2479
      %v2504 = vpack.c.bf16 %v2482, %v2481
      %v2505 = vpack.c.bf16 %v2484, %v2483
      %v2506 = vpack.c.bf16 %v2486, %v2485
      %v2507 = vpack.c.bf16 %v2488, %v2487
      %v2508 = vpack.c.bf16 %v2490, %v2489
      %v2509 = vpack.c.bf16 %v2492, %v2491
      %v2510 = vpack.c.bf16 %v2494, %v2493
      %s2511 = scalar_lea.vmem %s1, 16
      %v2512 = vld [vmem:[%s2511] sm:$0x3]
      %v2514 = vsel %vm271, %v2495, 0
      %v2517 = vsel %vm271, %v2496, 0
      %v2520 = vsel %vm271, %v2497, 0
      %v2523 = vsel %vm271, %v2498, 0
      %v2526 = vsel %vm271, %v2499, 0
      %v2529 = vsel %vm271, %v2500, 0
      %v2532 = vsel %vm271, %v2501, 0
      %v2535 = vsel %vm271, %v2502, 0
      %v2538 = vsel %vm271, %v2503, 0
      %v2541 = vsel %vm271, %v2504, 0
      %v2544 = vsel %vm271, %v2505, 0
      %v2547 = vsel %vm271, %v2506, 0
      %v2550 = vsel %vm271, %v2507, 0
      %v2553 = vsel %vm271, %v2508, 0
      %v2556 = vsel %vm271, %v2509, 0
      %v2559 = vsel %vm271, %v2510, 0
      %v2562 = vsel %vm320, %v2512, 0
      %2564 = vmatprep.subr.bf16.mxu0 0
      %2565 = vmatpush1.bf16.msra.mxu0 0
      %2566 = vmatprep.subr.bf16.mxu0 0
      %2567 = vmatpush1.bf16.msra.mxu0 0
      %2568 = vmatprep.subr.bf16.mxu0 0
      %2569 = vmatpush1.bf16.msra.mxu0 0
      %2570 = vmatprep.subr.bf16.mxu0 0
      %2571 = vmatpush1.bf16.msra.mxu0 0
      %2572 = vmatprep.subr.bf16.mxu0 0
      %2573 = vmatpush1.bf16.msra.mxu0 0
      %2574 = vmatprep.subr.bf16.mxu0 0
      %2575 = vmatpush1.bf16.msra.mxu0 0
      %2576 = vmatprep.subr.bf16.mxu0 0
      %2577 = vmatpush1.bf16.msra.mxu0 0
      %2578 = vmatprep.subr.bf16.mxu0 0
      %2579 = vmatpush1.bf16.msra.mxu0 %v2562
      %2580 = vmatprep.subr.bf16.mxu0 0
      %2581 = vmatpush2.bf16.msra.mxu0 0
      %2582 = vmatprep.subr.bf16.mxu0 0
      %2583 = vmatpush2.bf16.msra.mxu0 0
      %2584 = vmatprep.subr.bf16.mxu0 0
      %2585 = vmatpush2.bf16.msra.mxu0 0
      %2586 = vmatprep.subr.bf16.mxu0 0
      %2587 = vmatpush2.bf16.msra.mxu0 0
      %2588 = vmatprep.subr.bf16.mxu0 0
      %2589 = vmatpush2.bf16.msra.mxu0 0
      %2590 = vmatprep.subr.bf16.mxu0 0
      %2591 = vmatpush2.bf16.msra.mxu0 0
      %2592 = vmatprep.subr.bf16.mxu0 0
      %2593 = vmatpush2.bf16.msra.mxu0 0
      %2594 = vmatprep.subr.bf16.mxu0 0
      %2595 = vmatpush2.bf16.msra.mxu0 0
      %2596 = vmatprep.mubr.bf16.mxu0 0
      %2597 = vmatmul.mubr.bf16.gmra.mxu0 %v2514
      %v2598 = vpop.f32.mrf.mxu0
      %v2599 = vadd.f32 0.0, %v2598
      %v2600 = vpop.f32.mrf.mxu0
      %v2601 = vpop.f32.mrf.mxu0
      %v2602 = vadd.f32 0.0, %v2601
      %v2603 = vpop.f32.mrf.mxu0
      %2604 = vmatprep.mubr.bf16.mxu0 0
      %2605 = vmatmul.mubr.bf16.gmra.mxu0 %v2517
      %v2606 = vpop.f32.mrf.mxu0
      %v2607 = vadd.f32 0.0, %v2606
      %v2608 = vpop.f32.mrf.mxu0
      %v2609 = vpop.f32.mrf.mxu0
      %v2610 = vadd.f32 0.0, %v2609
      %v2611 = vpop.f32.mrf.mxu0
      %2612 = vmatprep.mubr.bf16.mxu0 0
      %2613 = vmatmul.mubr.bf16.gmra.mxu0 %v2520
      %v2614 = vpop.f32.mrf.mxu0
      %v2615 = vadd.f32 0.0, %v2614
      %v2616 = vpop.f32.mrf.mxu0
      %v2617 = vpop.f32.mrf.mxu0
      %v2618 = vadd.f32 0.0, %v2617
      %v2619 = vpop.f32.mrf.mxu0
      %2620 = vmatprep.mubr.bf16.mxu0 0
      %2621 = vmatmul.mubr.bf16.gmra.mxu0 %v2523
      %v2622 = vpop.f32.mrf.mxu0
      %v2623 = vadd.f32 0.0, %v2622
      %v2624 = vpop.f32.mrf.mxu0
      %v2625 = vpop.f32.mrf.mxu0
      %v2626 = vadd.f32 0.0, %v2625
      %v2627 = vpop.f32.mrf.mxu0
      %2628 = vmatprep.mubr.bf16.mxu0 0
      %2629 = vmatmul.mubr.bf16.gmra.mxu0 %v2526
      %v2630 = vpop.f32.mrf.mxu0
      %v2631 = vadd.f32 0.0, %v2630
      %v2632 = vpop.f32.mrf.mxu0
      %v2633 = vpop.f32.mrf.mxu0
      %v2634 = vadd.f32 0.0, %v2633
      %v2635 = vpop.f32.mrf.mxu0
      %2636 = vmatprep.mubr.bf16.mxu0 0
      %2637 = vmatmul.mubr.bf16.gmra.mxu0 %v2529
      %v2638 = vpop.f32.mrf.mxu0
      %v2639 = vadd.f32 0.0, %v2638
      %v2640 = vpop.f32.mrf.mxu0
      %v2641 = vpop.f32.mrf.mxu0
      %v2642 = vadd.f32 0.0, %v2641
      %v2643 = vpop.f32.mrf.mxu0
      %2644 = vmatprep.mubr.bf16.mxu0 0
      %2645 = vmatmul.mubr.bf16.gmra.mxu0 %v2532
      %v2646 = vpop.f32.mrf.mxu0
      %v2647 = vadd.f32 0.0, %v2646
      %v2648 = vpop.f32.mrf.mxu0
      %v2649 = vpop.f32.mrf.mxu0
      %v2650 = vadd.f32 0.0, %v2649
      %v2651 = vpop.f32.mrf.mxu0
      %2652 = vmatprep.mubr.bf16.mxu0 0
      %2653 = vmatmul.mubr.bf16.gmra.mxu0 %v2535
      %v2654 = vpop.f32.mrf.mxu0
      %v2655 = vadd.f32 0.0, %v2654
      %v2656 = vpop.f32.mrf.mxu0
      %v2657 = vpop.f32.mrf.mxu0
      %v2658 = vadd.f32 0.0, %v2657
      %v2659 = vpop.f32.mrf.mxu0
      %2660 = vmatprep.mubr.bf16.mxu0 0
      %2661 = vmatmul.mubr.bf16.gmra.mxu0 %v2538
      %v2662 = vpop.f32.mrf.mxu0
      %v2663 = vadd.f32 0.0, %v2662
      %v2664 = vpop.f32.mrf.mxu0
      %v2665 = vpop.f32.mrf.mxu0
      %v2666 = vadd.f32 0.0, %v2665
      %v2667 = vpop.f32.mrf.mxu0
      %2668 = vmatprep.mubr.bf16.mxu0 0
      %2669 = vmatmul.mubr.bf16.gmra.mxu0 %v2541
      %v2670 = vpop.f32.mrf.mxu0
      %v2671 = vadd.f32 0.0, %v2670
      %v2672 = vpop.f32.mrf.mxu0
      %v2673 = vpop.f32.mrf.mxu0
      %v2674 = vadd.f32 0.0, %v2673
      %v2675 = vpop.f32.mrf.mxu0
      %2676 = vmatprep.mubr.bf16.mxu0 0
      %2677 = vmatmul.mubr.bf16.gmra.mxu0 %v2544
      %v2678 = vpop.f32.mrf.mxu0
      %v2679 = vadd.f32 0.0, %v2678
      %v2680 = vpop.f32.mrf.mxu0
      %v2681 = vpop.f32.mrf.mxu0
      %v2682 = vadd.f32 0.0, %v2681
      %v2683 = vpop.f32.mrf.mxu0
      %2684 = vmatprep.mubr.bf16.mxu0 0
      %2685 = vmatmul.mubr.bf16.gmra.mxu0 %v2547
      %v2686 = vpop.f32.mrf.mxu0
      %v2687 = vadd.f32 0.0, %v2686
      %v2688 = vpop.f32.mrf.mxu0
      %v2689 = vpop.f32.mrf.mxu0
      %v2690 = vadd.f32 0.0, %v2689
      %v2691 = vpop.f32.mrf.mxu0
      %2692 = vmatprep.mubr.bf16.mxu0 0
      %2693 = vmatmul.mubr.bf16.gmra.mxu0 %v2550
      %v2694 = vpop.f32.mrf.mxu0
      %v2695 = vadd.f32 0.0, %v2694
      %v2696 = vpop.f32.mrf.mxu0
      %v2697 = vpop.f32.mrf.mxu0
      %v2698 = vadd.f32 0.0, %v2697
      %v2699 = vpop.f32.mrf.mxu0
      %2700 = vmatprep.mubr.bf16.mxu0 0
      %2701 = vmatmul.mubr.bf16.gmra.mxu0 %v2553
      %v2702 = vpop.f32.mrf.mxu0
      %v2703 = vadd.f32 0.0, %v2702
      %v2704 = vpop.f32.mrf.mxu0
      %v2705 = vpop.f32.mrf.mxu0
      %v2706 = vadd.f32 0.0, %v2705
      %v2707 = vpop.f32.mrf.mxu0
      %2708 = vmatprep.mubr.bf16.mxu0 0
      %2709 = vmatmul.mubr.bf16.gmra.mxu0 %v2556
      %v2710 = vpop.f32.mrf.mxu0
      %v2711 = vadd.f32 0.0, %v2710
      %v2712 = vpop.f32.mrf.mxu0
      %v2713 = vpop.f32.mrf.mxu0
      %v2714 = vadd.f32 0.0, %v2713
      %v2715 = vpop.f32.mrf.mxu0
      %2716 = vmatprep.mubr.bf16.mxu0 0
      %2717 = vmatmul.mubr.bf16.gmra.mxu0 %v2559
      %v2718 = vpop.f32.mrf.mxu0
      %v2719 = vadd.f32 0.0, %v2718
      %v2720 = vpop.f32.mrf.mxu0
      %v2721 = vpop.f32.mrf.mxu0
      %v2722 = vadd.f32 0.0, %v2721
      %v2723 = vpop.f32.mrf.mxu0
      %2724 = vdwg.mxu0
      %v2725 = vadd.f32 %v2431, %v2599
      %v2726 = vadd.f32 %v2432, %v2602
      %v2727 = vadd.f32 %v2433, %v2607
      %v2728 = vadd.f32 %v2434, %v2610
      %v2729 = vadd.f32 %v2435, %v2615
      %v2730 = vadd.f32 %v2436, %v2618
      %v2731 = vadd.f32 %v2437, %v2623
      %v2732 = vadd.f32 %v2438, %v2626
      %v2733 = vadd.f32 %v2439, %v2631
      %v2734 = vadd.f32 %v2440, %v2634
      %v2735 = vadd.f32 %v2441, %v2639
      %v2736 = vadd.f32 %v2442, %v2642
      %v2737 = vadd.f32 %v2443, %v2647
      %v2738 = vadd.f32 %v2444, %v2650
      %v2739 = vadd.f32 %v2445, %v2655
      %v2740 = vadd.f32 %v2446, %v2658
      %v2741 = vadd.f32 %v2447, %v2663
      %v2742 = vadd.f32 %v2448, %v2666
      %v2743 = vadd.f32 %v2449, %v2671
      %v2744 = vadd.f32 %v2450, %v2674
      %v2745 = vadd.f32 %v2451, %v2679
      %v2746 = vadd.f32 %v2452, %v2682
      %v2747 = vadd.f32 %v2453, %v2687
      %v2748 = vadd.f32 %v2454, %v2690
      %v2749 = vadd.f32 %v2455, %v2695
      %v2750 = vadd.f32 %v2456, %v2698
      %v2751 = vadd.f32 %v2457, %v2703
      %v2752 = vadd.f32 %v2458, %v2706
      %v2753 = vadd.f32 %v2459, %v2711
      %v2754 = vadd.f32 %v2460, %v2714
      %v2755 = vadd.f32 %v2461, %v2719
      %v2756 = vadd.f32 %v2462, %v2722
      %v2757 = vmax.f32 %v2725, 0.0
      %v2758 = vmax.f32 %v2726, 0.0
      %v2759 = vmax.f32 %v2727, 0.0
      %v2760 = vmax.f32 %v2728, 0.0
      %v2761 = vmax.f32 %v2729, 0.0
      %v2762 = vmax.f32 %v2730, 0.0
      %v2763 = vmax.f32 %v2731, 0.0
      %v2764 = vmax.f32 %v2732, 0.0
      %v2765 = vmax.f32 %v2733, 0.0
      %v2766 = vmax.f32 %v2734, 0.0
      %v2767 = vmax.f32 %v2735, 0.0
      %v2768 = vmax.f32 %v2736, 0.0
      %v2769 = vmax.f32 %v2737, 0.0
      %v2770 = vmax.f32 %v2738, 0.0
      %v2771 = vmax.f32 %v2739, 0.0
      %v2772 = vmax.f32 %v2740, 0.0
      %v2773 = vmax.f32 %v2741, 0.0
      %v2774 = vmax.f32 %v2742, 0.0
      %v2775 = vmax.f32 %v2743, 0.0
      %v2776 = vmax.f32 %v2744, 0.0
      %v2777 = vmax.f32 %v2745, 0.0
      %v2778 = vmax.f32 %v2746, 0.0
      %v2779 = vmax.f32 %v2747, 0.0
      %v2780 = vmax.f32 %v2748, 0.0
      %v2781 = vmax.f32 %v2749, 0.0
      %v2782 = vmax.f32 %v2750, 0.0
      %v2783 = vmax.f32 %v2751, 0.0
      %v2784 = vmax.f32 %v2752, 0.0
      %v2785 = vmax.f32 %v2753, 0.0
      %v2786 = vmax.f32 %v2754, 0.0
      %v2787 = vmax.f32 %v2755, 0.0
      %v2788 = vmax.f32 %v2756, 0.0
      %vm2789 = vcmask 64512
      %2790 = vst.msk [vmem:[#allocation2] sm:$0xff] %vm2789, 0.0
      %2791 = vst.msk [vmem:[#allocation2 + $0x8] sm:$0xff] %vm2789, 0.0
      %2792 = vst.msk [vmem:[#allocation2 + $0x10] sm:$0xff] %vm2789, 0.0
      %2793 = vst.msk [vmem:[#allocation2 + $0x18] sm:$0xff] %vm2789, 0.0
      %2794 = vst.msk [vmem:[#allocation2 + $0x20] sm:$0xff] %vm2789, 0.0
      %2795 = vst.msk [vmem:[#allocation2 + $0x28] sm:$0xff] %vm2789, 0.0
      %2796 = vst.msk [vmem:[#allocation2 + $0x30] sm:$0xff] %vm2789, 0.0
      %2797 = vst.msk [vmem:[#allocation2 + $0x38] sm:$0xff] %vm2789, 0.0
      %2798 = vst.msk [vmem:[#allocation2 + $0x40] sm:$0xff] %vm2789, 0.0
      %2799 = vst.msk [vmem:[#allocation2 + $0x48] sm:$0xff] %vm2789, 0.0
      %2800 = vst.msk [vmem:[#allocation2 + $0x50] sm:$0xff] %vm2789, 0.0
      %2801 = vst.msk [vmem:[#allocation2 + $0x58] sm:$0xff] %vm2789, 0.0
      %2802 = vst.msk [vmem:[#allocation2 + $0x60] sm:$0xff] %vm2789, 0.0
      %2803 = vst.msk [vmem:[#allocation2 + $0x68] sm:$0xff] %vm2789, 0.0
      %2804 = vst.msk [vmem:[#allocation2 + $0x70] sm:$0xff] %vm2789, 0.0
      %2805 = vst.msk [vmem:[#allocation2 + $0x78] sm:$0xff] %vm2789, 0.0
      %2806 = vst.msk [vmem:[#allocation2 + $0x80] sm:$0xff] %vm2789, 0.0
      %2807 = vst.msk [vmem:[#allocation2 + $0x88] sm:$0xff] %vm2789, 0.0
      %2808 = vst.msk [vmem:[#allocation2 + $0x90] sm:$0xff] %vm2789, 0.0
      %2809 = vst.msk [vmem:[#allocation2 + $0x98] sm:$0xff] %vm2789, 0.0
      %2810 = vst.msk [vmem:[#allocation2 + $0xa0] sm:$0xff] %vm2789, 0.0
      %2811 = vst.msk [vmem:[#allocation2 + $0xa8] sm:$0xff] %vm2789, 0.0
      %2812 = vst.msk [vmem:[#allocation2 + $0xb0] sm:$0xff] %vm2789, 0.0
      %2813 = vst.msk [vmem:[#allocation2 + $0xb8] sm:$0xff] %vm2789, 0.0
      %2814 = vst.msk [vmem:[#allocation2 + $0xc0] sm:$0xff] %vm2789, 0.0
      %2815 = vst.msk [vmem:[#allocation2 + $0xc8] sm:$0xff] %vm2789, 0.0
      %2816 = vst.msk [vmem:[#allocation2 + $0xd0] sm:$0xff] %vm2789, 0.0
      %2817 = vst.msk [vmem:[#allocation2 + $0xd8] sm:$0xff] %vm2789, 0.0
      %2818 = vst.msk [vmem:[#allocation2 + $0xe0] sm:$0xff] %vm2789, 0.0
      %2819 = vst.msk [vmem:[#allocation2 + $0xe8] sm:$0xff] %vm2789, 0.0
      %2820 = vst.msk [vmem:[#allocation2 + $0xf0] sm:$0xff] %vm2789, 0.0
      %2821 = vst.msk [vmem:[#allocation2 + $0xf8] sm:$0xff] %vm2789, 0.0
      %2822 = vst.msk [vmem:[#allocation2 + $0x100] sm:$0xff] %vm2789, 0.0
      %2823 = vst.msk [vmem:[#allocation2 + $0x108] sm:$0xff] %vm2789, 0.0
      %2824 = vst.msk [vmem:[#allocation2 + $0x110] sm:$0xff] %vm2789, 0.0
      %2825 = vst.msk [vmem:[#allocation2 + $0x118] sm:$0xff] %vm2789, 0.0
      %2826 = vst.msk [vmem:[#allocation2 + $0x120] sm:$0xff] %vm2789, 0.0
      %2827 = vst.msk [vmem:[#allocation2 + $0x128] sm:$0xff] %vm2789, 0.0
      %2828 = vst.msk [vmem:[#allocation2 + $0x130] sm:$0xff] %vm2789, 0.0
      %2829 = vst.msk [vmem:[#allocation2 + $0x138] sm:$0xff] %vm2789, 0.0
      %2830 = vst.msk [vmem:[#allocation2 + $0x140] sm:$0xff] %vm2789, 0.0
      %2831 = vst.msk [vmem:[#allocation2 + $0x148] sm:$0xff] %vm2789, 0.0
      %2832 = vst.msk [vmem:[#allocation2 + $0x150] sm:$0xff] %vm2789, 0.0
      %2833 = vst.msk [vmem:[#allocation2 + $0x158] sm:$0xff] %vm2789, 0.0
      %2834 = vst.msk [vmem:[#allocation2 + $0x160] sm:$0xff] %vm2789, 0.0
      %2835 = vst.msk [vmem:[#allocation2 + $0x168] sm:$0xff] %vm2789, 0.0
      %2836 = vst.msk [vmem:[#allocation2 + $0x170] sm:$0xff] %vm2789, 0.0
      %2837 = vst.msk [vmem:[#allocation2 + $0x178] sm:$0xff] %vm2789, 0.0
      %2838 = vst.msk [vmem:[#allocation2 + $0x180] sm:$0xff] %vm2789, 0.0
      %2839 = vst.msk [vmem:[#allocation2 + $0x188] sm:$0xff] %vm2789, 0.0
      %2840 = vst.msk [vmem:[#allocation2 + $0x190] sm:$0xff] %vm2789, 0.0
      %2841 = vst.msk [vmem:[#allocation2 + $0x198] sm:$0xff] %vm2789, 0.0
      %2842 = vst.msk [vmem:[#allocation2 + $0x1a0] sm:$0xff] %vm2789, 0.0
      %2843 = vst.msk [vmem:[#allocation2 + $0x1a8] sm:$0xff] %vm2789, 0.0
      %2844 = vst.msk [vmem:[#allocation2 + $0x1b0] sm:$0xff] %vm2789, 0.0
      %2845 = vst.msk [vmem:[#allocation2 + $0x1b8] sm:$0xff] %vm2789, 0.0
      %2846 = vst.msk [vmem:[#allocation2 + $0x1c0] sm:$0xff] %vm2789, 0.0
      %2847 = vst.msk [vmem:[#allocation2 + $0x1c8] sm:$0xff] %vm2789, 0.0
      %2848 = vst.msk [vmem:[#allocation2 + $0x1d0] sm:$0xff] %vm2789, 0.0
      %2849 = vst.msk [vmem:[#allocation2 + $0x1d8] sm:$0xff] %vm2789, 0.0
      %2850 = vst.msk [vmem:[#allocation2 + $0x1e0] sm:$0xff] %vm2789, 0.0
      %2851 = vst.msk [vmem:[#allocation2 + $0x1e8] sm:$0xff] %vm2789, 0.0
      %2852 = vst.msk [vmem:[#allocation2 + $0x1f0] sm:$0xff] %vm2789, 0.0
      %2853 = vst.msk [vmem:[#allocation2 + $0x1f8] sm:$0xff] %vm2789, 0.0
      %2854 = vst.msk [vmem:[#allocation2 + $0x200] sm:$0xff] %vm2789, 0.0
      %2855 = vst.msk [vmem:[#allocation2 + $0x208] sm:$0xff] %vm2789, 0.0
      %2856 = vst.msk [vmem:[#allocation2 + $0x210] sm:$0xff] %vm2789, 0.0
      %2857 = vst.msk [vmem:[#allocation2 + $0x218] sm:$0xff] %vm2789, 0.0
      %2858 = vst.msk [vmem:[#allocation2 + $0x220] sm:$0xff] %vm2789, 0.0
      %2859 = vst.msk [vmem:[#allocation2 + $0x228] sm:$0xff] %vm2789, 0.0
      %2860 = vst.msk [vmem:[#allocation2 + $0x230] sm:$0xff] %vm2789, 0.0
      %2861 = vst.msk [vmem:[#allocation2 + $0x238] sm:$0xff] %vm2789, 0.0
      %s2862 = scalar_lea.vmem [#allocation2], 32
      %2863 = vst.msk [vmem:[%s2862 + $0x8] sm:$0xff] %vm2789, %v2757
      %2864 = vst.msk [vmem:[%s2862 + $0x10] sm:$0xff] %vm2789, %v2758
      %2865 = vst.msk [vmem:[%s2862 + $0x28] sm:$0xff] %vm2789, %v2759
      %2866 = vst.msk [vmem:[%s2862 + $0x30] sm:$0xff] %vm2789, %v2760
      %2867 = vst.msk [vmem:[%s2862 + $0x48] sm:$0xff] %vm2789, %v2761
      %2868 = vst.msk [vmem:[%s2862 + $0x50] sm:$0xff] %vm2789, %v2762
      %2869 = vst.msk [vmem:[%s2862 + $0x68] sm:$0xff] %vm2789, %v2763
      %2870 = vst.msk [vmem:[%s2862 + $0x70] sm:$0xff] %vm2789, %v2764
      %2871 = vst.msk [vmem:[%s2862 + $0x88] sm:$0xff] %vm2789, %v2765
      %2872 = vst.msk [vmem:[%s2862 + $0x90] sm:$0xff] %vm2789, %v2766
      %2873 = vst.msk [vmem:[%s2862 + $0xa8] sm:$0xff] %vm2789, %v2767
      %2874 = vst.msk [vmem:[%s2862 + $0xb0] sm:$0xff] %vm2789, %v2768
      %2875 = vst.msk [vmem:[%s2862 + $0xc8] sm:$0xff] %vm2789, %v2769
      %2876 = vst.msk [vmem:[%s2862 + $0xd0] sm:$0xff] %vm2789, %v2770
      %2877 = vst.msk [vmem:[%s2862 + $0xe8] sm:$0xff] %vm2789, %v2771
      %2878 = vst.msk [vmem:[%s2862 + $0xf0] sm:$0xff] %vm2789, %v2772
      %2879 = vst.msk [vmem:[%s2862 + $0x108] sm:$0xff] %vm2789, %v2773
      %2880 = vst.msk [vmem:[%s2862 + $0x110] sm:$0xff] %vm2789, %v2774
      %2881 = vst.msk [vmem:[%s2862 + $0x128] sm:$0xff] %vm2789, %v2775
      %2882 = vst.msk [vmem:[%s2862 + $0x130] sm:$0xff] %vm2789, %v2776
      %2883 = vst.msk [vmem:[%s2862 + $0x148] sm:$0xff] %vm2789, %v2777
      %2884 = vst.msk [vmem:[%s2862 + $0x150] sm:$0xff] %vm2789, %v2778
      %2885 = vst.msk [vmem:[%s2862 + $0x168] sm:$0xff] %vm2789, %v2779
      %2886 = vst.msk [vmem:[%s2862 + $0x170] sm:$0xff] %vm2789, %v2780
      %2887 = vst.msk [vmem:[%s2862 + $0x188] sm:$0xff] %vm2789, %v2781
      %2888 = vst.msk [vmem:[%s2862 + $0x190] sm:$0xff] %vm2789, %v2782
      %2889 = vst.msk [vmem:[%s2862 + $0x1a8] sm:$0xff] %vm2789, %v2783
      %2890 = vst.msk [vmem:[%s2862 + $0x1b0] sm:$0xff] %vm2789, %v2784
      %2891 = vst.msk [vmem:[%s2862 + $0x1c8] sm:$0xff] %vm2789, %v2785
      %2892 = vst.msk [vmem:[%s2862 + $0x1d0] sm:$0xff] %vm2789, %v2786
      %2893 = vst.msk [vmem:[%s2862 + $0x1e8] sm:$0xff] %vm2789, %v2787
      %2894 = vst.msk [vmem:[%s2862 + $0x1f0] sm:$0xff] %vm2789, %v2788
      %v2895 = vld [vmem:[#allocation2 + $0x7] sm:$0xff]
      %v2896 = vld [vmem:[#allocation2 + $0xf] sm:$0xff]
      %v2897 = vld [vmem:[#allocation2 + $0x27] sm:$0xff]
      %v2898 = vld [vmem:[#allocation2 + $0x2f] sm:$0xff]
      %v2899 = vld [vmem:[#allocation2 + $0x47] sm:$0xff]
      %v2900 = vld [vmem:[#allocation2 + $0x4f] sm:$0xff]
      %v2901 = vld [vmem:[#allocation2 + $0x67] sm:$0xff]
      %v2902 = vld [vmem:[#allocation2 + $0x6f] sm:$0xff]
      %v2903 = vld [vmem:[#allocation2 + $0x87] sm:$0xff]
      %v2904 = vld [vmem:[#allocation2 + $0x8f] sm:$0xff]
      %v2905 = vld [vmem:[#allocation2 + $0xa7] sm:$0xff]
      %v2906 = vld [vmem:[#allocation2 + $0xaf] sm:$0xff]
      %v2907 = vld [vmem:[#allocation2 + $0xc7] sm:$0xff]
      %v2908 = vld [vmem:[#allocation2 + $0xcf] sm:$0xff]
      %v2909 = vld [vmem:[#allocation2 + $0xe7] sm:$0xff]
      %v2910 = vld [vmem:[#allocation2 + $0xef] sm:$0xff]
      %v2911 = vld [vmem:[#allocation2 + $0x107] sm:$0xff]
      %v2912 = vld [vmem:[#allocation2 + $0x10f] sm:$0xff]
      %v2913 = vld [vmem:[#allocation2 + $0x127] sm:$0xff]
      %v2914 = vld [vmem:[#allocation2 + $0x12f] sm:$0xff]
      %v2915 = vld [vmem:[#allocation2 + $0x147] sm:$0xff]
      %v2916 = vld [vmem:[#allocation2 + $0x14f] sm:$0xff]
      %v2917 = vld [vmem:[#allocation2 + $0x167] sm:$0xff]
      %v2918 = vld [vmem:[#allocation2 + $0x16f] sm:$0xff]
      %v2919 = vld [vmem:[#allocation2 + $0x187] sm:$0xff]
      %v2920 = vld [vmem:[#allocation2 + $0x18f] sm:$0xff]
      %v2921 = vld [vmem:[#allocation2 + $0x1a7] sm:$0xff]
      %v2922 = vld [vmem:[#allocation2 + $0x1af] sm:$0xff]
      %v2923 = vld [vmem:[#allocation2 + $0x1c7] sm:$0xff]
      %v2924 = vld [vmem:[#allocation2 + $0x1cf] sm:$0xff]
      %v2925 = vld [vmem:[#allocation2 + $0x1e7] sm:$0xff]
      %v2926 = vld [vmem:[#allocation2 + $0x1ef] sm:$0xff]
      %v2927 = vpack.c.bf16 %v2896, %v2895
      %v2928 = vpack.c.bf16 %v2898, %v2897
      %v2929 = vpack.c.bf16 %v2900, %v2899
      %v2930 = vpack.c.bf16 %v2902, %v2901
      %v2931 = vpack.c.bf16 %v2904, %v2903
      %v2932 = vpack.c.bf16 %v2906, %v2905
      %v2933 = vpack.c.bf16 %v2908, %v2907
      %v2934 = vpack.c.bf16 %v2910, %v2909
      %v2935 = vpack.c.bf16 %v2912, %v2911
      %v2936 = vpack.c.bf16 %v2914, %v2913
      %v2937 = vpack.c.bf16 %v2916, %v2915
      %v2938 = vpack.c.bf16 %v2918, %v2917
      %v2939 = vpack.c.bf16 %v2920, %v2919
      %v2940 = vpack.c.bf16 %v2922, %v2921
      %v2941 = vpack.c.bf16 %v2924, %v2923
      %v2942 = vpack.c.bf16 %v2926, %v2925
      %v2943 = vld [vmem:[%s2] sm:$0xf]
      %v2944 = vld [vmem:[#allocation2 + $0x8] sm:$0xff]
      %v2945 = vld [vmem:[#allocation2 + $0x10] sm:$0xff]
      %v2946 = vld [vmem:[#allocation2 + $0x28] sm:$0xff]
      %v2947 = vld [vmem:[#allocation2 + $0x30] sm:$0xff]
      %v2948 = vld [vmem:[#allocation2 + $0x48] sm:$0xff]
      %v2949 = vld [vmem:[#allocation2 + $0x50] sm:$0xff]
      %v2950 = vld [vmem:[#allocation2 + $0x68] sm:$0xff]
      %v2951 = vld [vmem:[#allocation2 + $0x70] sm:$0xff]
      %v2952 = vld [vmem:[#allocation2 + $0x88] sm:$0xff]
      %v2953 = vld [vmem:[#allocation2 + $0x90] sm:$0xff]
      %v2954 = vld [vmem:[#allocation2 + $0xa8] sm:$0xff]
      %v2955 = vld [vmem:[#allocation2 + $0xb0] sm:$0xff]
      %v2956 = vld [vmem:[#allocation2 + $0xc8] sm:$0xff]
      %v2957 = vld [vmem:[#allocation2 + $0xd0] sm:$0xff]
      %v2958 = vld [vmem:[#allocation2 + $0xe8] sm:$0xff]
      %v2959 = vld [vmem:[#allocation2 + $0xf0] sm:$0xff]
      %v2960 = vld [vmem:[#allocation2 + $0x108] sm:$0xff]
      %v2961 = vld [vmem:[#allocation2 + $0x110] sm:$0xff]
      %v2962 = vld [vmem:[#allocation2 + $0x128] sm:$0xff]
      %v2963 = vld [vmem:[#allocation2 + $0x130] sm:$0xff]
      %v2964 = vld [vmem:[#allocation2 + $0x148] sm:$0xff]
      %v2965 = vld [vmem:[#allocation2 + $0x150] sm:$0xff]
      %v2966 = vld [vmem:[#allocation2 + $0x168] sm:$0xff]
      %v2967 = vld [vmem:[#allocation2 + $0x170] sm:$0xff]
      %v2968 = vld [vmem:[#allocation2 + $0x188] sm:$0xff]
      %v2969 = vld [vmem:[#allocation2 + $0x190] sm:$0xff]
      %v2970 = vld [vmem:[#allocation2 + $0x1a8] sm:$0xff]
      %v2971 = vld [vmem:[#allocation2 + $0x1b0] sm:$0xff]
      %v2972 = vld [vmem:[#allocation2 + $0x1c8] sm:$0xff]
      %v2973 = vld [vmem:[#allocation2 + $0x1d0] sm:$0xff]
      %v2974 = vld [vmem:[#allocation2 + $0x1e8] sm:$0xff]
      %v2975 = vld [vmem:[#allocation2 + $0x1f0] sm:$0xff]
      %v2976 = vpack.c.bf16 %v2945, %v2944
      %v2977 = vpack.c.bf16 %v2947, %v2946
      %v2978 = vpack.c.bf16 %v2949, %v2948
      %v2979 = vpack.c.bf16 %v2951, %v2950
      %v2980 = vpack.c.bf16 %v2953, %v2952
      %v2981 = vpack.c.bf16 %v2955, %v2954
      %v2982 = vpack.c.bf16 %v2957, %v2956
      %v2983 = vpack.c.bf16 %v2959, %v2958
      %v2984 = vpack.c.bf16 %v2961, %v2960
      %v2985 = vpack.c.bf16 %v2963, %v2962
      %v2986 = vpack.c.bf16 %v2965, %v2964
      %v2987 = vpack.c.bf16 %v2967, %v2966
      %v2988 = vpack.c.bf16 %v2969, %v2968
      %v2989 = vpack.c.bf16 %v2971, %v2970
      %v2990 = vpack.c.bf16 %v2973, %v2972
      %v2991 = vpack.c.bf16 %v2975, %v2974
      %s2992 = scalar_lea.vmem %s2, 4
      %v2993 = vld [vmem:[%s2992] sm:$0xf]
      %v2995 = vsel %vm2789, %v2976, 0
      %v2998 = vsel %vm2789, %v2977, 0
      %v3001 = vsel %vm2789, %v2978, 0
      %v3004 = vsel %vm2789, %v2979, 0
      %v3007 = vsel %vm2789, %v2980, 0
      %v3010 = vsel %vm2789, %v2981, 0
      %v3013 = vsel %vm2789, %v2982, 0
      %v3016 = vsel %vm2789, %v2983, 0
      %v3019 = vsel %vm2789, %v2984, 0
      %v3022 = vsel %vm2789, %v2985, 0
      %v3025 = vsel %vm2789, %v2986, 0
      %v3028 = vsel %vm2789, %v2987, 0
      %v3031 = vsel %vm2789, %v2988, 0
      %v3034 = vsel %vm2789, %v2989, 0
      %v3037 = vsel %vm2789, %v2990, 0
      %v3040 = vsel %vm2789, %v2991, 0
      %vm3042 = vcmask 1043456
      %v3044 = vsel %vm3042, %v2993, 0
      %3046 = vmatprep.subr.bf16.mxu0 0
      %3047 = vmatpush1.bf16.msra.mxu0 0
      %3048 = vmatprep.subr.bf16.mxu0 0
      %3049 = vmatpush1.bf16.msra.mxu0 0
      %3050 = vmatprep.subr.bf16.mxu0 0
      %3051 = vmatpush1.bf16.msra.mxu0 0
      %3052 = vmatprep.subr.bf16.mxu0 0
      %3053 = vmatpush1.bf16.msra.mxu0 0
      %3054 = vmatprep.subr.bf16.mxu0 0
      %3055 = vmatpush1.bf16.msra.mxu0 0
      %3056 = vmatprep.subr.bf16.mxu0 0
      %3057 = vmatpush1.bf16.msra.mxu0 0
      %3058 = vmatprep.subr.bf16.mxu0 0
      %3059 = vmatpush1.bf16.msra.mxu0 0
      %3060 = vmatprep.subr.bf16.mxu0 0
      %3061 = vmatpush1.bf16.msra.mxu0 %v3044
      %3062 = vmatprep.subr.bf16.mxu0 0
      %3063 = vmatpush2.bf16.msra.mxu0 0
      %3064 = vmatprep.subr.bf16.mxu0 0
      %3065 = vmatpush2.bf16.msra.mxu0 0
      %3066 = vmatprep.subr.bf16.mxu0 0
      %3067 = vmatpush2.bf16.msra.mxu0 0
      %3068 = vmatprep.subr.bf16.mxu0 0
      %3069 = vmatpush2.bf16.msra.mxu0 0
      %3070 = vmatprep.subr.bf16.mxu0 0
      %3071 = vmatpush2.bf16.msra.mxu0 0
      %3072 = vmatprep.subr.bf16.mxu0 0
      %3073 = vmatpush2.bf16.msra.mxu0 0
      %3074 = vmatprep.subr.bf16.mxu0 0
      %3075 = vmatpush2.bf16.msra.mxu0 0
      %3076 = vmatprep.subr.bf16.mxu0 0
      %3077 = vmatpush2.bf16.msra.mxu0 0
      %3078 = vmatprep.mubr.bf16.mxu0 0
      %3079 = vmatmul.mubr.bf16.gmra.mxu0 %v2995
      %v3080 = vpop.f32.mrf.mxu0
      %v3081 = vadd.f32 0.0, %v3080
      %v3082 = vpop.f32.mrf.mxu0
      %v3083 = vpop.f32.mrf.mxu0
      %v3084 = vadd.f32 0.0, %v3083
      %v3085 = vpop.f32.mrf.mxu0
      %3086 = vmatprep.mubr.bf16.mxu0 0
      %3087 = vmatmul.mubr.bf16.gmra.mxu0 %v2998
      %v3088 = vpop.f32.mrf.mxu0
      %v3089 = vadd.f32 0.0, %v3088
      %v3090 = vpop.f32.mrf.mxu0
      %v3091 = vpop.f32.mrf.mxu0
      %v3092 = vadd.f32 0.0, %v3091
      %v3093 = vpop.f32.mrf.mxu0
      %3094 = vmatprep.mubr.bf16.mxu0 0
      %3095 = vmatmul.mubr.bf16.gmra.mxu0 %v3001
      %v3096 = vpop.f32.mrf.mxu0
      %v3097 = vadd.f32 0.0, %v3096
      %v3098 = vpop.f32.mrf.mxu0
      %v3099 = vpop.f32.mrf.mxu0
      %v3100 = vadd.f32 0.0, %v3099
      %v3101 = vpop.f32.mrf.mxu0
      %3102 = vmatprep.mubr.bf16.mxu0 0
      %3103 = vmatmul.mubr.bf16.gmra.mxu0 %v3004
      %v3104 = vpop.f32.mrf.mxu0
      %v3105 = vadd.f32 0.0, %v3104
      %v3106 = vpop.f32.mrf.mxu0
      %v3107 = vpop.f32.mrf.mxu0
      %v3108 = vadd.f32 0.0, %v3107
      %v3109 = vpop.f32.mrf.mxu0
      %3110 = vmatprep.mubr.bf16.mxu0 0
      %3111 = vmatmul.mubr.bf16.gmra.mxu0 %v3007
      %v3112 = vpop.f32.mrf.mxu0
      %v3113 = vadd.f32 0.0, %v3112
      %v3114 = vpop.f32.mrf.mxu0
      %v3115 = vpop.f32.mrf.mxu0
      %v3116 = vadd.f32 0.0, %v3115
      %v3117 = vpop.f32.mrf.mxu0
      %3118 = vmatprep.mubr.bf16.mxu0 0
      %3119 = vmatmul.mubr.bf16.gmra.mxu0 %v3010
      %v3120 = vpop.f32.mrf.mxu0
      %v3121 = vadd.f32 0.0, %v3120
      %v3122 = vpop.f32.mrf.mxu0
      %v3123 = vpop.f32.mrf.mxu0
      %v3124 = vadd.f32 0.0, %v3123
      %v3125 = vpop.f32.mrf.mxu0
      %3126 = vmatprep.mubr.bf16.mxu0 0
      %3127 = vmatmul.mubr.bf16.gmra.mxu0 %v3013
      %v3128 = vpop.f32.mrf.mxu0
      %v3129 = vadd.f32 0.0, %v3128
      %v3130 = vpop.f32.mrf.mxu0
      %v3131 = vpop.f32.mrf.mxu0
      %v3132 = vadd.f32 0.0, %v3131
      %v3133 = vpop.f32.mrf.mxu0
      %3134 = vmatprep.mubr.bf16.mxu0 0
      %3135 = vmatmul.mubr.bf16.gmra.mxu0 %v3016
      %v3136 = vpop.f32.mrf.mxu0
      %v3137 = vadd.f32 0.0, %v3136
      %v3138 = vpop.f32.mrf.mxu0
      %v3139 = vpop.f32.mrf.mxu0
      %v3140 = vadd.f32 0.0, %v3139
      %v3141 = vpop.f32.mrf.mxu0
      %3142 = vmatprep.mubr.bf16.mxu0 0
      %3143 = vmatmul.mubr.bf16.gmra.mxu0 %v3019
      %v3144 = vpop.f32.mrf.mxu0
      %v3145 = vadd.f32 0.0, %v3144
      %v3146 = vpop.f32.mrf.mxu0
      %v3147 = vpop.f32.mrf.mxu0
      %v3148 = vadd.f32 0.0, %v3147
      %v3149 = vpop.f32.mrf.mxu0
      %3150 = vmatprep.mubr.bf16.mxu0 0
      %3151 = vmatmul.mubr.bf16.gmra.mxu0 %v3022
      %v3152 = vpop.f32.mrf.mxu0
      %v3153 = vadd.f32 0.0, %v3152
      %v3154 = vpop.f32.mrf.mxu0
      %v3155 = vpop.f32.mrf.mxu0
      %v3156 = vadd.f32 0.0, %v3155
      %v3157 = vpop.f32.mrf.mxu0
      %3158 = vmatprep.mubr.bf16.mxu0 0
      %3159 = vmatmul.mubr.bf16.gmra.mxu0 %v3025
      %v3160 = vpop.f32.mrf.mxu0
      %v3161 = vadd.f32 0.0, %v3160
      %v3162 = vpop.f32.mrf.mxu0
      %v3163 = vpop.f32.mrf.mxu0
      %v3164 = vadd.f32 0.0, %v3163
      %v3165 = vpop.f32.mrf.mxu0
      %3166 = vmatprep.mubr.bf16.mxu0 0
      %3167 = vmatmul.mubr.bf16.gmra.mxu0 %v3028
      %v3168 = vpop.f32.mrf.mxu0
      %v3169 = vadd.f32 0.0, %v3168
      %v3170 = vpop.f32.mrf.mxu0
      %v3171 = vpop.f32.mrf.mxu0
      %v3172 = vadd.f32 0.0, %v3171
      %v3173 = vpop.f32.mrf.mxu0
      %3174 = vmatprep.mubr.bf16.mxu0 0
      %3175 = vmatmul.mubr.bf16.gmra.mxu0 %v3031
      %v3176 = vpop.f32.mrf.mxu0
      %v3177 = vadd.f32 0.0, %v3176
      %v3178 = vpop.f32.mrf.mxu0
      %v3179 = vpop.f32.mrf.mxu0
      %v3180 = vadd.f32 0.0, %v3179
      %v3181 = vpop.f32.mrf.mxu0
      %3182 = vmatprep.mubr.bf16.mxu0 0
      %3183 = vmatmul.mubr.bf16.gmra.mxu0 %v3034
      %v3184 = vpop.f32.mrf.mxu0
      %v3185 = vadd.f32 0.0, %v3184
      %v3186 = vpop.f32.mrf.mxu0
      %v3187 = vpop.f32.mrf.mxu0
      %v3188 = vadd.f32 0.0, %v3187
      %v3189 = vpop.f32.mrf.mxu0
      %3190 = vmatprep.mubr.bf16.mxu0 0
      %3191 = vmatmul.mubr.bf16.gmra.mxu0 %v3037
      %v3192 = vpop.f32.mrf.mxu0
      %v3193 = vadd.f32 0.0, %v3192
      %v3194 = vpop.f32.mrf.mxu0
      %v3195 = vpop.f32.mrf.mxu0
      %v3196 = vadd.f32 0.0, %v3195
      %v3197 = vpop.f32.mrf.mxu0
      %3198 = vmatprep.mubr.bf16.mxu0 0
      %3199 = vmatmul.mubr.bf16.gmra.mxu0 %v3040
      %v3200 = vpop.f32.mrf.mxu0
      %v3201 = vadd.f32 0.0, %v3200
      %v3202 = vpop.f32.mrf.mxu0
      %v3203 = vpop.f32.mrf.mxu0
      %v3204 = vadd.f32 0.0, %v3203
      %v3205 = vpop.f32.mrf.mxu0
      %3206 = vdwg.mxu0
      %v3208 = vsel %vm2789, %v2927, 0
      %v3211 = vsel %vm2789, %v2928, 0
      %v3214 = vsel %vm2789, %v2929, 0
      %v3217 = vsel %vm2789, %v2930, 0
      %v3220 = vsel %vm2789, %v2931, 0
      %v3223 = vsel %vm2789, %v2932, 0
      %v3226 = vsel %vm2789, %v2933, 0
      %v3229 = vsel %vm2789, %v2934, 0
      %v3232 = vsel %vm2789, %v2935, 0
      %v3235 = vsel %vm2789, %v2936, 0
      %v3238 = vsel %vm2789, %v2937, 0
      %v3241 = vsel %vm2789, %v2938, 0
      %v3244 = vsel %vm2789, %v2939, 0
      %v3247 = vsel %vm2789, %v2940, 0
      %v3250 = vsel %vm2789, %v2941, 0
      %v3253 = vsel %vm2789, %v2942, 0
      %v3256 = vsel %vm3042, %v2943, 0
      %3258 = vmatprep.subr.bf16.mxu0 0
      %3259 = vmatpush1.bf16.msra.mxu0 0
      %3260 = vmatprep.subr.bf16.mxu0 0
      %3261 = vmatpush1.bf16.msra.mxu0 0
      %3262 = vmatprep.subr.bf16.mxu0 0
      %3263 = vmatpush1.bf16.msra.mxu0 0
      %3264 = vmatprep.subr.bf16.mxu0 0
      %3265 = vmatpush1.bf16.msra.mxu0 0
      %3266 = vmatprep.subr.bf16.mxu0 0
      %3267 = vmatpush1.bf16.msra.mxu0 0
      %3268 = vmatprep.subr.bf16.mxu0 0
      %3269 = vmatpush1.bf16.msra.mxu0 0
      %3270 = vmatprep.subr.bf16.mxu0 0
      %3271 = vmatpush1.bf16.msra.mxu0 0
      %3272 = vmatprep.subr.bf16.mxu0 0
      %3273 = vmatpush1.bf16.msra.mxu0 %v3256
      %3274 = vmatprep.subr.bf16.mxu0 0
      %3275 = vmatpush2.bf16.msra.mxu0 0
      %3276 = vmatprep.subr.bf16.mxu0 0
      %3277 = vmatpush2.bf16.msra.mxu0 0
      %3278 = vmatprep.subr.bf16.mxu0 0
      %3279 = vmatpush2.bf16.msra.mxu0 0
      %3280 = vmatprep.subr.bf16.mxu0 0
      %3281 = vmatpush2.bf16.msra.mxu0 0
      %3282 = vmatprep.subr.bf16.mxu0 0
      %3283 = vmatpush2.bf16.msra.mxu0 0
      %3284 = vmatprep.subr.bf16.mxu0 0
      %3285 = vmatpush2.bf16.msra.mxu0 0
      %3286 = vmatprep.subr.bf16.mxu0 0
      %3287 = vmatpush2.bf16.msra.mxu0 0
      %3288 = vmatprep.subr.bf16.mxu0 0
      %3289 = vmatpush2.bf16.msra.mxu0 0
      %3290 = vmatprep.mubr.bf16.mxu0 0
      %3291 = vmatmul.mubr.bf16.gmra.mxu0 %v3208
      %v3292 = vpop.f32.mrf.mxu0
      %v3293 = vadd.f32 %v3081, %v3292
      %v3294 = vpop.f32.mrf.mxu0
      %v3295 = vpop.f32.mrf.mxu0
      %v3296 = vadd.f32 %v3084, %v3295
      %v3297 = vpop.f32.mrf.mxu0
      %3298 = vmatprep.mubr.bf16.mxu0 0
      %3299 = vmatmul.mubr.bf16.gmra.mxu0 %v3211
      %v3300 = vpop.f32.mrf.mxu0
      %v3301 = vadd.f32 %v3089, %v3300
      %v3302 = vpop.f32.mrf.mxu0
      %v3303 = vpop.f32.mrf.mxu0
      %v3304 = vadd.f32 %v3092, %v3303
      %v3305 = vpop.f32.mrf.mxu0
      %3306 = vmatprep.mubr.bf16.mxu0 0
      %3307 = vmatmul.mubr.bf16.gmra.mxu0 %v3214
      %v3308 = vpop.f32.mrf.mxu0
      %v3309 = vadd.f32 %v3097, %v3308
      %v3310 = vpop.f32.mrf.mxu0
      %v3311 = vpop.f32.mrf.mxu0
      %v3312 = vadd.f32 %v3100, %v3311
      %v3313 = vpop.f32.mrf.mxu0
      %3314 = vmatprep.mubr.bf16.mxu0 0
      %3315 = vmatmul.mubr.bf16.gmra.mxu0 %v3217
      %v3316 = vpop.f32.mrf.mxu0
      %v3317 = vadd.f32 %v3105, %v3316
      %v3318 = vpop.f32.mrf.mxu0
      %v3319 = vpop.f32.mrf.mxu0
      %v3320 = vadd.f32 %v3108, %v3319
      %v3321 = vpop.f32.mrf.mxu0
      %3322 = vmatprep.mubr.bf16.mxu0 0
      %3323 = vmatmul.mubr.bf16.gmra.mxu0 %v3220
      %v3324 = vpop.f32.mrf.mxu0
      %v3325 = vadd.f32 %v3113, %v3324
      %v3326 = vpop.f32.mrf.mxu0
      %v3327 = vpop.f32.mrf.mxu0
      %v3328 = vadd.f32 %v3116, %v3327
      %v3329 = vpop.f32.mrf.mxu0
      %3330 = vmatprep.mubr.bf16.mxu0 0
      %3331 = vmatmul.mubr.bf16.gmra.mxu0 %v3223
      %v3332 = vpop.f32.mrf.mxu0
      %v3333 = vadd.f32 %v3121, %v3332
      %v3334 = vpop.f32.mrf.mxu0
      %v3335 = vpop.f32.mrf.mxu0
      %v3336 = vadd.f32 %v3124, %v3335
      %v3337 = vpop.f32.mrf.mxu0
      %3338 = vmatprep.mubr.bf16.mxu0 0
      %3339 = vmatmul.mubr.bf16.gmra.mxu0 %v3226
      %v3340 = vpop.f32.mrf.mxu0
      %v3341 = vadd.f32 %v3129, %v3340
      %v3342 = vpop.f32.mrf.mxu0
      %v3343 = vpop.f32.mrf.mxu0
      %v3344 = vadd.f32 %v3132, %v3343
      %v3345 = vpop.f32.mrf.mxu0
      %3346 = vmatprep.mubr.bf16.mxu0 0
      %3347 = vmatmul.mubr.bf16.gmra.mxu0 %v3229
      %v3348 = vpop.f32.mrf.mxu0
      %v3349 = vadd.f32 %v3137, %v3348
      %v3350 = vpop.f32.mrf.mxu0
      %v3351 = vpop.f32.mrf.mxu0
      %v3352 = vadd.f32 %v3140, %v3351
      %v3353 = vpop.f32.mrf.mxu0
      %3354 = vmatprep.mubr.bf16.mxu0 0
      %3355 = vmatmul.mubr.bf16.gmra.mxu0 %v3232
      %v3356 = vpop.f32.mrf.mxu0
      %v3357 = vadd.f32 %v3145, %v3356
      %v3358 = vpop.f32.mrf.mxu0
      %v3359 = vpop.f32.mrf.mxu0
      %v3360 = vadd.f32 %v3148, %v3359
      %v3361 = vpop.f32.mrf.mxu0
      %3362 = vmatprep.mubr.bf16.mxu0 0
      %3363 = vmatmul.mubr.bf16.gmra.mxu0 %v3235
      %v3364 = vpop.f32.mrf.mxu0
      %v3365 = vadd.f32 %v3153, %v3364
      %v3366 = vpop.f32.mrf.mxu0
      %v3367 = vpop.f32.mrf.mxu0
      %v3368 = vadd.f32 %v3156, %v3367
      %v3369 = vpop.f32.mrf.mxu0
      %3370 = vmatprep.mubr.bf16.mxu0 0
      %3371 = vmatmul.mubr.bf16.gmra.mxu0 %v3238
      %v3372 = vpop.f32.mrf.mxu0
      %v3373 = vadd.f32 %v3161, %v3372
      %v3374 = vpop.f32.mrf.mxu0
      %v3375 = vpop.f32.mrf.mxu0
      %v3376 = vadd.f32 %v3164, %v3375
      %v3377 = vpop.f32.mrf.mxu0
      %3378 = vmatprep.mubr.bf16.mxu0 0
      %3379 = vmatmul.mubr.bf16.gmra.mxu0 %v3241
      %v3380 = vpop.f32.mrf.mxu0
      %v3381 = vadd.f32 %v3169, %v3380
      %v3382 = vpop.f32.mrf.mxu0
      %v3383 = vpop.f32.mrf.mxu0
      %v3384 = vadd.f32 %v3172, %v3383
      %v3385 = vpop.f32.mrf.mxu0
      %3386 = vmatprep.mubr.bf16.mxu0 0
      %3387 = vmatmul.mubr.bf16.gmra.mxu0 %v3244
      %v3388 = vpop.f32.mrf.mxu0
      %v3389 = vadd.f32 %v3177, %v3388
      %v3390 = vpop.f32.mrf.mxu0
      %v3391 = vpop.f32.mrf.mxu0
      %v3392 = vadd.f32 %v3180, %v3391
      %v3393 = vpop.f32.mrf.mxu0
      %3394 = vmatprep.mubr.bf16.mxu0 0
      %3395 = vmatmul.mubr.bf16.gmra.mxu0 %v3247
      %v3396 = vpop.f32.mrf.mxu0
      %v3397 = vadd.f32 %v3185, %v3396
      %v3398 = vpop.f32.mrf.mxu0
      %v3399 = vpop.f32.mrf.mxu0
      %v3400 = vadd.f32 %v3188, %v3399
      %v3401 = vpop.f32.mrf.mxu0
      %3402 = vmatprep.mubr.bf16.mxu0 0
      %3403 = vmatmul.mubr.bf16.gmra.mxu0 %v3250
      %v3404 = vpop.f32.mrf.mxu0
      %v3405 = vadd.f32 %v3193, %v3404
      %v3406 = vpop.f32.mrf.mxu0
      %v3407 = vpop.f32.mrf.mxu0
      %v3408 = vadd.f32 %v3196, %v3407
      %v3409 = vpop.f32.mrf.mxu0
      %3410 = vmatprep.mubr.bf16.mxu0 0
      %3411 = vmatmul.mubr.bf16.gmra.mxu0 %v3253
      %v3412 = vpop.f32.mrf.mxu0
      %v3413 = vadd.f32 %v3201, %v3412
      %v3414 = vpop.f32.mrf.mxu0
      %v3415 = vpop.f32.mrf.mxu0
      %v3416 = vadd.f32 %v3204, %v3415
      %v3417 = vpop.f32.mrf.mxu0
      %3418 = vdwg.mxu0
      %v3419 = vld [vmem:[#allocation2 + $0x9] sm:$0xff]
      %v3420 = vld [vmem:[#allocation2 + $0x11] sm:$0xff]
      %v3421 = vld [vmem:[#allocation2 + $0x29] sm:$0xff]
      %v3422 = vld [vmem:[#allocation2 + $0x31] sm:$0xff]
      %v3423 = vld [vmem:[#allocation2 + $0x49] sm:$0xff]
      %v3424 = vld [vmem:[#allocation2 + $0x51] sm:$0xff]
      %v3425 = vld [vmem:[#allocation2 + $0x69] sm:$0xff]
      %v3426 = vld [vmem:[#allocation2 + $0x71] sm:$0xff]
      %v3427 = vld [vmem:[#allocation2 + $0x89] sm:$0xff]
      %v3428 = vld [vmem:[#allocation2 + $0x91] sm:$0xff]
      %v3429 = vld [vmem:[#allocation2 + $0xa9] sm:$0xff]
      %v3430 = vld [vmem:[#allocation2 + $0xb1] sm:$0xff]
      %v3431 = vld [vmem:[#allocation2 + $0xc9] sm:$0xff]
      %v3432 = vld [vmem:[#allocation2 + $0xd1] sm:$0xff]
      %v3433 = vld [vmem:[#allocation2 + $0xe9] sm:$0xff]
      %v3434 = vld [vmem:[#allocation2 + $0xf1] sm:$0xff]
      %v3435 = vld [vmem:[#allocation2 + $0x109] sm:$0xff]
      %v3436 = vld [vmem:[#allocation2 + $0x111] sm:$0xff]
      %v3437 = vld [vmem:[#allocation2 + $0x129] sm:$0xff]
      %v3438 = vld [vmem:[#allocation2 + $0x131] sm:$0xff]
      %v3439 = vld [vmem:[#allocation2 + $0x149] sm:$0xff]
      %v3440 = vld [vmem:[#allocation2 + $0x151] sm:$0xff]
      %v3441 = vld [vmem:[#allocation2 + $0x169] sm:$0xff]
      %v3442 = vld [vmem:[#allocation2 + $0x171] sm:$0xff]
      %v3443 = vld [vmem:[#allocation2 + $0x189] sm:$0xff]
      %v3444 = vld [vmem:[#allocation2 + $0x191] sm:$0xff]
      %v3445 = vld [vmem:[#allocation2 + $0x1a9] sm:$0xff]
      %v3446 = vld [vmem:[#allocation2 + $0x1b1] sm:$0xff]
      %v3447 = vld [vmem:[#allocation2 + $0x1c9] sm:$0xff]
      %v3448 = vld [vmem:[#allocation2 + $0x1d1] sm:$0xff]
      %v3449 = vld [vmem:[#allocation2 + $0x1e9] sm:$0xff]
      %v3450 = vld [vmem:[#allocation2 + $0x1f1] sm:$0xff]
      %v3451 = vpack.c.bf16 %v3420, %v3419
      %v3452 = vpack.c.bf16 %v3422, %v3421
      %v3453 = vpack.c.bf16 %v3424, %v3423
      %v3454 = vpack.c.bf16 %v3426, %v3425
      %v3455 = vpack.c.bf16 %v3428, %v3427
      %v3456 = vpack.c.bf16 %v3430, %v3429
      %v3457 = vpack.c.bf16 %v3432, %v3431
      %v3458 = vpack.c.bf16 %v3434, %v3433
      %v3459 = vpack.c.bf16 %v3436, %v3435
      %v3460 = vpack.c.bf16 %v3438, %v3437
      %v3461 = vpack.c.bf16 %v3440, %v3439
      %v3462 = vpack.c.bf16 %v3442, %v3441
      %v3463 = vpack.c.bf16 %v3444, %v3443
      %v3464 = vpack.c.bf16 %v3446, %v3445
      %v3465 = vpack.c.bf16 %v3448, %v3447
      %v3466 = vpack.c.bf16 %v3450, %v3449
      %s3467 = scalar_lea.vmem %s2, 8
      %v3468 = vld [vmem:[%s3467] sm:$0xf]
      %v3470 = vsel %vm2789, %v3451, 0
      %v3473 = vsel %vm2789, %v3452, 0
      %v3476 = vsel %vm2789, %v3453, 0
      %v3479 = vsel %vm2789, %v3454, 0
      %v3482 = vsel %vm2789, %v3455, 0
      %v3485 = vsel %vm2789, %v3456, 0
      %v3488 = vsel %vm2789, %v3457, 0
      %v3491 = vsel %vm2789, %v3458, 0
      %v3494 = vsel %vm2789, %v3459, 0
      %v3497 = vsel %vm2789, %v3460, 0
      %v3500 = vsel %vm2789, %v3461, 0
      %v3503 = vsel %vm2789, %v3462, 0
      %v3506 = vsel %vm2789, %v3463, 0
      %v3509 = vsel %vm2789, %v3464, 0
      %v3512 = vsel %vm2789, %v3465, 0
      %v3515 = vsel %vm2789, %v3466, 0
      %v3518 = vsel %vm3042, %v3468, 0
      %3520 = vmatprep.subr.bf16.mxu0 0
      %3521 = vmatpush1.bf16.msra.mxu0 0
      %3522 = vmatprep.subr.bf16.mxu0 0
      %3523 = vmatpush1.bf16.msra.mxu0 0
      %3524 = vmatprep.subr.bf16.mxu0 0
      %3525 = vmatpush1.bf16.msra.mxu0 0
      %3526 = vmatprep.subr.bf16.mxu0 0
      %3527 = vmatpush1.bf16.msra.mxu0 0
      %3528 = vmatprep.subr.bf16.mxu0 0
      %3529 = vmatpush1.bf16.msra.mxu0 0
      %3530 = vmatprep.subr.bf16.mxu0 0
      %3531 = vmatpush1.bf16.msra.mxu0 0
      %3532 = vmatprep.subr.bf16.mxu0 0
      %3533 = vmatpush1.bf16.msra.mxu0 0
      %3534 = vmatprep.subr.bf16.mxu0 0
      %3535 = vmatpush1.bf16.msra.mxu0 %v3518
      %3536 = vmatprep.subr.bf16.mxu0 0
      %3537 = vmatpush2.bf16.msra.mxu0 0
      %3538 = vmatprep.subr.bf16.mxu0 0
      %3539 = vmatpush2.bf16.msra.mxu0 0
      %3540 = vmatprep.subr.bf16.mxu0 0
      %3541 = vmatpush2.bf16.msra.mxu0 0
      %3542 = vmatprep.subr.bf16.mxu0 0
      %3543 = vmatpush2.bf16.msra.mxu0 0
      %3544 = vmatprep.subr.bf16.mxu0 0
      %3545 = vmatpush2.bf16.msra.mxu0 0
      %3546 = vmatprep.subr.bf16.mxu0 0
      %3547 = vmatpush2.bf16.msra.mxu0 0
      %3548 = vmatprep.subr.bf16.mxu0 0
      %3549 = vmatpush2.bf16.msra.mxu0 0
      %3550 = vmatprep.subr.bf16.mxu0 0
      %3551 = vmatpush2.bf16.msra.mxu0 0
      %3552 = vmatprep.mubr.bf16.mxu0 0
      %3553 = vmatmul.mubr.bf16.gmra.mxu0 %v3470
      %v3554 = vpop.f32.mrf.mxu0
      %v3555 = vadd.f32 0.0, %v3554
      %v3556 = vpop.f32.mrf.mxu0
      %v3557 = vpop.f32.mrf.mxu0
      %v3558 = vadd.f32 0.0, %v3557
      %v3559 = vpop.f32.mrf.mxu0
      %3560 = vmatprep.mubr.bf16.mxu0 0
      %3561 = vmatmul.mubr.bf16.gmra.mxu0 %v3473
      %v3562 = vpop.f32.mrf.mxu0
      %v3563 = vadd.f32 0.0, %v3562
      %v3564 = vpop.f32.mrf.mxu0
      %v3565 = vpop.f32.mrf.mxu0
      %v3566 = vadd.f32 0.0, %v3565
      %v3567 = vpop.f32.mrf.mxu0
      %3568 = vmatprep.mubr.bf16.mxu0 0
      %3569 = vmatmul.mubr.bf16.gmra.mxu0 %v3476
      %v3570 = vpop.f32.mrf.mxu0
      %v3571 = vadd.f32 0.0, %v3570
      %v3572 = vpop.f32.mrf.mxu0
      %v3573 = vpop.f32.mrf.mxu0
      %v3574 = vadd.f32 0.0, %v3573
      %v3575 = vpop.f32.mrf.mxu0
      %3576 = vmatprep.mubr.bf16.mxu0 0
      %3577 = vmatmul.mubr.bf16.gmra.mxu0 %v3479
      %v3578 = vpop.f32.mrf.mxu0
      %v3579 = vadd.f32 0.0, %v3578
      %v3580 = vpop.f32.mrf.mxu0
      %v3581 = vpop.f32.mrf.mxu0
      %v3582 = vadd.f32 0.0, %v3581
      %v3583 = vpop.f32.mrf.mxu0
      %3584 = vmatprep.mubr.bf16.mxu0 0
      %3585 = vmatmul.mubr.bf16.gmra.mxu0 %v3482
      %v3586 = vpop.f32.mrf.mxu0
      %v3587 = vadd.f32 0.0, %v3586
      %v3588 = vpop.f32.mrf.mxu0
      %v3589 = vpop.f32.mrf.mxu0
      %v3590 = vadd.f32 0.0, %v3589
      %v3591 = vpop.f32.mrf.mxu0
      %3592 = vmatprep.mubr.bf16.mxu0 0
      %3593 = vmatmul.mubr.bf16.gmra.mxu0 %v3485
      %v3594 = vpop.f32.mrf.mxu0
      %v3595 = vadd.f32 0.0, %v3594
      %v3596 = vpop.f32.mrf.mxu0
      %v3597 = vpop.f32.mrf.mxu0
      %v3598 = vadd.f32 0.0, %v3597
      %v3599 = vpop.f32.mrf.mxu0
      %3600 = vmatprep.mubr.bf16.mxu0 0
      %3601 = vmatmul.mubr.bf16.gmra.mxu0 %v3488
      %v3602 = vpop.f32.mrf.mxu0
      %v3603 = vadd.f32 0.0, %v3602
      %v3604 = vpop.f32.mrf.mxu0
      %v3605 = vpop.f32.mrf.mxu0
      %v3606 = vadd.f32 0.0, %v3605
      %v3607 = vpop.f32.mrf.mxu0
      %3608 = vmatprep.mubr.bf16.mxu0 0
      %3609 = vmatmul.mubr.bf16.gmra.mxu0 %v3491
      %v3610 = vpop.f32.mrf.mxu0
      %v3611 = vadd.f32 0.0, %v3610
      %v3612 = vpop.f32.mrf.mxu0
      %v3613 = vpop.f32.mrf.mxu0
      %v3614 = vadd.f32 0.0, %v3613
      %v3615 = vpop.f32.mrf.mxu0
      %3616 = vmatprep.mubr.bf16.mxu0 0
      %3617 = vmatmul.mubr.bf16.gmra.mxu0 %v3494
      %v3618 = vpop.f32.mrf.mxu0
      %v3619 = vadd.f32 0.0, %v3618
      %v3620 = vpop.f32.mrf.mxu0
      %v3621 = vpop.f32.mrf.mxu0
      %v3622 = vadd.f32 0.0, %v3621
      %v3623 = vpop.f32.mrf.mxu0
      %3624 = vmatprep.mubr.bf16.mxu0 0
      %3625 = vmatmul.mubr.bf16.gmra.mxu0 %v3497
      %v3626 = vpop.f32.mrf.mxu0
      %v3627 = vadd.f32 0.0, %v3626
      %v3628 = vpop.f32.mrf.mxu0
      %v3629 = vpop.f32.mrf.mxu0
      %v3630 = vadd.f32 0.0, %v3629
      %v3631 = vpop.f32.mrf.mxu0
      %3632 = vmatprep.mubr.bf16.mxu0 0
      %3633 = vmatmul.mubr.bf16.gmra.mxu0 %v3500
      %v3634 = vpop.f32.mrf.mxu0
      %v3635 = vadd.f32 0.0, %v3634
      %v3636 = vpop.f32.mrf.mxu0
      %v3637 = vpop.f32.mrf.mxu0
      %v3638 = vadd.f32 0.0, %v3637
      %v3639 = vpop.f32.mrf.mxu0
      %3640 = vmatprep.mubr.bf16.mxu0 0
      %3641 = vmatmul.mubr.bf16.gmra.mxu0 %v3503
      %v3642 = vpop.f32.mrf.mxu0
      %v3643 = vadd.f32 0.0, %v3642
      %v3644 = vpop.f32.mrf.mxu0
      %v3645 = vpop.f32.mrf.mxu0
      %v3646 = vadd.f32 0.0, %v3645
      %v3647 = vpop.f32.mrf.mxu0
      %3648 = vmatprep.mubr.bf16.mxu0 0
      %3649 = vmatmul.mubr.bf16.gmra.mxu0 %v3506
      %v3650 = vpop.f32.mrf.mxu0
      %v3651 = vadd.f32 0.0, %v3650
      %v3652 = vpop.f32.mrf.mxu0
      %v3653 = vpop.f32.mrf.mxu0
      %v3654 = vadd.f32 0.0, %v3653
      %v3655 = vpop.f32.mrf.mxu0
      %3656 = vmatprep.mubr.bf16.mxu0 0
      %3657 = vmatmul.mubr.bf16.gmra.mxu0 %v3509
      %v3658 = vpop.f32.mrf.mxu0
      %v3659 = vadd.f32 0.0, %v3658
      %v3660 = vpop.f32.mrf.mxu0
      %v3661 = vpop.f32.mrf.mxu0
      %v3662 = vadd.f32 0.0, %v3661
      %v3663 = vpop.f32.mrf.mxu0
      %3664 = vmatprep.mubr.bf16.mxu0 0
      %3665 = vmatmul.mubr.bf16.gmra.mxu0 %v3512
      %v3666 = vpop.f32.mrf.mxu0
      %v3667 = vadd.f32 0.0, %v3666
      %v3668 = vpop.f32.mrf.mxu0
      %v3669 = vpop.f32.mrf.mxu0
      %v3670 = vadd.f32 0.0, %v3669
      %v3671 = vpop.f32.mrf.mxu0
      %3672 = vmatprep.mubr.bf16.mxu0 0
      %3673 = vmatmul.mubr.bf16.gmra.mxu0 %v3515
      %v3674 = vpop.f32.mrf.mxu0
      %v3675 = vadd.f32 0.0, %v3674
      %v3676 = vpop.f32.mrf.mxu0
      %v3677 = vpop.f32.mrf.mxu0
      %v3678 = vadd.f32 0.0, %v3677
      %v3679 = vpop.f32.mrf.mxu0
      %3680 = vdwg.mxu0
      %v3681 = vadd.f32 %v3293, %v3555
      %v3682 = vadd.f32 %v3296, %v3558
      %v3683 = vadd.f32 %v3301, %v3563
      %v3684 = vadd.f32 %v3304, %v3566
      %v3685 = vadd.f32 %v3309, %v3571
      %v3686 = vadd.f32 %v3312, %v3574
      %v3687 = vadd.f32 %v3317, %v3579
      %v3688 = vadd.f32 %v3320, %v3582
      %v3689 = vadd.f32 %v3325, %v3587
      %v3690 = vadd.f32 %v3328, %v3590
      %v3691 = vadd.f32 %v3333, %v3595
      %v3692 = vadd.f32 %v3336, %v3598
      %v3693 = vadd.f32 %v3341, %v3603
      %v3694 = vadd.f32 %v3344, %v3606
      %v3695 = vadd.f32 %v3349, %v3611
      %v3696 = vadd.f32 %v3352, %v3614
      %v3697 = vadd.f32 %v3357, %v3619
      %v3698 = vadd.f32 %v3360, %v3622
      %v3699 = vadd.f32 %v3365, %v3627
      %v3700 = vadd.f32 %v3368, %v3630
      %v3701 = vadd.f32 %v3373, %v3635
      %v3702 = vadd.f32 %v3376, %v3638
      %v3703 = vadd.f32 %v3381, %v3643
      %v3704 = vadd.f32 %v3384, %v3646
      %v3705 = vadd.f32 %v3389, %v3651
      %v3706 = vadd.f32 %v3392, %v3654
      %v3707 = vadd.f32 %v3397, %v3659
      %v3708 = vadd.f32 %v3400, %v3662
      %v3709 = vadd.f32 %v3405, %v3667
      %v3710 = vadd.f32 %v3408, %v3670
      %v3711 = vadd.f32 %v3413, %v3675
      %v3712 = vadd.f32 %v3416, %v3678
      %v3713 = vld [vmem:[%s2862 + $0x7] sm:$0xff]
      %v3714 = vld [vmem:[%s2862 + $0xf] sm:$0xff]
      %v3715 = vld [vmem:[%s2862 + $0x27] sm:$0xff]
      %v3716 = vld [vmem:[%s2862 + $0x2f] sm:$0xff]
      %v3717 = vld [vmem:[%s2862 + $0x47] sm:$0xff]
      %v3718 = vld [vmem:[%s2862 + $0x4f] sm:$0xff]
      %v3719 = vld [vmem:[%s2862 + $0x67] sm:$0xff]
      %v3720 = vld [vmem:[%s2862 + $0x6f] sm:$0xff]
      %v3721 = vld [vmem:[%s2862 + $0x87] sm:$0xff]
      %v3722 = vld [vmem:[%s2862 + $0x8f] sm:$0xff]
      %v3723 = vld [vmem:[%s2862 + $0xa7] sm:$0xff]
      %v3724 = vld [vmem:[%s2862 + $0xaf] sm:$0xff]
      %v3725 = vld [vmem:[%s2862 + $0xc7] sm:$0xff]
      %v3726 = vld [vmem:[%s2862 + $0xcf] sm:$0xff]
      %v3727 = vld [vmem:[%s2862 + $0xe7] sm:$0xff]
      %v3728 = vld [vmem:[%s2862 + $0xef] sm:$0xff]
      %v3729 = vld [vmem:[%s2862 + $0x107] sm:$0xff]
      %v3730 = vld [vmem:[%s2862 + $0x10f] sm:$0xff]
      %v3731 = vld [vmem:[%s2862 + $0x127] sm:$0xff]
      %v3732 = vld [vmem:[%s2862 + $0x12f] sm:$0xff]
      %v3733 = vld [vmem:[%s2862 + $0x147] sm:$0xff]
      %v3734 = vld [vmem:[%s2862 + $0x14f] sm:$0xff]
      %v3735 = vld [vmem:[%s2862 + $0x167] sm:$0xff]
      %v3736 = vld [vmem:[%s2862 + $0x16f] sm:$0xff]
      %v3737 = vld [vmem:[%s2862 + $0x187] sm:$0xff]
      %v3738 = vld [vmem:[%s2862 + $0x18f] sm:$0xff]
      %v3739 = vld [vmem:[%s2862 + $0x1a7] sm:$0xff]
      %v3740 = vld [vmem:[%s2862 + $0x1af] sm:$0xff]
      %v3741 = vld [vmem:[%s2862 + $0x1c7] sm:$0xff]
      %v3742 = vld [vmem:[%s2862 + $0x1cf] sm:$0xff]
      %v3743 = vld [vmem:[%s2862 + $0x1e7] sm:$0xff]
      %v3744 = vld [vmem:[%s2862 + $0x1ef] sm:$0xff]
      %v3745 = vpack.c.bf16 %v3714, %v3713
      %v3746 = vpack.c.bf16 %v3716, %v3715
      %v3747 = vpack.c.bf16 %v3718, %v3717
      %v3748 = vpack.c.bf16 %v3720, %v3719
      %v3749 = vpack.c.bf16 %v3722, %v3721
      %v3750 = vpack.c.bf16 %v3724, %v3723
      %v3751 = vpack.c.bf16 %v3726, %v3725
      %v3752 = vpack.c.bf16 %v3728, %v3727
      %v3753 = vpack.c.bf16 %v3730, %v3729
      %v3754 = vpack.c.bf16 %v3732, %v3731
      %v3755 = vpack.c.bf16 %v3734, %v3733
      %v3756 = vpack.c.bf16 %v3736, %v3735
      %v3757 = vpack.c.bf16 %v3738, %v3737
      %v3758 = vpack.c.bf16 %v3740, %v3739
      %v3759 = vpack.c.bf16 %v3742, %v3741
      %v3760 = vpack.c.bf16 %v3744, %v3743
      %s3761 = scalar_lea.vmem %s2, 12
      %v3762 = vld [vmem:[%s3761] sm:$0xf]
      %v3764 = vsel %vm2789, %v3745, 0
      %v3767 = vsel %vm2789, %v3746, 0
      %v3770 = vsel %vm2789, %v3747, 0
      %v3773 = vsel %vm2789, %v3748, 0
      %v3776 = vsel %vm2789, %v3749, 0
      %v3779 = vsel %vm2789, %v3750, 0
      %v3782 = vsel %vm2789, %v3751, 0
      %v3785 = vsel %vm2789, %v3752, 0
      %v3788 = vsel %vm2789, %v3753, 0
      %v3791 = vsel %vm2789, %v3754, 0
      %v3794 = vsel %vm2789, %v3755, 0
      %v3797 = vsel %vm2789, %v3756, 0
      %v3800 = vsel %vm2789, %v3757, 0
      %v3803 = vsel %vm2789, %v3758, 0
      %v3806 = vsel %vm2789, %v3759, 0
      %v3809 = vsel %vm2789, %v3760, 0
      %v3812 = vsel %vm3042, %v3762, 0
      %3814 = vmatprep.subr.bf16.mxu0 0
      %3815 = vmatpush1.bf16.msra.mxu0 0
      %3816 = vmatprep.subr.bf16.mxu0 0
      %3817 = vmatpush1.bf16.msra.mxu0 0
      %3818 = vmatprep.subr.bf16.mxu0 0
      %3819 = vmatpush1.bf16.msra.mxu0 0
      %3820 = vmatprep.subr.bf16.mxu0 0
      %3821 = vmatpush1.bf16.msra.mxu0 0
      %3822 = vmatprep.subr.bf16.mxu0 0
      %3823 = vmatpush1.bf16.msra.mxu0 0
      %3824 = vmatprep.subr.bf16.mxu0 0
      %3825 = vmatpush1.bf16.msra.mxu0 0
      %3826 = vmatprep.subr.bf16.mxu0 0
      %3827 = vmatpush1.bf16.msra.mxu0 0
      %3828 = vmatprep.subr.bf16.mxu0 0
      %3829 = vmatpush1.bf16.msra.mxu0 %v3812
      %3830 = vmatprep.subr.bf16.mxu0 0
      %3831 = vmatpush2.bf16.msra.mxu0 0
      %3832 = vmatprep.subr.bf16.mxu0 0
      %3833 = vmatpush2.bf16.msra.mxu0 0
      %3834 = vmatprep.subr.bf16.mxu0 0
      %3835 = vmatpush2.bf16.msra.mxu0 0
      %3836 = vmatprep.subr.bf16.mxu0 0
      %3837 = vmatpush2.bf16.msra.mxu0 0
      %3838 = vmatprep.subr.bf16.mxu0 0
      %3839 = vmatpush2.bf16.msra.mxu0 0
      %3840 = vmatprep.subr.bf16.mxu0 0
      %3841 = vmatpush2.bf16.msra.mxu0 0
      %3842 = vmatprep.subr.bf16.mxu0 0
      %3843 = vmatpush2.bf16.msra.mxu0 0
      %3844 = vmatprep.subr.bf16.mxu0 0
      %3845 = vmatpush2.bf16.msra.mxu0 0
      %3846 = vmatprep.mubr.bf16.mxu0 0
      %3847 = vmatmul.mubr.bf16.gmra.mxu0 %v3764
      %v3848 = vpop.f32.mrf.mxu0
      %v3849 = vadd.f32 0.0, %v3848
      %v3850 = vpop.f32.mrf.mxu0
      %v3851 = vpop.f32.mrf.mxu0
      %v3852 = vadd.f32 0.0, %v3851
      %v3853 = vpop.f32.mrf.mxu0
      %3854 = vmatprep.mubr.bf16.mxu0 0
      %3855 = vmatmul.mubr.bf16.gmra.mxu0 %v3767
      %v3856 = vpop.f32.mrf.mxu0
      %v3857 = vadd.f32 0.0, %v3856
      %v3858 = vpop.f32.mrf.mxu0
      %v3859 = vpop.f32.mrf.mxu0
      %v3860 = vadd.f32 0.0, %v3859
      %v3861 = vpop.f32.mrf.mxu0
      %3862 = vmatprep.mubr.bf16.mxu0 0
      %3863 = vmatmul.mubr.bf16.gmra.mxu0 %v3770
      %v3864 = vpop.f32.mrf.mxu0
      %v3865 = vadd.f32 0.0, %v3864
      %v3866 = vpop.f32.mrf.mxu0
      %v3867 = vpop.f32.mrf.mxu0
      %v3868 = vadd.f32 0.0, %v3867
      %v3869 = vpop.f32.mrf.mxu0
      %3870 = vmatprep.mubr.bf16.mxu0 0
      %3871 = vmatmul.mubr.bf16.gmra.mxu0 %v3773
      %v3872 = vpop.f32.mrf.mxu0
      %v3873 = vadd.f32 0.0, %v3872
      %v3874 = vpop.f32.mrf.mxu0
      %v3875 = vpop.f32.mrf.mxu0
      %v3876 = vadd.f32 0.0, %v3875
      %v3877 = vpop.f32.mrf.mxu0
      %3878 = vmatprep.mubr.bf16.mxu0 0
      %3879 = vmatmul.mubr.bf16.gmra.mxu0 %v3776
      %v3880 = vpop.f32.mrf.mxu0
      %v3881 = vadd.f32 0.0, %v3880
      %v3882 = vpop.f32.mrf.mxu0
      %v3883 = vpop.f32.mrf.mxu0
      %v3884 = vadd.f32 0.0, %v3883
      %v3885 = vpop.f32.mrf.mxu0
      %3886 = vmatprep.mubr.bf16.mxu0 0
      %3887 = vmatmul.mubr.bf16.gmra.mxu0 %v3779
      %v3888 = vpop.f32.mrf.mxu0
      %v3889 = vadd.f32 0.0, %v3888
      %v3890 = vpop.f32.mrf.mxu0
      %v3891 = vpop.f32.mrf.mxu0
      %v3892 = vadd.f32 0.0, %v3891
      %v3893 = vpop.f32.mrf.mxu0
      %3894 = vmatprep.mubr.bf16.mxu0 0
      %3895 = vmatmul.mubr.bf16.gmra.mxu0 %v3782
      %v3896 = vpop.f32.mrf.mxu0
      %v3897 = vadd.f32 0.0, %v3896
      %v3898 = vpop.f32.mrf.mxu0
      %v3899 = vpop.f32.mrf.mxu0
      %v3900 = vadd.f32 0.0, %v3899
      %v3901 = vpop.f32.mrf.mxu0
      %3902 = vmatprep.mubr.bf16.mxu0 0
      %3903 = vmatmul.mubr.bf16.gmra.mxu0 %v3785
      %v3904 = vpop.f32.mrf.mxu0
      %v3905 = vadd.f32 0.0, %v3904
      %v3906 = vpop.f32.mrf.mxu0
      %v3907 = vpop.f32.mrf.mxu0
      %v3908 = vadd.f32 0.0, %v3907
      %v3909 = vpop.f32.mrf.mxu0
      %3910 = vmatprep.mubr.bf16.mxu0 0
      %3911 = vmatmul.mubr.bf16.gmra.mxu0 %v3788
      %v3912 = vpop.f32.mrf.mxu0
      %v3913 = vadd.f32 0.0, %v3912
      %v3914 = vpop.f32.mrf.mxu0
      %v3915 = vpop.f32.mrf.mxu0
      %v3916 = vadd.f32 0.0, %v3915
      %v3917 = vpop.f32.mrf.mxu0
      %3918 = vmatprep.mubr.bf16.mxu0 0
      %3919 = vmatmul.mubr.bf16.gmra.mxu0 %v3791
      %v3920 = vpop.f32.mrf.mxu0
      %v3921 = vadd.f32 0.0, %v3920
      %v3922 = vpop.f32.mrf.mxu0
      %v3923 = vpop.f32.mrf.mxu0
      %v3924 = vadd.f32 0.0, %v3923
      %v3925 = vpop.f32.mrf.mxu0
      %3926 = vmatprep.mubr.bf16.mxu0 0
      %3927 = vmatmul.mubr.bf16.gmra.mxu0 %v3794
      %v3928 = vpop.f32.mrf.mxu0
      %v3929 = vadd.f32 0.0, %v3928
      %v3930 = vpop.f32.mrf.mxu0
      %v3931 = vpop.f32.mrf.mxu0
      %v3932 = vadd.f32 0.0, %v3931
      %v3933 = vpop.f32.mrf.mxu0
      %3934 = vmatprep.mubr.bf16.mxu0 0
      %3935 = vmatmul.mubr.bf16.gmra.mxu0 %v3797
      %v3936 = vpop.f32.mrf.mxu0
      %v3937 = vadd.f32 0.0, %v3936
      %v3938 = vpop.f32.mrf.mxu0
      %v3939 = vpop.f32.mrf.mxu0
      %v3940 = vadd.f32 0.0, %v3939
      %v3941 = vpop.f32.mrf.mxu0
      %3942 = vmatprep.mubr.bf16.mxu0 0
      %3943 = vmatmul.mubr.bf16.gmra.mxu0 %v3800
      %v3944 = vpop.f32.mrf.mxu0
      %v3945 = vadd.f32 0.0, %v3944
      %v3946 = vpop.f32.mrf.mxu0
      %v3947 = vpop.f32.mrf.mxu0
      %v3948 = vadd.f32 0.0, %v3947
      %v3949 = vpop.f32.mrf.mxu0
      %3950 = vmatprep.mubr.bf16.mxu0 0
      %3951 = vmatmul.mubr.bf16.gmra.mxu0 %v3803
      %v3952 = vpop.f32.mrf.mxu0
      %v3953 = vadd.f32 0.0, %v3952
      %v3954 = vpop.f32.mrf.mxu0
      %v3955 = vpop.f32.mrf.mxu0
      %v3956 = vadd.f32 0.0, %v3955
      %v3957 = vpop.f32.mrf.mxu0
      %3958 = vmatprep.mubr.bf16.mxu0 0
      %3959 = vmatmul.mubr.bf16.gmra.mxu0 %v3806
      %v3960 = vpop.f32.mrf.mxu0
      %v3961 = vadd.f32 0.0, %v3960
      %v3962 = vpop.f32.mrf.mxu0
      %v3963 = vpop.f32.mrf.mxu0
      %v3964 = vadd.f32 0.0, %v3963
      %v3965 = vpop.f32.mrf.mxu0
      %3966 = vmatprep.mubr.bf16.mxu0 0
      %3967 = vmatmul.mubr.bf16.gmra.mxu0 %v3809
      %v3968 = vpop.f32.mrf.mxu0
      %v3969 = vadd.f32 0.0, %v3968
      %v3970 = vpop.f32.mrf.mxu0
      %v3971 = vpop.f32.mrf.mxu0
      %v3972 = vadd.f32 0.0, %v3971
      %v3973 = vpop.f32.mrf.mxu0
      %3974 = vdwg.mxu0
      %v3975 = vadd.f32 %v3681, %v3849
      %v3976 = vadd.f32 %v3682, %v3852
      %v3977 = vadd.f32 %v3683, %v3857
      %v3978 = vadd.f32 %v3684, %v3860
      %v3979 = vadd.f32 %v3685, %v3865
      %v3980 = vadd.f32 %v3686, %v3868
      %v3981 = vadd.f32 %v3687, %v3873
      %v3982 = vadd.f32 %v3688, %v3876
      %v3983 = vadd.f32 %v3689, %v3881
      %v3984 = vadd.f32 %v3690, %v3884
      %v3985 = vadd.f32 %v3691, %v3889
      %v3986 = vadd.f32 %v3692, %v3892
      %v3987 = vadd.f32 %v3693, %v3897
      %v3988 = vadd.f32 %v3694, %v3900
      %v3989 = vadd.f32 %v3695, %v3905
      %v3990 = vadd.f32 %v3696, %v3908
      %v3991 = vadd.f32 %v3697, %v3913
      %v3992 = vadd.f32 %v3698, %v3916
      %v3993 = vadd.f32 %v3699, %v3921
      %v3994 = vadd.f32 %v3700, %v3924
      %v3995 = vadd.f32 %v3701, %v3929
      %v3996 = vadd.f32 %v3702, %v3932
      %v3997 = vadd.f32 %v3703, %v3937
      %v3998 = vadd.f32 %v3704, %v3940
      %v3999 = vadd.f32 %v3705, %v3945
      %v4000 = vadd.f32 %v3706, %v3948
      %v4001 = vadd.f32 %v3707, %v3953
      %v4002 = vadd.f32 %v3708, %v3956
      %v4003 = vadd.f32 %v3709, %v3961
      %v4004 = vadd.f32 %v3710, %v3964
      %v4005 = vadd.f32 %v3711, %v3969
      %v4006 = vadd.f32 %v3712, %v3972
      %v4007 = vld [vmem:[%s2862 + $0x8] sm:$0xff]
      %v4008 = vld [vmem:[%s2862 + $0x10] sm:$0xff]
      %v4009 = vld [vmem:[%s2862 + $0x28] sm:$0xff]
      %v4010 = vld [vmem:[%s2862 + $0x30] sm:$0xff]
      %v4011 = vld [vmem:[%s2862 + $0x48] sm:$0xff]
      %v4012 = vld [vmem:[%s2862 + $0x50] sm:$0xff]
      %v4013 = vld [vmem:[%s2862 + $0x68] sm:$0xff]
      %v4014 = vld [vmem:[%s2862 + $0x70] sm:$0xff]
      %v4015 = vld [vmem:[%s2862 + $0x88] sm:$0xff]
      %v4016 = vld [vmem:[%s2862 + $0x90] sm:$0xff]
      %v4017 = vld [vmem:[%s2862 + $0xa8] sm:$0xff]
      %v4018 = vld [vmem:[%s2862 + $0xb0] sm:$0xff]
      %v4019 = vld [vmem:[%s2862 + $0xc8] sm:$0xff]
      %v4020 = vld [vmem:[%s2862 + $0xd0] sm:$0xff]
      %v4021 = vld [vmem:[%s2862 + $0xe8] sm:$0xff]
      %v4022 = vld [vmem:[%s2862 + $0xf0] sm:$0xff]
      %v4023 = vld [vmem:[%s2862 + $0x108] sm:$0xff]
      %v4024 = vld [vmem:[%s2862 + $0x110] sm:$0xff]
      %v4025 = vld [vmem:[%s2862 + $0x128] sm:$0xff]
      %v4026 = vld [vmem:[%s2862 + $0x130] sm:$0xff]
      %v4027 = vld [vmem:[%s2862 + $0x148] sm:$0xff]
      %v4028 = vld [vmem:[%s2862 + $0x150] sm:$0xff]
      %v4029 = vld [vmem:[%s2862 + $0x168] sm:$0xff]
      %v4030 = vld [vmem:[%s2862 + $0x170] sm:$0xff]
      %v4031 = vld [vmem:[%s2862 + $0x188] sm:$0xff]
      %v4032 = vld [vmem:[%s2862 + $0x190] sm:$0xff]
      %v4033 = vld [vmem:[%s2862 + $0x1a8] sm:$0xff]
      %v4034 = vld [vmem:[%s2862 + $0x1b0] sm:$0xff]
      %v4035 = vld [vmem:[%s2862 + $0x1c8] sm:$0xff]
      %v4036 = vld [vmem:[%s2862 + $0x1d0] sm:$0xff]
      %v4037 = vld [vmem:[%s2862 + $0x1e8] sm:$0xff]
      %v4038 = vld [vmem:[%s2862 + $0x1f0] sm:$0xff]
      %v4039 = vpack.c.bf16 %v4008, %v4007
      %v4040 = vpack.c.bf16 %v4010, %v4009
      %v4041 = vpack.c.bf16 %v4012, %v4011
      %v4042 = vpack.c.bf16 %v4014, %v4013
      %v4043 = vpack.c.bf16 %v4016, %v4015
      %v4044 = vpack.c.bf16 %v4018, %v4017
      %v4045 = vpack.c.bf16 %v4020, %v4019
      %v4046 = vpack.c.bf16 %v4022, %v4021
      %v4047 = vpack.c.bf16 %v4024, %v4023
      %v4048 = vpack.c.bf16 %v4026, %v4025
      %v4049 = vpack.c.bf16 %v4028, %v4027
      %v4050 = vpack.c.bf16 %v4030, %v4029
      %v4051 = vpack.c.bf16 %v4032, %v4031
      %v4052 = vpack.c.bf16 %v4034, %v4033
      %v4053 = vpack.c.bf16 %v4036, %v4035
      %v4054 = vpack.c.bf16 %v4038, %v4037
      %s4055 = scalar_lea.vmem %s2, 16
      %v4056 = vld [vmem:[%s4055] sm:$0xf]
      %v4058 = vsel %vm2789, %v4039, 0
      %v4061 = vsel %vm2789, %v4040, 0
      %v4064 = vsel %vm2789, %v4041, 0
      %v4067 = vsel %vm2789, %v4042, 0
      %v4070 = vsel %vm2789, %v4043, 0
      %v4073 = vsel %vm2789, %v4044, 0
      %v4076 = vsel %vm2789, %v4045, 0
      %v4079 = vsel %vm2789, %v4046, 0
      %v4082 = vsel %vm2789, %v4047, 0
      %v4085 = vsel %vm2789, %v4048, 0
      %v4088 = vsel %vm2789, %v4049, 0
      %v4091 = vsel %vm2789, %v4050, 0
      %v4094 = vsel %vm2789, %v4051, 0
      %v4097 = vsel %vm2789, %v4052, 0
      %v4100 = vsel %vm2789, %v4053, 0
      %v4103 = vsel %vm2789, %v4054, 0
      %v4106 = vsel %vm3042, %v4056, 0
      %4108 = vmatprep.subr.bf16.mxu0 0
      %4109 = vmatpush1.bf16.msra.mxu0 0
      %4110 = vmatprep.subr.bf16.mxu0 0
      %4111 = vmatpush1.bf16.msra.mxu0 0
      %4112 = vmatprep.subr.bf16.mxu0 0
      %4113 = vmatpush1.bf16.msra.mxu0 0
      %4114 = vmatprep.subr.bf16.mxu0 0
      %4115 = vmatpush1.bf16.msra.mxu0 0
      %4116 = vmatprep.subr.bf16.mxu0 0
      %4117 = vmatpush1.bf16.msra.mxu0 0
      %4118 = vmatprep.subr.bf16.mxu0 0
      %4119 = vmatpush1.bf16.msra.mxu0 0
      %4120 = vmatprep.subr.bf16.mxu0 0
      %4121 = vmatpush1.bf16.msra.mxu0 0
      %4122 = vmatprep.subr.bf16.mxu0 0
      %4123 = vmatpush1.bf16.msra.mxu0 %v4106
      %4124 = vmatprep.subr.bf16.mxu0 0
      %4125 = vmatpush2.bf16.msra.mxu0 0
      %4126 = vmatprep.subr.bf16.mxu0 0
      %4127 = vmatpush2.bf16.msra.mxu0 0
      %4128 = vmatprep.subr.bf16.mxu0 0
      %4129 = vmatpush2.bf16.msra.mxu0 0
      %4130 = vmatprep.subr.bf16.mxu0 0
      %4131 = vmatpush2.bf16.msra.mxu0 0
      %4132 = vmatprep.subr.bf16.mxu0 0
      %4133 = vmatpush2.bf16.msra.mxu0 0
      %4134 = vmatprep.subr.bf16.mxu0 0
      %4135 = vmatpush2.bf16.msra.mxu0 0
      %4136 = vmatprep.subr.bf16.mxu0 0
      %4137 = vmatpush2.bf16.msra.mxu0 0
      %4138 = vmatprep.subr.bf16.mxu0 0
      %4139 = vmatpush2.bf16.msra.mxu0 0
      %4140 = vmatprep.mubr.bf16.mxu0 0
      %4141 = vmatmul.mubr.bf16.gmra.mxu0 %v4058
      %v4142 = vpop.f32.mrf.mxu0
      %v4143 = vadd.f32 0.0, %v4142
      %v4144 = vpop.f32.mrf.mxu0
      %v4145 = vpop.f32.mrf.mxu0
      %v4146 = vadd.f32 0.0, %v4145
      %v4147 = vpop.f32.mrf.mxu0
      %4148 = vmatprep.mubr.bf16.mxu0 0
      %4149 = vmatmul.mubr.bf16.gmra.mxu0 %v4061
      %v4150 = vpop.f32.mrf.mxu0
      %v4151 = vadd.f32 0.0, %v4150
      %v4152 = vpop.f32.mrf.mxu0
      %v4153 = vpop.f32.mrf.mxu0
      %v4154 = vadd.f32 0.0, %v4153
      %v4155 = vpop.f32.mrf.mxu0
      %4156 = vmatprep.mubr.bf16.mxu0 0
      %4157 = vmatmul.mubr.bf16.gmra.mxu0 %v4064
      %v4158 = vpop.f32.mrf.mxu0
      %v4159 = vadd.f32 0.0, %v4158
      %v4160 = vpop.f32.mrf.mxu0
      %v4161 = vpop.f32.mrf.mxu0
      %v4162 = vadd.f32 0.0, %v4161
      %v4163 = vpop.f32.mrf.mxu0
      %4164 = vmatprep.mubr.bf16.mxu0 0
      %4165 = vmatmul.mubr.bf16.gmra.mxu0 %v4067
      %v4166 = vpop.f32.mrf.mxu0
      %v4167 = vadd.f32 0.0, %v4166
      %v4168 = vpop.f32.mrf.mxu0
      %v4169 = vpop.f32.mrf.mxu0
      %v4170 = vadd.f32 0.0, %v4169
      %v4171 = vpop.f32.mrf.mxu0
      %4172 = vmatprep.mubr.bf16.mxu0 0
      %4173 = vmatmul.mubr.bf16.gmra.mxu0 %v4070
      %v4174 = vpop.f32.mrf.mxu0
      %v4175 = vadd.f32 0.0, %v4174
      %v4176 = vpop.f32.mrf.mxu0
      %v4177 = vpop.f32.mrf.mxu0
      %v4178 = vadd.f32 0.0, %v4177
      %v4179 = vpop.f32.mrf.mxu0
      %4180 = vmatprep.mubr.bf16.mxu0 0
      %4181 = vmatmul.mubr.bf16.gmra.mxu0 %v4073
      %v4182 = vpop.f32.mrf.mxu0
      %v4183 = vadd.f32 0.0, %v4182
      %v4184 = vpop.f32.mrf.mxu0
      %v4185 = vpop.f32.mrf.mxu0
      %v4186 = vadd.f32 0.0, %v4185
      %v4187 = vpop.f32.mrf.mxu0
      %4188 = vmatprep.mubr.bf16.mxu0 0
      %4189 = vmatmul.mubr.bf16.gmra.mxu0 %v4076
      %v4190 = vpop.f32.mrf.mxu0
      %v4191 = vadd.f32 0.0, %v4190
      %v4192 = vpop.f32.mrf.mxu0
      %v4193 = vpop.f32.mrf.mxu0
      %v4194 = vadd.f32 0.0, %v4193
      %v4195 = vpop.f32.mrf.mxu0
      %4196 = vmatprep.mubr.bf16.mxu0 0
      %4197 = vmatmul.mubr.bf16.gmra.mxu0 %v4079
      %v4198 = vpop.f32.mrf.mxu0
      %v4199 = vadd.f32 0.0, %v4198
      %v4200 = vpop.f32.mrf.mxu0
      %v4201 = vpop.f32.mrf.mxu0
      %v4202 = vadd.f32 0.0, %v4201
      %v4203 = vpop.f32.mrf.mxu0
      %4204 = vmatprep.mubr.bf16.mxu0 0
      %4205 = vmatmul.mubr.bf16.gmra.mxu0 %v4082
      %v4206 = vpop.f32.mrf.mxu0
      %v4207 = vadd.f32 0.0, %v4206
      %v4208 = vpop.f32.mrf.mxu0
      %v4209 = vpop.f32.mrf.mxu0
      %v4210 = vadd.f32 0.0, %v4209
      %v4211 = vpop.f32.mrf.mxu0
      %4212 = vmatprep.mubr.bf16.mxu0 0
      %4213 = vmatmul.mubr.bf16.gmra.mxu0 %v4085
      %v4214 = vpop.f32.mrf.mxu0
      %v4215 = vadd.f32 0.0, %v4214
      %v4216 = vpop.f32.mrf.mxu0
      %v4217 = vpop.f32.mrf.mxu0
      %v4218 = vadd.f32 0.0, %v4217
      %v4219 = vpop.f32.mrf.mxu0
      %4220 = vmatprep.mubr.bf16.mxu0 0
      %4221 = vmatmul.mubr.bf16.gmra.mxu0 %v4088
      %v4222 = vpop.f32.mrf.mxu0
      %v4223 = vadd.f32 0.0, %v4222
      %v4224 = vpop.f32.mrf.mxu0
      %v4225 = vpop.f32.mrf.mxu0
      %v4226 = vadd.f32 0.0, %v4225
      %v4227 = vpop.f32.mrf.mxu0
      %4228 = vmatprep.mubr.bf16.mxu0 0
      %4229 = vmatmul.mubr.bf16.gmra.mxu0 %v4091
      %v4230 = vpop.f32.mrf.mxu0
      %v4231 = vadd.f32 0.0, %v4230
      %v4232 = vpop.f32.mrf.mxu0
      %v4233 = vpop.f32.mrf.mxu0
      %v4234 = vadd.f32 0.0, %v4233
      %v4235 = vpop.f32.mrf.mxu0
      %4236 = vmatprep.mubr.bf16.mxu0 0
      %4237 = vmatmul.mubr.bf16.gmra.mxu0 %v4094
      %v4238 = vpop.f32.mrf.mxu0
      %v4239 = vadd.f32 0.0, %v4238
      %v4240 = vpop.f32.mrf.mxu0
      %v4241 = vpop.f32.mrf.mxu0
      %v4242 = vadd.f32 0.0, %v4241
      %v4243 = vpop.f32.mrf.mxu0
      %4244 = vmatprep.mubr.bf16.mxu0 0
      %4245 = vmatmul.mubr.bf16.gmra.mxu0 %v4097
      %v4246 = vpop.f32.mrf.mxu0
      %v4247 = vadd.f32 0.0, %v4246
      %v4248 = vpop.f32.mrf.mxu0
      %v4249 = vpop.f32.mrf.mxu0
      %v4250 = vadd.f32 0.0, %v4249
      %v4251 = vpop.f32.mrf.mxu0
      %4252 = vmatprep.mubr.bf16.mxu0 0
      %4253 = vmatmul.mubr.bf16.gmra.mxu0 %v4100
      %v4254 = vpop.f32.mrf.mxu0
      %v4255 = vadd.f32 0.0, %v4254
      %v4256 = vpop.f32.mrf.mxu0
      %v4257 = vpop.f32.mrf.mxu0
      %v4258 = vadd.f32 0.0, %v4257
      %v4259 = vpop.f32.mrf.mxu0
      %4260 = vmatprep.mubr.bf16.mxu0 0
      %4261 = vmatmul.mubr.bf16.gmra.mxu0 %v4103
      %v4262 = vpop.f32.mrf.mxu0
      %v4263 = vadd.f32 0.0, %v4262
      %v4264 = vpop.f32.mrf.mxu0
      %v4265 = vpop.f32.mrf.mxu0
      %v4266 = vadd.f32 0.0, %v4265
      %v4267 = vpop.f32.mrf.mxu0
      %4268 = vdwg.mxu0
      %v4269 = vadd.f32 %v3975, %v4143
      %v4270 = vadd.f32 %v3976, %v4146
      %v4271 = vadd.f32 %v3977, %v4151
      %v4272 = vadd.f32 %v3978, %v4154
      %v4273 = vadd.f32 %v3979, %v4159
      %v4274 = vadd.f32 %v3980, %v4162
      %v4275 = vadd.f32 %v3981, %v4167
      %v4276 = vadd.f32 %v3982, %v4170
      %v4277 = vadd.f32 %v3983, %v4175
      %v4278 = vadd.f32 %v3984, %v4178
      %v4279 = vadd.f32 %v3985, %v4183
      %v4280 = vadd.f32 %v3986, %v4186
      %v4281 = vadd.f32 %v3987, %v4191
      %v4282 = vadd.f32 %v3988, %v4194
      %v4283 = vadd.f32 %v3989, %v4199
      %v4284 = vadd.f32 %v3990, %v4202
      %v4285 = vadd.f32 %v3991, %v4207
      %v4286 = vadd.f32 %v3992, %v4210
      %v4287 = vadd.f32 %v3993, %v4215
      %v4288 = vadd.f32 %v3994, %v4218
      %v4289 = vadd.f32 %v3995, %v4223
      %v4290 = vadd.f32 %v3996, %v4226
      %v4291 = vadd.f32 %v3997, %v4231
      %v4292 = vadd.f32 %v3998, %v4234
      %v4293 = vadd.f32 %v3999, %v4239
      %v4294 = vadd.f32 %v4000, %v4242
      %v4295 = vadd.f32 %v4001, %v4247
      %v4296 = vadd.f32 %v4002, %v4250
      %v4297 = vadd.f32 %v4003, %v4255
      %v4298 = vadd.f32 %v4004, %v4258
      %v4299 = vadd.f32 %v4005, %v4263
      %v4300 = vadd.f32 %v4006, %v4266
      %v4301 = vld [vmem:[%s2862 + $0x9] sm:$0xff]
      %v4302 = vld [vmem:[%s2862 + $0x11] sm:$0xff]
      %v4303 = vld [vmem:[%s2862 + $0x29] sm:$0xff]
      %v4304 = vld [vmem:[%s2862 + $0x31] sm:$0xff]
      %v4305 = vld [vmem:[%s2862 + $0x49] sm:$0xff]
      %v4306 = vld [vmem:[%s2862 + $0x51] sm:$0xff]
      %v4307 = vld [vmem:[%s2862 + $0x69] sm:$0xff]
      %v4308 = vld [vmem:[%s2862 + $0x71] sm:$0xff]
      %v4309 = vld [vmem:[%s2862 + $0x89] sm:$0xff]
      %v4310 = vld [vmem:[%s2862 + $0x91] sm:$0xff]
      %v4311 = vld [vmem:[%s2862 + $0xa9] sm:$0xff]
      %v4312 = vld [vmem:[%s2862 + $0xb1] sm:$0xff]
      %v4313 = vld [vmem:[%s2862 + $0xc9] sm:$0xff]
      %v4314 = vld [vmem:[%s2862 + $0xd1] sm:$0xff]
      %v4315 = vld [vmem:[%s2862 + $0xe9] sm:$0xff]
      %v4316 = vld [vmem:[%s2862 + $0xf1] sm:$0xff]
      %v4317 = vld [vmem:[%s2862 + $0x109] sm:$0xff]
      %v4318 = vld [vmem:[%s2862 + $0x111] sm:$0xff]
      %v4319 = vld [vmem:[%s2862 + $0x129] sm:$0xff]
      %v4320 = vld [vmem:[%s2862 + $0x131] sm:$0xff]
      %v4321 = vld [vmem:[%s2862 + $0x149] sm:$0xff]
      %v4322 = vld [vmem:[%s2862 + $0x151] sm:$0xff]
      %v4323 = vld [vmem:[%s2862 + $0x169] sm:$0xff]
      %v4324 = vld [vmem:[%s2862 + $0x171] sm:$0xff]
      %v4325 = vld [vmem:[%s2862 + $0x189] sm:$0xff]
      %v4326 = vld [vmem:[%s2862 + $0x191] sm:$0xff]
      %v4327 = vld [vmem:[%s2862 + $0x1a9] sm:$0xff]
      %v4328 = vld [vmem:[%s2862 + $0x1b1] sm:$0xff]
      %v4329 = vld [vmem:[%s2862 + $0x1c9] sm:$0xff]
      %v4330 = vld [vmem:[%s2862 + $0x1d1] sm:$0xff]
      %v4331 = vld [vmem:[%s2862 + $0x1e9] sm:$0xff]
      %v4332 = vld [vmem:[%s2862 + $0x1f1] sm:$0xff]
      %v4333 = vpack.c.bf16 %v4302, %v4301
      %v4334 = vpack.c.bf16 %v4304, %v4303
      %v4335 = vpack.c.bf16 %v4306, %v4305
      %v4336 = vpack.c.bf16 %v4308, %v4307
      %v4337 = vpack.c.bf16 %v4310, %v4309
      %v4338 = vpack.c.bf16 %v4312, %v4311
      %v4339 = vpack.c.bf16 %v4314, %v4313
      %v4340 = vpack.c.bf16 %v4316, %v4315
      %v4341 = vpack.c.bf16 %v4318, %v4317
      %v4342 = vpack.c.bf16 %v4320, %v4319
      %v4343 = vpack.c.bf16 %v4322, %v4321
      %v4344 = vpack.c.bf16 %v4324, %v4323
      %v4345 = vpack.c.bf16 %v4326, %v4325
      %v4346 = vpack.c.bf16 %v4328, %v4327
      %v4347 = vpack.c.bf16 %v4330, %v4329
      %v4348 = vpack.c.bf16 %v4332, %v4331
      %s4349 = scalar_lea.vmem %s2, 20
      %v4350 = vld [vmem:[%s4349] sm:$0xf]
      %v4352 = vsel %vm2789, %v4333, 0
      %v4355 = vsel %vm2789, %v4334, 0
      %v4358 = vsel %vm2789, %v4335, 0
      %v4361 = vsel %vm2789, %v4336, 0
      %v4364 = vsel %vm2789, %v4337, 0
      %v4367 = vsel %vm2789, %v4338, 0
      %v4370 = vsel %vm2789, %v4339, 0
      %v4373 = vsel %vm2789, %v4340, 0
      %v4376 = vsel %vm2789, %v4341, 0
      %v4379 = vsel %vm2789, %v4342, 0
      %v4382 = vsel %vm2789, %v4343, 0
      %v4385 = vsel %vm2789, %v4344, 0
      %v4388 = vsel %vm2789, %v4345, 0
      %v4391 = vsel %vm2789, %v4346, 0
      %v4394 = vsel %vm2789, %v4347, 0
      %v4397 = vsel %vm2789, %v4348, 0
      %v4400 = vsel %vm3042, %v4350, 0
      %4402 = vmatprep.subr.bf16.mxu0 0
      %4403 = vmatpush1.bf16.msra.mxu0 0
      %4404 = vmatprep.subr.bf16.mxu0 0
      %4405 = vmatpush1.bf16.msra.mxu0 0
      %4406 = vmatprep.subr.bf16.mxu0 0
      %4407 = vmatpush1.bf16.msra.mxu0 0
      %4408 = vmatprep.subr.bf16.mxu0 0
      %4409 = vmatpush1.bf16.msra.mxu0 0
      %4410 = vmatprep.subr.bf16.mxu0 0
      %4411 = vmatpush1.bf16.msra.mxu0 0
      %4412 = vmatprep.subr.bf16.mxu0 0
      %4413 = vmatpush1.bf16.msra.mxu0 0
      %4414 = vmatprep.subr.bf16.mxu0 0
      %4415 = vmatpush1.bf16.msra.mxu0 0
      %4416 = vmatprep.subr.bf16.mxu0 0
      %4417 = vmatpush1.bf16.msra.mxu0 %v4400
      %4418 = vmatprep.subr.bf16.mxu0 0
      %4419 = vmatpush2.bf16.msra.mxu0 0
      %4420 = vmatprep.subr.bf16.mxu0 0
      %4421 = vmatpush2.bf16.msra.mxu0 0
      %4422 = vmatprep.subr.bf16.mxu0 0
      %4423 = vmatpush2.bf16.msra.mxu0 0
      %4424 = vmatprep.subr.bf16.mxu0 0
      %4425 = vmatpush2.bf16.msra.mxu0 0
      %4426 = vmatprep.subr.bf16.mxu0 0
      %4427 = vmatpush2.bf16.msra.mxu0 0
      %4428 = vmatprep.subr.bf16.mxu0 0
      %4429 = vmatpush2.bf16.msra.mxu0 0
      %4430 = vmatprep.subr.bf16.mxu0 0
      %4431 = vmatpush2.bf16.msra.mxu0 0
      %4432 = vmatprep.subr.bf16.mxu0 0
      %4433 = vmatpush2.bf16.msra.mxu0 0
      %4434 = vmatprep.mubr.bf16.mxu0 0
      %4435 = vmatmul.mubr.bf16.gmra.mxu0 %v4352
      %v4436 = vpop.f32.mrf.mxu0
      %v4437 = vadd.f32 0.0, %v4436
      %v4438 = vpop.f32.mrf.mxu0
      %v4439 = vpop.f32.mrf.mxu0
      %v4440 = vadd.f32 0.0, %v4439
      %v4441 = vpop.f32.mrf.mxu0
      %4442 = vmatprep.mubr.bf16.mxu0 0
      %4443 = vmatmul.mubr.bf16.gmra.mxu0 %v4355
      %v4444 = vpop.f32.mrf.mxu0
      %v4445 = vadd.f32 0.0, %v4444
      %v4446 = vpop.f32.mrf.mxu0
      %v4447 = vpop.f32.mrf.mxu0
      %v4448 = vadd.f32 0.0, %v4447
      %v4449 = vpop.f32.mrf.mxu0
      %4450 = vmatprep.mubr.bf16.mxu0 0
      %4451 = vmatmul.mubr.bf16.gmra.mxu0 %v4358
      %v4452 = vpop.f32.mrf.mxu0
      %v4453 = vadd.f32 0.0, %v4452
      %v4454 = vpop.f32.mrf.mxu0
      %v4455 = vpop.f32.mrf.mxu0
      %v4456 = vadd.f32 0.0, %v4455
      %v4457 = vpop.f32.mrf.mxu0
      %4458 = vmatprep.mubr.bf16.mxu0 0
      %4459 = vmatmul.mubr.bf16.gmra.mxu0 %v4361
      %v4460 = vpop.f32.mrf.mxu0
      %v4461 = vadd.f32 0.0, %v4460
      %v4462 = vpop.f32.mrf.mxu0
      %v4463 = vpop.f32.mrf.mxu0
      %v4464 = vadd.f32 0.0, %v4463
      %v4465 = vpop.f32.mrf.mxu0
      %4466 = vmatprep.mubr.bf16.mxu0 0
      %4467 = vmatmul.mubr.bf16.gmra.mxu0 %v4364
      %v4468 = vpop.f32.mrf.mxu0
      %v4469 = vadd.f32 0.0, %v4468
      %v4470 = vpop.f32.mrf.mxu0
      %v4471 = vpop.f32.mrf.mxu0
      %v4472 = vadd.f32 0.0, %v4471
      %v4473 = vpop.f32.mrf.mxu0
      %4474 = vmatprep.mubr.bf16.mxu0 0
      %4475 = vmatmul.mubr.bf16.gmra.mxu0 %v4367
      %v4476 = vpop.f32.mrf.mxu0
      %v4477 = vadd.f32 0.0, %v4476
      %v4478 = vpop.f32.mrf.mxu0
      %v4479 = vpop.f32.mrf.mxu0
      %v4480 = vadd.f32 0.0, %v4479
      %v4481 = vpop.f32.mrf.mxu0
      %4482 = vmatprep.mubr.bf16.mxu0 0
      %4483 = vmatmul.mubr.bf16.gmra.mxu0 %v4370
      %v4484 = vpop.f32.mrf.mxu0
      %v4485 = vadd.f32 0.0, %v4484
      %v4486 = vpop.f32.mrf.mxu0
      %v4487 = vpop.f32.mrf.mxu0
      %v4488 = vadd.f32 0.0, %v4487
      %v4489 = vpop.f32.mrf.mxu0
      %4490 = vmatprep.mubr.bf16.mxu0 0
      %4491 = vmatmul.mubr.bf16.gmra.mxu0 %v4373
      %v4492 = vpop.f32.mrf.mxu0
      %v4493 = vadd.f32 0.0, %v4492
      %v4494 = vpop.f32.mrf.mxu0
      %v4495 = vpop.f32.mrf.mxu0
      %v4496 = vadd.f32 0.0, %v4495
      %v4497 = vpop.f32.mrf.mxu0
      %4498 = vmatprep.mubr.bf16.mxu0 0
      %4499 = vmatmul.mubr.bf16.gmra.mxu0 %v4376
      %v4500 = vpop.f32.mrf.mxu0
      %v4501 = vadd.f32 0.0, %v4500
      %v4502 = vpop.f32.mrf.mxu0
      %v4503 = vpop.f32.mrf.mxu0
      %v4504 = vadd.f32 0.0, %v4503
      %v4505 = vpop.f32.mrf.mxu0
      %4506 = vmatprep.mubr.bf16.mxu0 0
      %4507 = vmatmul.mubr.bf16.gmra.mxu0 %v4379
      %v4508 = vpop.f32.mrf.mxu0
      %v4509 = vadd.f32 0.0, %v4508
      %v4510 = vpop.f32.mrf.mxu0
      %v4511 = vpop.f32.mrf.mxu0
      %v4512 = vadd.f32 0.0, %v4511
      %v4513 = vpop.f32.mrf.mxu0
      %4514 = vmatprep.mubr.bf16.mxu0 0
      %4515 = vmatmul.mubr.bf16.gmra.mxu0 %v4382
      %v4516 = vpop.f32.mrf.mxu0
      %v4517 = vadd.f32 0.0, %v4516
      %v4518 = vpop.f32.mrf.mxu0
      %v4519 = vpop.f32.mrf.mxu0
      %v4520 = vadd.f32 0.0, %v4519
      %v4521 = vpop.f32.mrf.mxu0
      %4522 = vmatprep.mubr.bf16.mxu0 0
      %4523 = vmatmul.mubr.bf16.gmra.mxu0 %v4385
      %v4524 = vpop.f32.mrf.mxu0
      %v4525 = vadd.f32 0.0, %v4524
      %v4526 = vpop.f32.mrf.mxu0
      %v4527 = vpop.f32.mrf.mxu0
      %v4528 = vadd.f32 0.0, %v4527
      %v4529 = vpop.f32.mrf.mxu0
      %4530 = vmatprep.mubr.bf16.mxu0 0
      %4531 = vmatmul.mubr.bf16.gmra.mxu0 %v4388
      %v4532 = vpop.f32.mrf.mxu0
      %v4533 = vadd.f32 0.0, %v4532
      %v4534 = vpop.f32.mrf.mxu0
      %v4535 = vpop.f32.mrf.mxu0
      %v4536 = vadd.f32 0.0, %v4535
      %v4537 = vpop.f32.mrf.mxu0
      %4538 = vmatprep.mubr.bf16.mxu0 0
      %4539 = vmatmul.mubr.bf16.gmra.mxu0 %v4391
      %v4540 = vpop.f32.mrf.mxu0
      %v4541 = vadd.f32 0.0, %v4540
      %v4542 = vpop.f32.mrf.mxu0
      %v4543 = vpop.f32.mrf.mxu0
      %v4544 = vadd.f32 0.0, %v4543
      %v4545 = vpop.f32.mrf.mxu0
      %4546 = vmatprep.mubr.bf16.mxu0 0
      %4547 = vmatmul.mubr.bf16.gmra.mxu0 %v4394
      %v4548 = vpop.f32.mrf.mxu0
      %v4549 = vadd.f32 0.0, %v4548
      %v4550 = vpop.f32.mrf.mxu0
      %v4551 = vpop.f32.mrf.mxu0
      %v4552 = vadd.f32 0.0, %v4551
      %v4553 = vpop.f32.mrf.mxu0
      %4554 = vmatprep.mubr.bf16.mxu0 0
      %4555 = vmatmul.mubr.bf16.gmra.mxu0 %v4397
      %v4556 = vpop.f32.mrf.mxu0
      %v4557 = vadd.f32 0.0, %v4556
      %v4558 = vpop.f32.mrf.mxu0
      %v4559 = vpop.f32.mrf.mxu0
      %v4560 = vadd.f32 0.0, %v4559
      %v4561 = vpop.f32.mrf.mxu0
      %4562 = vdwg.mxu0
      %v4563 = vadd.f32 %v4269, %v4437
      %v4564 = vadd.f32 %v4270, %v4440
      %v4565 = vadd.f32 %v4271, %v4445
      %v4566 = vadd.f32 %v4272, %v4448
      %v4567 = vadd.f32 %v4273, %v4453
      %v4568 = vadd.f32 %v4274, %v4456
      %v4569 = vadd.f32 %v4275, %v4461
      %v4570 = vadd.f32 %v4276, %v4464
      %v4571 = vadd.f32 %v4277, %v4469
      %v4572 = vadd.f32 %v4278, %v4472
      %v4573 = vadd.f32 %v4279, %v4477
      %v4574 = vadd.f32 %v4280, %v4480
      %v4575 = vadd.f32 %v4281, %v4485
      %v4576 = vadd.f32 %v4282, %v4488
      %v4577 = vadd.f32 %v4283, %v4493
      %v4578 = vadd.f32 %v4284, %v4496
      %v4579 = vadd.f32 %v4285, %v4501
      %v4580 = vadd.f32 %v4286, %v4504
      %v4581 = vadd.f32 %v4287, %v4509
      %v4582 = vadd.f32 %v4288, %v4512
      %v4583 = vadd.f32 %v4289, %v4517
      %v4584 = vadd.f32 %v4290, %v4520
      %v4585 = vadd.f32 %v4291, %v4525
      %v4586 = vadd.f32 %v4292, %v4528
      %v4587 = vadd.f32 %v4293, %v4533
      %v4588 = vadd.f32 %v4294, %v4536
      %v4589 = vadd.f32 %v4295, %v4541
      %v4590 = vadd.f32 %v4296, %v4544
      %v4591 = vadd.f32 %v4297, %v4549
      %v4592 = vadd.f32 %v4298, %v4552
      %v4593 = vadd.f32 %v4299, %v4557
      %v4594 = vadd.f32 %v4300, %v4560
      %s4595 = scalar_lea.vmem [#allocation2], 64
      %v4596 = vld [vmem:[%s4595 + $0x7] sm:$0xff]
      %v4597 = vld [vmem:[%s4595 + $0xf] sm:$0xff]
      %v4598 = vld [vmem:[%s4595 + $0x27] sm:$0xff]
      %v4599 = vld [vmem:[%s4595 + $0x2f] sm:$0xff]
      %v4600 = vld [vmem:[%s4595 + $0x47] sm:$0xff]
      %v4601 = vld [vmem:[%s4595 + $0x4f] sm:$0xff]
      %v4602 = vld [vmem:[%s4595 + $0x67] sm:$0xff]
      %v4603 = vld [vmem:[%s4595 + $0x6f] sm:$0xff]
      %v4604 = vld [vmem:[%s4595 + $0x87] sm:$0xff]
      %v4605 = vld [vmem:[%s4595 + $0x8f] sm:$0xff]
      %v4606 = vld [vmem:[%s4595 + $0xa7] sm:$0xff]
      %v4607 = vld [vmem:[%s4595 + $0xaf] sm:$0xff]
      %v4608 = vld [vmem:[%s4595 + $0xc7] sm:$0xff]
      %v4609 = vld [vmem:[%s4595 + $0xcf] sm:$0xff]
      %v4610 = vld [vmem:[%s4595 + $0xe7] sm:$0xff]
      %v4611 = vld [vmem:[%s4595 + $0xef] sm:$0xff]
      %v4612 = vld [vmem:[%s4595 + $0x107] sm:$0xff]
      %v4613 = vld [vmem:[%s4595 + $0x10f] sm:$0xff]
      %v4614 = vld [vmem:[%s4595 + $0x127] sm:$0xff]
      %v4615 = vld [vmem:[%s4595 + $0x12f] sm:$0xff]
      %v4616 = vld [vmem:[%s4595 + $0x147] sm:$0xff]
      %v4617 = vld [vmem:[%s4595 + $0x14f] sm:$0xff]
      %v4618 = vld [vmem:[%s4595 + $0x167] sm:$0xff]
      %v4619 = vld [vmem:[%s4595 + $0x16f] sm:$0xff]
      %v4620 = vld [vmem:[%s4595 + $0x187] sm:$0xff]
      %v4621 = vld [vmem:[%s4595 + $0x18f] sm:$0xff]
      %v4622 = vld [vmem:[%s4595 + $0x1a7] sm:$0xff]
      %v4623 = vld [vmem:[%s4595 + $0x1af] sm:$0xff]
      %v4624 = vld [vmem:[%s4595 + $0x1c7] sm:$0xff]
      %v4625 = vld [vmem:[%s4595 + $0x1cf] sm:$0xff]
      %v4626 = vld [vmem:[%s4595 + $0x1e7] sm:$0xff]
      %v4627 = vld [vmem:[%s4595 + $0x1ef] sm:$0xff]
      %v4628 = vpack.c.bf16 %v4597, %v4596
      %v4629 = vpack.c.bf16 %v4599, %v4598
      %v4630 = vpack.c.bf16 %v4601, %v4600
      %v4631 = vpack.c.bf16 %v4603, %v4602
      %v4632 = vpack.c.bf16 %v4605, %v4604
      %v4633 = vpack.c.bf16 %v4607, %v4606
      %v4634 = vpack.c.bf16 %v4609, %v4608
      %v4635 = vpack.c.bf16 %v4611, %v4610
      %v4636 = vpack.c.bf16 %v4613, %v4612
      %v4637 = vpack.c.bf16 %v4615, %v4614
      %v4638 = vpack.c.bf16 %v4617, %v4616
      %v4639 = vpack.c.bf16 %v4619, %v4618
      %v4640 = vpack.c.bf16 %v4621, %v4620
      %v4641 = vpack.c.bf16 %v4623, %v4622
      %v4642 = vpack.c.bf16 %v4625, %v4624
      %v4643 = vpack.c.bf16 %v4627, %v4626
      %s4644 = scalar_lea.vmem %s2, 24
      %v4645 = vld [vmem:[%s4644] sm:$0xf]
      %v4647 = vsel %vm2789, %v4628, 0
      %v4650 = vsel %vm2789, %v4629, 0
      %v4653 = vsel %vm2789, %v4630, 0
      %v4656 = vsel %vm2789, %v4631, 0
      %v4659 = vsel %vm2789, %v4632, 0
      %v4662 = vsel %vm2789, %v4633, 0
      %v4665 = vsel %vm2789, %v4634, 0
      %v4668 = vsel %vm2789, %v4635, 0
      %v4671 = vsel %vm2789, %v4636, 0
      %v4674 = vsel %vm2789, %v4637, 0
      %v4677 = vsel %vm2789, %v4638, 0
      %v4680 = vsel %vm2789, %v4639, 0
      %v4683 = vsel %vm2789, %v4640, 0
      %v4686 = vsel %vm2789, %v4641, 0
      %v4689 = vsel %vm2789, %v4642, 0
      %v4692 = vsel %vm2789, %v4643, 0
      %v4695 = vsel %vm3042, %v4645, 0
      %4697 = vmatprep.subr.bf16.mxu0 0
      %4698 = vmatpush1.bf16.msra.mxu0 0
      %4699 = vmatprep.subr.bf16.mxu0 0
      %4700 = vmatpush1.bf16.msra.mxu0 0
      %4701 = vmatprep.subr.bf16.mxu0 0
      %4702 = vmatpush1.bf16.msra.mxu0 0
      %4703 = vmatprep.subr.bf16.mxu0 0
      %4704 = vmatpush1.bf16.msra.mxu0 0
      %4705 = vmatprep.subr.bf16.mxu0 0
      %4706 = vmatpush1.bf16.msra.mxu0 0
      %4707 = vmatprep.subr.bf16.mxu0 0
      %4708 = vmatpush1.bf16.msra.mxu0 0
      %4709 = vmatprep.subr.bf16.mxu0 0
      %4710 = vmatpush1.bf16.msra.mxu0 0
      %4711 = vmatprep.subr.bf16.mxu0 0
      %4712 = vmatpush1.bf16.msra.mxu0 %v4695
      %4713 = vmatprep.subr.bf16.mxu0 0
      %4714 = vmatpush2.bf16.msra.mxu0 0
      %4715 = vmatprep.subr.bf16.mxu0 0
      %4716 = vmatpush2.bf16.msra.mxu0 0
      %4717 = vmatprep.subr.bf16.mxu0 0
      %4718 = vmatpush2.bf16.msra.mxu0 0
      %4719 = vmatprep.subr.bf16.mxu0 0
      %4720 = vmatpush2.bf16.msra.mxu0 0
      %4721 = vmatprep.subr.bf16.mxu0 0
      %4722 = vmatpush2.bf16.msra.mxu0 0
      %4723 = vmatprep.subr.bf16.mxu0 0
      %4724 = vmatpush2.bf16.msra.mxu0 0
      %4725 = vmatprep.subr.bf16.mxu0 0
      %4726 = vmatpush2.bf16.msra.mxu0 0
      %4727 = vmatprep.subr.bf16.mxu0 0
      %4728 = vmatpush2.bf16.msra.mxu0 0
      %4729 = vmatprep.mubr.bf16.mxu0 0
      %4730 = vmatmul.mubr.bf16.gmra.mxu0 %v4647
      %v4731 = vpop.f32.mrf.mxu0
      %v4732 = vadd.f32 0.0, %v4731
      %v4733 = vpop.f32.mrf.mxu0
      %v4734 = vpop.f32.mrf.mxu0
      %v4735 = vadd.f32 0.0, %v4734
      %v4736 = vpop.f32.mrf.mxu0
      %4737 = vmatprep.mubr.bf16.mxu0 0
      %4738 = vmatmul.mubr.bf16.gmra.mxu0 %v4650
      %v4739 = vpop.f32.mrf.mxu0
      %v4740 = vadd.f32 0.0, %v4739
      %v4741 = vpop.f32.mrf.mxu0
      %v4742 = vpop.f32.mrf.mxu0
      %v4743 = vadd.f32 0.0, %v4742
      %v4744 = vpop.f32.mrf.mxu0
      %4745 = vmatprep.mubr.bf16.mxu0 0
      %4746 = vmatmul.mubr.bf16.gmra.mxu0 %v4653
      %v4747 = vpop.f32.mrf.mxu0
      %v4748 = vadd.f32 0.0, %v4747
      %v4749 = vpop.f32.mrf.mxu0
      %v4750 = vpop.f32.mrf.mxu0
      %v4751 = vadd.f32 0.0, %v4750
      %v4752 = vpop.f32.mrf.mxu0
      %4753 = vmatprep.mubr.bf16.mxu0 0
      %4754 = vmatmul.mubr.bf16.gmra.mxu0 %v4656
      %v4755 = vpop.f32.mrf.mxu0
      %v4756 = vadd.f32 0.0, %v4755
      %v4757 = vpop.f32.mrf.mxu0
      %v4758 = vpop.f32.mrf.mxu0
      %v4759 = vadd.f32 0.0, %v4758
      %v4760 = vpop.f32.mrf.mxu0
      %4761 = vmatprep.mubr.bf16.mxu0 0
      %4762 = vmatmul.mubr.bf16.gmra.mxu0 %v4659
      %v4763 = vpop.f32.mrf.mxu0
      %v4764 = vadd.f32 0.0, %v4763
      %v4765 = vpop.f32.mrf.mxu0
      %v4766 = vpop.f32.mrf.mxu0
      %v4767 = vadd.f32 0.0, %v4766
      %v4768 = vpop.f32.mrf.mxu0
      %4769 = vmatprep.mubr.bf16.mxu0 0
      %4770 = vmatmul.mubr.bf16.gmra.mxu0 %v4662
      %v4771 = vpop.f32.mrf.mxu0
      %v4772 = vadd.f32 0.0, %v4771
      %v4773 = vpop.f32.mrf.mxu0
      %v4774 = vpop.f32.mrf.mxu0
      %v4775 = vadd.f32 0.0, %v4774
      %v4776 = vpop.f32.mrf.mxu0
      %4777 = vmatprep.mubr.bf16.mxu0 0
      %4778 = vmatmul.mubr.bf16.gmra.mxu0 %v4665
      %v4779 = vpop.f32.mrf.mxu0
      %v4780 = vadd.f32 0.0, %v4779
      %v4781 = vpop.f32.mrf.mxu0
      %v4782 = vpop.f32.mrf.mxu0
      %v4783 = vadd.f32 0.0, %v4782
      %v4784 = vpop.f32.mrf.mxu0
      %4785 = vmatprep.mubr.bf16.mxu0 0
      %4786 = vmatmul.mubr.bf16.gmra.mxu0 %v4668
      %v4787 = vpop.f32.mrf.mxu0
      %v4788 = vadd.f32 0.0, %v4787
      %v4789 = vpop.f32.mrf.mxu0
      %v4790 = vpop.f32.mrf.mxu0
      %v4791 = vadd.f32 0.0, %v4790
      %v4792 = vpop.f32.mrf.mxu0
      %4793 = vmatprep.mubr.bf16.mxu0 0
      %4794 = vmatmul.mubr.bf16.gmra.mxu0 %v4671
      %v4795 = vpop.f32.mrf.mxu0
      %v4796 = vadd.f32 0.0, %v4795
      %v4797 = vpop.f32.mrf.mxu0
      %v4798 = vpop.f32.mrf.mxu0
      %v4799 = vadd.f32 0.0, %v4798
      %v4800 = vpop.f32.mrf.mxu0
      %4801 = vmatprep.mubr.bf16.mxu0 0
      %4802 = vmatmul.mubr.bf16.gmra.mxu0 %v4674
      %v4803 = vpop.f32.mrf.mxu0
      %v4804 = vadd.f32 0.0, %v4803
      %v4805 = vpop.f32.mrf.mxu0
      %v4806 = vpop.f32.mrf.mxu0
      %v4807 = vadd.f32 0.0, %v4806
      %v4808 = vpop.f32.mrf.mxu0
      %4809 = vmatprep.mubr.bf16.mxu0 0
      %4810 = vmatmul.mubr.bf16.gmra.mxu0 %v4677
      %v4811 = vpop.f32.mrf.mxu0
      %v4812 = vadd.f32 0.0, %v4811
      %v4813 = vpop.f32.mrf.mxu0
      %v4814 = vpop.f32.mrf.mxu0
      %v4815 = vadd.f32 0.0, %v4814
      %v4816 = vpop.f32.mrf.mxu0
      %4817 = vmatprep.mubr.bf16.mxu0 0
      %4818 = vmatmul.mubr.bf16.gmra.mxu0 %v4680
      %v4819 = vpop.f32.mrf.mxu0
      %v4820 = vadd.f32 0.0, %v4819
      %v4821 = vpop.f32.mrf.mxu0
      %v4822 = vpop.f32.mrf.mxu0
      %v4823 = vadd.f32 0.0, %v4822
      %v4824 = vpop.f32.mrf.mxu0
      %4825 = vmatprep.mubr.bf16.mxu0 0
      %4826 = vmatmul.mubr.bf16.gmra.mxu0 %v4683
      %v4827 = vpop.f32.mrf.mxu0
      %v4828 = vadd.f32 0.0, %v4827
      %v4829 = vpop.f32.mrf.mxu0
      %v4830 = vpop.f32.mrf.mxu0
      %v4831 = vadd.f32 0.0, %v4830
      %v4832 = vpop.f32.mrf.mxu0
      %4833 = vmatprep.mubr.bf16.mxu0 0
      %4834 = vmatmul.mubr.bf16.gmra.mxu0 %v4686
      %v4835 = vpop.f32.mrf.mxu0
      %v4836 = vadd.f32 0.0, %v4835
      %v4837 = vpop.f32.mrf.mxu0
      %v4838 = vpop.f32.mrf.mxu0
      %v4839 = vadd.f32 0.0, %v4838
      %v4840 = vpop.f32.mrf.mxu0
      %4841 = vmatprep.mubr.bf16.mxu0 0
      %4842 = vmatmul.mubr.bf16.gmra.mxu0 %v4689
      %v4843 = vpop.f32.mrf.mxu0
      %v4844 = vadd.f32 0.0, %v4843
      %v4845 = vpop.f32.mrf.mxu0
      %v4846 = vpop.f32.mrf.mxu0
      %v4847 = vadd.f32 0.0, %v4846
      %v4848 = vpop.f32.mrf.mxu0
      %4849 = vmatprep.mubr.bf16.mxu0 0
      %4850 = vmatmul.mubr.bf16.gmra.mxu0 %v4692
      %v4851 = vpop.f32.mrf.mxu0
      %v4852 = vadd.f32 0.0, %v4851
      %v4853 = vpop.f32.mrf.mxu0
      %v4854 = vpop.f32.mrf.mxu0
      %v4855 = vadd.f32 0.0, %v4854
      %v4856 = vpop.f32.mrf.mxu0
      %4857 = vdwg.mxu0
      %v4858 = vadd.f32 %v4563, %v4732
      %v4859 = vadd.f32 %v4564, %v4735
      %v4860 = vadd.f32 %v4565, %v4740
      %v4861 = vadd.f32 %v4566, %v4743
      %v4862 = vadd.f32 %v4567, %v4748
      %v4863 = vadd.f32 %v4568, %v4751
      %v4864 = vadd.f32 %v4569, %v4756
      %v4865 = vadd.f32 %v4570, %v4759
      %v4866 = vadd.f32 %v4571, %v4764
      %v4867 = vadd.f32 %v4572, %v4767
      %v4868 = vadd.f32 %v4573, %v4772
      %v4869 = vadd.f32 %v4574, %v4775
      %v4870 = vadd.f32 %v4575, %v4780
      %v4871 = vadd.f32 %v4576, %v4783
      %v4872 = vadd.f32 %v4577, %v4788
      %v4873 = vadd.f32 %v4578, %v4791
      %v4874 = vadd.f32 %v4579, %v4796
      %v4875 = vadd.f32 %v4580, %v4799
      %v4876 = vadd.f32 %v4581, %v4804
      %v4877 = vadd.f32 %v4582, %v4807
      %v4878 = vadd.f32 %v4583, %v4812
      %v4879 = vadd.f32 %v4584, %v4815
      %v4880 = vadd.f32 %v4585, %v4820
      %v4881 = vadd.f32 %v4586, %v4823
      %v4882 = vadd.f32 %v4587, %v4828
      %v4883 = vadd.f32 %v4588, %v4831
      %v4884 = vadd.f32 %v4589, %v4836
      %v4885 = vadd.f32 %v4590, %v4839
      %v4886 = vadd.f32 %v4591, %v4844
      %v4887 = vadd.f32 %v4592, %v4847
      %v4888 = vadd.f32 %v4593, %v4852
      %v4889 = vadd.f32 %v4594, %v4855
      %v4890 = vld [vmem:[%s4595 + $0x8] sm:$0xff]
      %v4891 = vld [vmem:[%s4595 + $0x10] sm:$0xff]
      %v4892 = vld [vmem:[%s4595 + $0x28] sm:$0xff]
      %v4893 = vld [vmem:[%s4595 + $0x30] sm:$0xff]
      %v4894 = vld [vmem:[%s4595 + $0x48] sm:$0xff]
      %v4895 = vld [vmem:[%s4595 + $0x50] sm:$0xff]
      %v4896 = vld [vmem:[%s4595 + $0x68] sm:$0xff]
      %v4897 = vld [vmem:[%s4595 + $0x70] sm:$0xff]
      %v4898 = vld [vmem:[%s4595 + $0x88] sm:$0xff]
      %v4899 = vld [vmem:[%s4595 + $0x90] sm:$0xff]
      %v4900 = vld [vmem:[%s4595 + $0xa8] sm:$0xff]
      %v4901 = vld [vmem:[%s4595 + $0xb0] sm:$0xff]
      %v4902 = vld [vmem:[%s4595 + $0xc8] sm:$0xff]
      %v4903 = vld [vmem:[%s4595 + $0xd0] sm:$0xff]
      %v4904 = vld [vmem:[%s4595 + $0xe8] sm:$0xff]
      %v4905 = vld [vmem:[%s4595 + $0xf0] sm:$0xff]
      %v4906 = vld [vmem:[%s4595 + $0x108] sm:$0xff]
      %v4907 = vld [vmem:[%s4595 + $0x110] sm:$0xff]
      %v4908 = vld [vmem:[%s4595 + $0x128] sm:$0xff]
      %v4909 = vld [vmem:[%s4595 + $0x130] sm:$0xff]
      %v4910 = vld [vmem:[%s4595 + $0x148] sm:$0xff]
      %v4911 = vld [vmem:[%s4595 + $0x150] sm:$0xff]
      %v4912 = vld [vmem:[%s4595 + $0x168] sm:$0xff]
      %v4913 = vld [vmem:[%s4595 + $0x170] sm:$0xff]
      %v4914 = vld [vmem:[%s4595 + $0x188] sm:$0xff]
      %v4915 = vld [vmem:[%s4595 + $0x190] sm:$0xff]
      %v4916 = vld [vmem:[%s4595 + $0x1a8] sm:$0xff]
      %v4917 = vld [vmem:[%s4595 + $0x1b0] sm:$0xff]
      %v4918 = vld [vmem:[%s4595 + $0x1c8] sm:$0xff]
      %v4919 = vld [vmem:[%s4595 + $0x1d0] sm:$0xff]
      %v4920 = vld [vmem:[%s4595 + $0x1e8] sm:$0xff]
      %v4921 = vld [vmem:[%s4595 + $0x1f0] sm:$0xff]
      %v4922 = vpack.c.bf16 %v4891, %v4890
      %v4923 = vpack.c.bf16 %v4893, %v4892
      %v4924 = vpack.c.bf16 %v4895, %v4894
      %v4925 = vpack.c.bf16 %v4897, %v4896
      %v4926 = vpack.c.bf16 %v4899, %v4898
      %v4927 = vpack.c.bf16 %v4901, %v4900
      %v4928 = vpack.c.bf16 %v4903, %v4902
      %v4929 = vpack.c.bf16 %v4905, %v4904
      %v4930 = vpack.c.bf16 %v4907, %v4906
      %v4931 = vpack.c.bf16 %v4909, %v4908
      %v4932 = vpack.c.bf16 %v4911, %v4910
      %v4933 = vpack.c.bf16 %v4913, %v4912
      %v4934 = vpack.c.bf16 %v4915, %v4914
      %v4935 = vpack.c.bf16 %v4917, %v4916
      %v4936 = vpack.c.bf16 %v4919, %v4918
      %v4937 = vpack.c.bf16 %v4921, %v4920
      %s4938 = scalar_lea.vmem %s2, 28
      %v4939 = vld [vmem:[%s4938] sm:$0xf]
      %v4941 = vsel %vm2789, %v4922, 0
      %v4944 = vsel %vm2789, %v4923, 0
      %v4947 = vsel %vm2789, %v4924, 0
      %v4950 = vsel %vm2789, %v4925, 0
      %v4953 = vsel %vm2789, %v4926, 0
      %v4956 = vsel %vm2789, %v4927, 0
      %v4959 = vsel %vm2789, %v4928, 0
      %v4962 = vsel %vm2789, %v4929, 0
      %v4965 = vsel %vm2789, %v4930, 0
      %v4968 = vsel %vm2789, %v4931, 0
      %v4971 = vsel %vm2789, %v4932, 0
      %v4974 = vsel %vm2789, %v4933, 0
      %v4977 = vsel %vm2789, %v4934, 0
      %v4980 = vsel %vm2789, %v4935, 0
      %v4983 = vsel %vm2789, %v4936, 0
      %v4986 = vsel %vm2789, %v4937, 0
      %v4989 = vsel %vm3042, %v4939, 0
      %4991 = vmatprep.subr.bf16.mxu0 0
      %4992 = vmatpush1.bf16.msra.mxu0 0
      %4993 = vmatprep.subr.bf16.mxu0 0
      %4994 = vmatpush1.bf16.msra.mxu0 0
      %4995 = vmatprep.subr.bf16.mxu0 0
      %4996 = vmatpush1.bf16.msra.mxu0 0
      %4997 = vmatprep.subr.bf16.mxu0 0
      %4998 = vmatpush1.bf16.msra.mxu0 0
      %4999 = vmatprep.subr.bf16.mxu0 0
      %5000 = vmatpush1.bf16.msra.mxu0 0
      %5001 = vmatprep.subr.bf16.mxu0 0
      %5002 = vmatpush1.bf16.msra.mxu0 0
      %5003 = vmatprep.subr.bf16.mxu0 0
      %5004 = vmatpush1.bf16.msra.mxu0 0
      %5005 = vmatprep.subr.bf16.mxu0 0
      %5006 = vmatpush1.bf16.msra.mxu0 %v4989
      %5007 = vmatprep.subr.bf16.mxu0 0
      %5008 = vmatpush2.bf16.msra.mxu0 0
      %5009 = vmatprep.subr.bf16.mxu0 0
      %5010 = vmatpush2.bf16.msra.mxu0 0
      %5011 = vmatprep.subr.bf16.mxu0 0
      %5012 = vmatpush2.bf16.msra.mxu0 0
      %5013 = vmatprep.subr.bf16.mxu0 0
      %5014 = vmatpush2.bf16.msra.mxu0 0
      %5015 = vmatprep.subr.bf16.mxu0 0
      %5016 = vmatpush2.bf16.msra.mxu0 0
      %5017 = vmatprep.subr.bf16.mxu0 0
      %5018 = vmatpush2.bf16.msra.mxu0 0
      %5019 = vmatprep.subr.bf16.mxu0 0
      %5020 = vmatpush2.bf16.msra.mxu0 0
      %5021 = vmatprep.subr.bf16.mxu0 0
      %5022 = vmatpush2.bf16.msra.mxu0 0
      %5023 = vmatprep.mubr.bf16.mxu0 0
      %5024 = vmatmul.mubr.bf16.gmra.mxu0 %v4941
      %v5025 = vpop.f32.mrf.mxu0
      %v5026 = vadd.f32 0.0, %v5025
      %v5027 = vpop.f32.mrf.mxu0
      %v5028 = vpop.f32.mrf.mxu0
      %v5029 = vadd.f32 0.0, %v5028
      %v5030 = vpop.f32.mrf.mxu0
      %5031 = vmatprep.mubr.bf16.mxu0 0
      %5032 = vmatmul.mubr.bf16.gmra.mxu0 %v4944
      %v5033 = vpop.f32.mrf.mxu0
      %v5034 = vadd.f32 0.0, %v5033
      %v5035 = vpop.f32.mrf.mxu0
      %v5036 = vpop.f32.mrf.mxu0
      %v5037 = vadd.f32 0.0, %v5036
      %v5038 = vpop.f32.mrf.mxu0
      %5039 = vmatprep.mubr.bf16.mxu0 0
      %5040 = vmatmul.mubr.bf16.gmra.mxu0 %v4947
      %v5041 = vpop.f32.mrf.mxu0
      %v5042 = vadd.f32 0.0, %v5041
      %v5043 = vpop.f32.mrf.mxu0
      %v5044 = vpop.f32.mrf.mxu0
      %v5045 = vadd.f32 0.0, %v5044
      %v5046 = vpop.f32.mrf.mxu0
      %5047 = vmatprep.mubr.bf16.mxu0 0
      %5048 = vmatmul.mubr.bf16.gmra.mxu0 %v4950
      %v5049 = vpop.f32.mrf.mxu0
      %v5050 = vadd.f32 0.0, %v5049
      %v5051 = vpop.f32.mrf.mxu0
      %v5052 = vpop.f32.mrf.mxu0
      %v5053 = vadd.f32 0.0, %v5052
      %v5054 = vpop.f32.mrf.mxu0
      %5055 = vmatprep.mubr.bf16.mxu0 0
      %5056 = vmatmul.mubr.bf16.gmra.mxu0 %v4953
      %v5057 = vpop.f32.mrf.mxu0
      %v5058 = vadd.f32 0.0, %v5057
      %v5059 = vpop.f32.mrf.mxu0
      %v5060 = vpop.f32.mrf.mxu0
      %v5061 = vadd.f32 0.0, %v5060
      %v5062 = vpop.f32.mrf.mxu0
      %5063 = vmatprep.mubr.bf16.mxu0 0
      %5064 = vmatmul.mubr.bf16.gmra.mxu0 %v4956
      %v5065 = vpop.f32.mrf.mxu0
      %v5066 = vadd.f32 0.0, %v5065
      %v5067 = vpop.f32.mrf.mxu0
      %v5068 = vpop.f32.mrf.mxu0
      %v5069 = vadd.f32 0.0, %v5068
      %v5070 = vpop.f32.mrf.mxu0
      %5071 = vmatprep.mubr.bf16.mxu0 0
      %5072 = vmatmul.mubr.bf16.gmra.mxu0 %v4959
      %v5073 = vpop.f32.mrf.mxu0
      %v5074 = vadd.f32 0.0, %v5073
      %v5075 = vpop.f32.mrf.mxu0
      %v5076 = vpop.f32.mrf.mxu0
      %v5077 = vadd.f32 0.0, %v5076
      %v5078 = vpop.f32.mrf.mxu0
      %5079 = vmatprep.mubr.bf16.mxu0 0
      %5080 = vmatmul.mubr.bf16.gmra.mxu0 %v4962
      %v5081 = vpop.f32.mrf.mxu0
      %v5082 = vadd.f32 0.0, %v5081
      %v5083 = vpop.f32.mrf.mxu0
      %v5084 = vpop.f32.mrf.mxu0
      %v5085 = vadd.f32 0.0, %v5084
      %v5086 = vpop.f32.mrf.mxu0
      %5087 = vmatprep.mubr.bf16.mxu0 0
      %5088 = vmatmul.mubr.bf16.gmra.mxu0 %v4965
      %v5089 = vpop.f32.mrf.mxu0
      %v5090 = vadd.f32 0.0, %v5089
      %v5091 = vpop.f32.mrf.mxu0
      %v5092 = vpop.f32.mrf.mxu0
      %v5093 = vadd.f32 0.0, %v5092
      %v5094 = vpop.f32.mrf.mxu0
      %5095 = vmatprep.mubr.bf16.mxu0 0
      %5096 = vmatmul.mubr.bf16.gmra.mxu0 %v4968
      %v5097 = vpop.f32.mrf.mxu0
      %v5098 = vadd.f32 0.0, %v5097
      %v5099 = vpop.f32.mrf.mxu0
      %v5100 = vpop.f32.mrf.mxu0
      %v5101 = vadd.f32 0.0, %v5100
      %v5102 = vpop.f32.mrf.mxu0
      %5103 = vmatprep.mubr.bf16.mxu0 0
      %5104 = vmatmul.mubr.bf16.gmra.mxu0 %v4971
      %v5105 = vpop.f32.mrf.mxu0
      %v5106 = vadd.f32 0.0, %v5105
      %v5107 = vpop.f32.mrf.mxu0
      %v5108 = vpop.f32.mrf.mxu0
      %v5109 = vadd.f32 0.0, %v5108
      %v5110 = vpop.f32.mrf.mxu0
      %5111 = vmatprep.mubr.bf16.mxu0 0
      %5112 = vmatmul.mubr.bf16.gmra.mxu0 %v4974
      %v5113 = vpop.f32.mrf.mxu0
      %v5114 = vadd.f32 0.0, %v5113
      %v5115 = vpop.f32.mrf.mxu0
      %v5116 = vpop.f32.mrf.mxu0
      %v5117 = vadd.f32 0.0, %v5116
      %v5118 = vpop.f32.mrf.mxu0
      %5119 = vmatprep.mubr.bf16.mxu0 0
      %5120 = vmatmul.mubr.bf16.gmra.mxu0 %v4977
      %v5121 = vpop.f32.mrf.mxu0
      %v5122 = vadd.f32 0.0, %v5121
      %v5123 = vpop.f32.mrf.mxu0
      %v5124 = vpop.f32.mrf.mxu0
      %v5125 = vadd.f32 0.0, %v5124
      %v5126 = vpop.f32.mrf.mxu0
      %5127 = vmatprep.mubr.bf16.mxu0 0
      %5128 = vmatmul.mubr.bf16.gmra.mxu0 %v4980
      %v5129 = vpop.f32.mrf.mxu0
      %v5130 = vadd.f32 0.0, %v5129
      %v5131 = vpop.f32.mrf.mxu0
      %v5132 = vpop.f32.mrf.mxu0
      %v5133 = vadd.f32 0.0, %v5132
      %v5134 = vpop.f32.mrf.mxu0
      %5135 = vmatprep.mubr.bf16.mxu0 0
      %5136 = vmatmul.mubr.bf16.gmra.mxu0 %v4983
      %v5137 = vpop.f32.mrf.mxu0
      %v5138 = vadd.f32 0.0, %v5137
      %v5139 = vpop.f32.mrf.mxu0
      %v5140 = vpop.f32.mrf.mxu0
      %v5141 = vadd.f32 0.0, %v5140
      %v5142 = vpop.f32.mrf.mxu0
      %5143 = vmatprep.mubr.bf16.mxu0 0
      %5144 = vmatmul.mubr.bf16.gmra.mxu0 %v4986
      %v5145 = vpop.f32.mrf.mxu0
      %v5146 = vadd.f32 0.0, %v5145
      %v5147 = vpop.f32.mrf.mxu0
      %v5148 = vpop.f32.mrf.mxu0
      %v5149 = vadd.f32 0.0, %v5148
      %v5150 = vpop.f32.mrf.mxu0
      %5151 = vdwg.mxu0
      %v5152 = vadd.f32 %v4858, %v5026
      %v5153 = vadd.f32 %v4859, %v5029
      %v5154 = vadd.f32 %v4860, %v5034
      %v5155 = vadd.f32 %v4861, %v5037
      %v5156 = vadd.f32 %v4862, %v5042
      %v5157 = vadd.f32 %v4863, %v5045
      %v5158 = vadd.f32 %v4864, %v5050
      %v5159 = vadd.f32 %v4865, %v5053
      %v5160 = vadd.f32 %v4866, %v5058
      %v5161 = vadd.f32 %v4867, %v5061
      %v5162 = vadd.f32 %v4868, %v5066
      %v5163 = vadd.f32 %v4869, %v5069
      %v5164 = vadd.f32 %v4870, %v5074
      %v5165 = vadd.f32 %v4871, %v5077
      %v5166 = vadd.f32 %v4872, %v5082
      %v5167 = vadd.f32 %v4873, %v5085
      %v5168 = vadd.f32 %v4874, %v5090
      %v5169 = vadd.f32 %v4875, %v5093
      %v5170 = vadd.f32 %v4876, %v5098
      %v5171 = vadd.f32 %v4877, %v5101
      %v5172 = vadd.f32 %v4878, %v5106
      %v5173 = vadd.f32 %v4879, %v5109
      %v5174 = vadd.f32 %v4880, %v5114
      %v5175 = vadd.f32 %v4881, %v5117
      %v5176 = vadd.f32 %v4882, %v5122
      %v5177 = vadd.f32 %v4883, %v5125
      %v5178 = vadd.f32 %v4884, %v5130
      %v5179 = vadd.f32 %v4885, %v5133
      %v5180 = vadd.f32 %v4886, %v5138
      %v5181 = vadd.f32 %v4887, %v5141
      %v5182 = vadd.f32 %v4888, %v5146
      %v5183 = vadd.f32 %v4889, %v5149
      %v5184 = vld [vmem:[%s4595 + $0x9] sm:$0xff]
      %v5185 = vld [vmem:[%s4595 + $0x11] sm:$0xff]
      %v5186 = vld [vmem:[%s4595 + $0x29] sm:$0xff]
      %v5187 = vld [vmem:[%s4595 + $0x31] sm:$0xff]
      %v5188 = vld [vmem:[%s4595 + $0x49] sm:$0xff]
      %v5189 = vld [vmem:[%s4595 + $0x51] sm:$0xff]
      %v5190 = vld [vmem:[%s4595 + $0x69] sm:$0xff]
      %v5191 = vld [vmem:[%s4595 + $0x71] sm:$0xff]
      %v5192 = vld [vmem:[%s4595 + $0x89] sm:$0xff]
      %v5193 = vld [vmem:[%s4595 + $0x91] sm:$0xff]
      %v5194 = vld [vmem:[%s4595 + $0xa9] sm:$0xff]
      %v5195 = vld [vmem:[%s4595 + $0xb1] sm:$0xff]
      %v5196 = vld [vmem:[%s4595 + $0xc9] sm:$0xff]
      %v5197 = vld [vmem:[%s4595 + $0xd1] sm:$0xff]
      %v5198 = vld [vmem:[%s4595 + $0xe9] sm:$0xff]
      %v5199 = vld [vmem:[%s4595 + $0xf1] sm:$0xff]
      %v5200 = vld [vmem:[%s4595 + $0x109] sm:$0xff]
      %v5201 = vld [vmem:[%s4595 + $0x111] sm:$0xff]
      %v5202 = vld [vmem:[%s4595 + $0x129] sm:$0xff]
      %v5203 = vld [vmem:[%s4595 + $0x131] sm:$0xff]
      %v5204 = vld [vmem:[%s4595 + $0x149] sm:$0xff]
      %v5205 = vld [vmem:[%s4595 + $0x151] sm:$0xff]
      %v5206 = vld [vmem:[%s4595 + $0x169] sm:$0xff]
      %v5207 = vld [vmem:[%s4595 + $0x171] sm:$0xff]
      %v5208 = vld [vmem:[%s4595 + $0x189] sm:$0xff]
      %v5209 = vld [vmem:[%s4595 + $0x191] sm:$0xff]
      %v5210 = vld [vmem:[%s4595 + $0x1a9] sm:$0xff]
      %v5211 = vld [vmem:[%s4595 + $0x1b1] sm:$0xff]
      %v5212 = vld [vmem:[%s4595 + $0x1c9] sm:$0xff]
      %v5213 = vld [vmem:[%s4595 + $0x1d1] sm:$0xff]
      %v5214 = vld [vmem:[%s4595 + $0x1e9] sm:$0xff]
      %v5215 = vld [vmem:[%s4595 + $0x1f1] sm:$0xff]
      %v5216 = vpack.c.bf16 %v5185, %v5184
      %v5217 = vpack.c.bf16 %v5187, %v5186
      %v5218 = vpack.c.bf16 %v5189, %v5188
      %v5219 = vpack.c.bf16 %v5191, %v5190
      %v5220 = vpack.c.bf16 %v5193, %v5192
      %v5221 = vpack.c.bf16 %v5195, %v5194
      %v5222 = vpack.c.bf16 %v5197, %v5196
      %v5223 = vpack.c.bf16 %v5199, %v5198
      %v5224 = vpack.c.bf16 %v5201, %v5200
      %v5225 = vpack.c.bf16 %v5203, %v5202
      %v5226 = vpack.c.bf16 %v5205, %v5204
      %v5227 = vpack.c.bf16 %v5207, %v5206
      %v5228 = vpack.c.bf16 %v5209, %v5208
      %v5229 = vpack.c.bf16 %v5211, %v5210
      %v5230 = vpack.c.bf16 %v5213, %v5212
      %v5231 = vpack.c.bf16 %v5215, %v5214
      %s5232 = scalar_lea.vmem %s2, 32
      %v5233 = vld [vmem:[%s5232] sm:$0xf]
      %v5235 = vsel %vm2789, %v5216, 0
      %v5238 = vsel %vm2789, %v5217, 0
      %v5241 = vsel %vm2789, %v5218, 0
      %v5244 = vsel %vm2789, %v5219, 0
      %v5247 = vsel %vm2789, %v5220, 0
      %v5250 = vsel %vm2789, %v5221, 0
      %v5253 = vsel %vm2789, %v5222, 0
      %v5256 = vsel %vm2789, %v5223, 0
      %v5259 = vsel %vm2789, %v5224, 0
      %v5262 = vsel %vm2789, %v5225, 0
      %v5265 = vsel %vm2789, %v5226, 0
      %v5268 = vsel %vm2789, %v5227, 0
      %v5271 = vsel %vm2789, %v5228, 0
      %v5274 = vsel %vm2789, %v5229, 0
      %v5277 = vsel %vm2789, %v5230, 0
      %v5280 = vsel %vm2789, %v5231, 0
      %v5283 = vsel %vm3042, %v5233, 0
      %5285 = vmatprep.subr.bf16.mxu0 0
      %5286 = vmatpush1.bf16.msra.mxu0 0
      %5287 = vmatprep.subr.bf16.mxu0 0
      %5288 = vmatpush1.bf16.msra.mxu0 0
      %5289 = vmatprep.subr.bf16.mxu0 0
      %5290 = vmatpush1.bf16.msra.mxu0 0
      %5291 = vmatprep.subr.bf16.mxu0 0
      %5292 = vmatpush1.bf16.msra.mxu0 0
      %5293 = vmatprep.subr.bf16.mxu0 0
      %5294 = vmatpush1.bf16.msra.mxu0 0
      %5295 = vmatprep.subr.bf16.mxu0 0
      %5296 = vmatpush1.bf16.msra.mxu0 0
      %5297 = vmatprep.subr.bf16.mxu0 0
      %5298 = vmatpush1.bf16.msra.mxu0 0
      %5299 = vmatprep.subr.bf16.mxu0 0
      %5300 = vmatpush1.bf16.msra.mxu0 %v5283
      %5301 = vmatprep.subr.bf16.mxu0 0
      %5302 = vmatpush2.bf16.msra.mxu0 0
      %5303 = vmatprep.subr.bf16.mxu0 0
      %5304 = vmatpush2.bf16.msra.mxu0 0
      %5305 = vmatprep.subr.bf16.mxu0 0
      %5306 = vmatpush2.bf16.msra.mxu0 0
      %5307 = vmatprep.subr.bf16.mxu0 0
      %5308 = vmatpush2.bf16.msra.mxu0 0
      %5309 = vmatprep.subr.bf16.mxu0 0
      %5310 = vmatpush2.bf16.msra.mxu0 0
      %5311 = vmatprep.subr.bf16.mxu0 0
      %5312 = vmatpush2.bf16.msra.mxu0 0
      %5313 = vmatprep.subr.bf16.mxu0 0
      %5314 = vmatpush2.bf16.msra.mxu0 0
      %5315 = vmatprep.subr.bf16.mxu0 0
      %5316 = vmatpush2.bf16.msra.mxu0 0
      %5317 = vmatprep.mubr.bf16.mxu0 0
      %5318 = vmatmul.mubr.bf16.gmra.mxu0 %v5235
      %v5319 = vpop.f32.mrf.mxu0
      %v5320 = vadd.f32 0.0, %v5319
      %v5321 = vpop.f32.mrf.mxu0
      %v5322 = vpop.f32.mrf.mxu0
      %v5323 = vadd.f32 0.0, %v5322
      %v5324 = vpop.f32.mrf.mxu0
      %5325 = vmatprep.mubr.bf16.mxu0 0
      %5326 = vmatmul.mubr.bf16.gmra.mxu0 %v5238
      %v5327 = vpop.f32.mrf.mxu0
      %v5328 = vadd.f32 0.0, %v5327
      %v5329 = vpop.f32.mrf.mxu0
      %v5330 = vpop.f32.mrf.mxu0
      %v5331 = vadd.f32 0.0, %v5330
      %v5332 = vpop.f32.mrf.mxu0
      %5333 = vmatprep.mubr.bf16.mxu0 0
      %5334 = vmatmul.mubr.bf16.gmra.mxu0 %v5241
      %v5335 = vpop.f32.mrf.mxu0
      %v5336 = vadd.f32 0.0, %v5335
      %v5337 = vpop.f32.mrf.mxu0
      %v5338 = vpop.f32.mrf.mxu0
      %v5339 = vadd.f32 0.0, %v5338
      %v5340 = vpop.f32.mrf.mxu0
      %5341 = vmatprep.mubr.bf16.mxu0 0
      %5342 = vmatmul.mubr.bf16.gmra.mxu0 %v5244
      %v5343 = vpop.f32.mrf.mxu0
      %v5344 = vadd.f32 0.0, %v5343
      %v5345 = vpop.f32.mrf.mxu0
      %v5346 = vpop.f32.mrf.mxu0
      %v5347 = vadd.f32 0.0, %v5346
      %v5348 = vpop.f32.mrf.mxu0
      %5349 = vmatprep.mubr.bf16.mxu0 0
      %5350 = vmatmul.mubr.bf16.gmra.mxu0 %v5247
      %v5351 = vpop.f32.mrf.mxu0
      %v5352 = vadd.f32 0.0, %v5351
      %v5353 = vpop.f32.mrf.mxu0
      %v5354 = vpop.f32.mrf.mxu0
      %v5355 = vadd.f32 0.0, %v5354
      %v5356 = vpop.f32.mrf.mxu0
      %5357 = vmatprep.mubr.bf16.mxu0 0
      %5358 = vmatmul.mubr.bf16.gmra.mxu0 %v5250
      %v5359 = vpop.f32.mrf.mxu0
      %v5360 = vadd.f32 0.0, %v5359
      %v5361 = vpop.f32.mrf.mxu0
      %v5362 = vpop.f32.mrf.mxu0
      %v5363 = vadd.f32 0.0, %v5362
      %v5364 = vpop.f32.mrf.mxu0
      %5365 = vmatprep.mubr.bf16.mxu0 0
      %5366 = vmatmul.mubr.bf16.gmra.mxu0 %v5253
      %v5367 = vpop.f32.mrf.mxu0
      %v5368 = vadd.f32 0.0, %v5367
      %v5369 = vpop.f32.mrf.mxu0
      %v5370 = vpop.f32.mrf.mxu0
      %v5371 = vadd.f32 0.0, %v5370
      %v5372 = vpop.f32.mrf.mxu0
      %5373 = vmatprep.mubr.bf16.mxu0 0
      %5374 = vmatmul.mubr.bf16.gmra.mxu0 %v5256
      %v5375 = vpop.f32.mrf.mxu0
      %v5376 = vadd.f32 0.0, %v5375
      %v5377 = vpop.f32.mrf.mxu0
      %v5378 = vpop.f32.mrf.mxu0
      %v5379 = vadd.f32 0.0, %v5378
      %v5380 = vpop.f32.mrf.mxu0
      %5381 = vmatprep.mubr.bf16.mxu0 0
      %5382 = vmatmul.mubr.bf16.gmra.mxu0 %v5259
      %v5383 = vpop.f32.mrf.mxu0
      %v5384 = vadd.f32 0.0, %v5383
      %v5385 = vpop.f32.mrf.mxu0
      %v5386 = vpop.f32.mrf.mxu0
      %v5387 = vadd.f32 0.0, %v5386
      %v5388 = vpop.f32.mrf.mxu0
      %5389 = vmatprep.mubr.bf16.mxu0 0
      %5390 = vmatmul.mubr.bf16.gmra.mxu0 %v5262
      %v5391 = vpop.f32.mrf.mxu0
      %v5392 = vadd.f32 0.0, %v5391
      %v5393 = vpop.f32.mrf.mxu0
      %v5394 = vpop.f32.mrf.mxu0
      %v5395 = vadd.f32 0.0, %v5394
      %v5396 = vpop.f32.mrf.mxu0
      %5397 = vmatprep.mubr.bf16.mxu0 0
      %5398 = vmatmul.mubr.bf16.gmra.mxu0 %v5265
      %v5399 = vpop.f32.mrf.mxu0
      %v5400 = vadd.f32 0.0, %v5399
      %v5401 = vpop.f32.mrf.mxu0
      %v5402 = vpop.f32.mrf.mxu0
      %v5403 = vadd.f32 0.0, %v5402
      %v5404 = vpop.f32.mrf.mxu0
      %5405 = vmatprep.mubr.bf16.mxu0 0
      %5406 = vmatmul.mubr.bf16.gmra.mxu0 %v5268
      %v5407 = vpop.f32.mrf.mxu0
      %v5408 = vadd.f32 0.0, %v5407
      %v5409 = vpop.f32.mrf.mxu0
      %v5410 = vpop.f32.mrf.mxu0
      %v5411 = vadd.f32 0.0, %v5410
      %v5412 = vpop.f32.mrf.mxu0
      %5413 = vmatprep.mubr.bf16.mxu0 0
      %5414 = vmatmul.mubr.bf16.gmra.mxu0 %v5271
      %v5415 = vpop.f32.mrf.mxu0
      %v5416 = vadd.f32 0.0, %v5415
      %v5417 = vpop.f32.mrf.mxu0
      %v5418 = vpop.f32.mrf.mxu0
      %v5419 = vadd.f32 0.0, %v5418
      %v5420 = vpop.f32.mrf.mxu0
      %5421 = vmatprep.mubr.bf16.mxu0 0
      %5422 = vmatmul.mubr.bf16.gmra.mxu0 %v5274
      %v5423 = vpop.f32.mrf.mxu0
      %v5424 = vadd.f32 0.0, %v5423
      %v5425 = vpop.f32.mrf.mxu0
      %v5426 = vpop.f32.mrf.mxu0
      %v5427 = vadd.f32 0.0, %v5426
      %v5428 = vpop.f32.mrf.mxu0
      %5429 = vmatprep.mubr.bf16.mxu0 0
      %5430 = vmatmul.mubr.bf16.gmra.mxu0 %v5277
      %v5431 = vpop.f32.mrf.mxu0
      %v5432 = vadd.f32 0.0, %v5431
      %v5433 = vpop.f32.mrf.mxu0
      %v5434 = vpop.f32.mrf.mxu0
      %v5435 = vadd.f32 0.0, %v5434
      %v5436 = vpop.f32.mrf.mxu0
      %5437 = vmatprep.mubr.bf16.mxu0 0
      %5438 = vmatmul.mubr.bf16.gmra.mxu0 %v5280
      %v5439 = vpop.f32.mrf.mxu0
      %v5440 = vadd.f32 0.0, %v5439
      %v5441 = vpop.f32.mrf.mxu0
      %v5442 = vpop.f32.mrf.mxu0
      %v5443 = vadd.f32 0.0, %v5442
      %v5444 = vpop.f32.mrf.mxu0
      %5445 = vdwg.mxu0
      %v5446 = vadd.f32 %v5152, %v5320
      %v5447 = vadd.f32 %v5153, %v5323
      %v5448 = vadd.f32 %v5154, %v5328
      %v5449 = vadd.f32 %v5155, %v5331
      %v5450 = vadd.f32 %v5156, %v5336
      %v5451 = vadd.f32 %v5157, %v5339
      %v5452 = vadd.f32 %v5158, %v5344
      %v5453 = vadd.f32 %v5159, %v5347
      %v5454 = vadd.f32 %v5160, %v5352
      %v5455 = vadd.f32 %v5161, %v5355
      %v5456 = vadd.f32 %v5162, %v5360
      %v5457 = vadd.f32 %v5163, %v5363
      %v5458 = vadd.f32 %v5164, %v5368
      %v5459 = vadd.f32 %v5165, %v5371
      %v5460 = vadd.f32 %v5166, %v5376
      %v5461 = vadd.f32 %v5167, %v5379
      %v5462 = vadd.f32 %v5168, %v5384
      %v5463 = vadd.f32 %v5169, %v5387
      %v5464 = vadd.f32 %v5170, %v5392
      %v5465 = vadd.f32 %v5171, %v5395
      %v5466 = vadd.f32 %v5172, %v5400
      %v5467 = vadd.f32 %v5173, %v5403
      %v5468 = vadd.f32 %v5174, %v5408
      %v5469 = vadd.f32 %v5175, %v5411
      %v5470 = vadd.f32 %v5176, %v5416
      %v5471 = vadd.f32 %v5177, %v5419
      %v5472 = vadd.f32 %v5178, %v5424
      %v5473 = vadd.f32 %v5179, %v5427
      %v5474 = vadd.f32 %v5180, %v5432
      %v5475 = vadd.f32 %v5181, %v5435
      %v5476 = vadd.f32 %v5182, %v5440
      %v5477 = vadd.f32 %v5183, %v5443
      %v5478 = vmax.f32 %v5446, 0.0
      %v5479 = vmax.f32 %v5447, 0.0
      %v5480 = vmax.f32 %v5448, 0.0
      %v5481 = vmax.f32 %v5449, 0.0
      %v5482 = vmax.f32 %v5450, 0.0
      %v5483 = vmax.f32 %v5451, 0.0
      %v5484 = vmax.f32 %v5452, 0.0
      %v5485 = vmax.f32 %v5453, 0.0
      %v5486 = vmax.f32 %v5454, 0.0
      %v5487 = vmax.f32 %v5455, 0.0
      %v5488 = vmax.f32 %v5456, 0.0
      %v5489 = vmax.f32 %v5457, 0.0
      %v5490 = vmax.f32 %v5458, 0.0
      %v5491 = vmax.f32 %v5459, 0.0
      %v5492 = vmax.f32 %v5460, 0.0
      %v5493 = vmax.f32 %v5461, 0.0
      %v5494 = vmax.f32 %v5462, 0.0
      %v5495 = vmax.f32 %v5463, 0.0
      %v5496 = vmax.f32 %v5464, 0.0
      %v5497 = vmax.f32 %v5465, 0.0
      %v5498 = vmax.f32 %v5466, 0.0
      %v5499 = vmax.f32 %v5467, 0.0
      %v5500 = vmax.f32 %v5468, 0.0
      %v5501 = vmax.f32 %v5469, 0.0
      %v5502 = vmax.f32 %v5470, 0.0
      %v5503 = vmax.f32 %v5471, 0.0
      %v5504 = vmax.f32 %v5472, 0.0
      %v5505 = vmax.f32 %v5473, 0.0
      %v5506 = vmax.f32 %v5474, 0.0
      %v5507 = vmax.f32 %v5475, 0.0
      %v5508 = vmax.f32 %v5476, 0.0
      %v5509 = vmax.f32 %v5477, 0.0
      %5510 = vst.msk [vmem:[%s170] sm:$0xff] %vm2789, %v5478
      %5511 = vst.msk [vmem:[%s170 + $0x8] sm:$0xff] %vm2789, %v5479
      %5512 = vst.msk [vmem:[%s170 + $0x10] sm:$0xff] %vm2789, %v5480
      %5513 = vst.msk [vmem:[%s170 + $0x18] sm:$0xff] %vm2789, %v5481
      %5514 = vst.msk [vmem:[%s170 + $0x20] sm:$0xff] %vm2789, %v5482
      %5515 = vst.msk [vmem:[%s170 + $0x28] sm:$0xff] %vm2789, %v5483
      %5516 = vst.msk [vmem:[%s170 + $0x30] sm:$0xff] %vm2789, %v5484
      %5517 = vst.msk [vmem:[%s170 + $0x38] sm:$0xff] %vm2789, %v5485
      %5518 = vst.msk [vmem:[%s170 + $0x40] sm:$0xff] %vm2789, %v5486
      %5519 = vst.msk [vmem:[%s170 + $0x48] sm:$0xff] %vm2789, %v5487
      %5520 = vst.msk [vmem:[%s170 + $0x50] sm:$0xff] %vm2789, %v5488
      %5521 = vst.msk [vmem:[%s170 + $0x58] sm:$0xff] %vm2789, %v5489
      %5522 = vst.msk [vmem:[%s170 + $0x60] sm:$0xff] %vm2789, %v5490
      %5523 = vst.msk [vmem:[%s170 + $0x68] sm:$0xff] %vm2789, %v5491
      %5524 = vst.msk [vmem:[%s170 + $0x70] sm:$0xff] %vm2789, %v5492
      %5525 = vst.msk [vmem:[%s170 + $0x78] sm:$0xff] %vm2789, %v5493
      %5526 = vst.msk [vmem:[%s170 + $0x80] sm:$0xff] %vm2789, %v5494
      %5527 = vst.msk [vmem:[%s170 + $0x88] sm:$0xff] %vm2789, %v5495
      %5528 = vst.msk [vmem:[%s170 + $0x90] sm:$0xff] %vm2789, %v5496
      %5529 = vst.msk [vmem:[%s170 + $0x98] sm:$0xff] %vm2789, %v5497
      %5530 = vst.msk [vmem:[%s170 + $0xa0] sm:$0xff] %vm2789, %v5498
      %5531 = vst.msk [vmem:[%s170 + $0xa8] sm:$0xff] %vm2789, %v5499
      %5532 = vst.msk [vmem:[%s170 + $0xb0] sm:$0xff] %vm2789, %v5500
      %5533 = vst.msk [vmem:[%s170 + $0xb8] sm:$0xff] %vm2789, %v5501
      %5534 = vst.msk [vmem:[%s170 + $0xc0] sm:$0xff] %vm2789, %v5502
      %5535 = vst.msk [vmem:[%s170 + $0xc8] sm:$0xff] %vm2789, %v5503
      %5536 = vst.msk [vmem:[%s170 + $0xd0] sm:$0xff] %vm2789, %v5504
      %5537 = vst.msk [vmem:[%s170 + $0xd8] sm:$0xff] %vm2789, %v5505
      %5538 = vst.msk [vmem:[%s170 + $0xe0] sm:$0xff] %vm2789, %v5506
      %5539 = vst.msk [vmem:[%s170 + $0xe8] sm:$0xff] %vm2789, %v5507
      %5540 = vst.msk [vmem:[%s170 + $0xf0] sm:$0xff] %vm2789, %v5508
      %5541 = vst.msk [vmem:[%s170 + $0xf8] sm:$0xff] %vm2789, %v5509
      %p5542 = scmp.lt.s32.totalorder %s14, 1
      %s5543 = scalar_select %p5542, %s14, 1
      %s5544 = smul.addr %s5543, 32
      %s5545 = smul.addr %s5544, 8
      %s5546 = scalar_lea.vmem %s3, %s5545
      // Predicated region
      $region33: #{block_forward.1} parent=31 // pred_check
        %p5547 = pneg %p100
      $region34: #{block_forward.1} parent=31 // pred_check_branch
        %5549 = sbr.rel (%p5547) target = $region36
      $region35: #{block_forward.1} parent=31 // pred_region
        _
      $region36: #{block_forward.1} parent=31 // pred_fallthru
        _
    $region32: #{block_forward.1} parent=5 // pred_fallthru
      _
    %p5550 = scmp.le.s32.totalorder 2, %s9
    // Predicated region
    $region37: #{block_forward.1} parent=5 // pred_check
      %p5551 = pneg %p5550
    $region38: #{block_forward.1} parent=5 // pred_check_branch
      %5553 = sbr.rel (%p5551) target = $region40
    $region39: #{block_forward.1} parent=5 // pred_region
      %s5554 = ssub.s32 %s9, 2
      // Predicated region
      $region41: #{block_forward.1} parent=39 // pred_check
        %p5555 = pneg %p106
      $region42: #{block_forward.1} parent=39 // pred_check_branch
        %5557 = sbr.rel (%p5555) target = $region44
      $region43: #{block_forward.1} parent=39 // pred_region
        %p5558 = scmp.lt.s32.totalorder %s15, 1
        %s5559 = scalar_select %p5558, %s15, 1
        %s5560 = smul.addr %s5559, 32
        %s5561 = smul.addr %s5560, 8
        %s5562 = scalar_lea.vmem %s3, %s5561
      $region44: #{block_forward.1} parent=39 // pred_fallthru
        _
    $region40: #{block_forward.1} parent=5 // pred_fallthru
      _
  $region6: #{block_forward.1} parent=0 // loop_footer
    %s13 = sadd.s32 1, %s9
  $region7: #{block_forward.1} parent=0 // loop_footer_branch
    %8 = sbr.rel target = $region3
  $region8: #{block_forward.1} parent=0 // loop_exit
    _

</llo_original>
